<compile_context>
chip_gen: v5e
topology: v5e:2x2
jax: 0.10.0
libtpu: 0.0.40
codegen_flags: <defaults>
</compile_context>

<pallas_src>
import functools

import jax
import jax.numpy as jnp
from jax.experimental import pallas as pl
from jax.experimental.pallas import tpu as pltpu

_LANE = 128
_VMEM_LIMIT = 48 * 1024 * 1024  # headroom for v7x (64 MiB physical VMEM)


def _round_up(v, m):
    return (v + m - 1) // m * m


def _pick_tile(n, max_tile=256):
    """Largest multiple-of-128 tile <= max_tile that divides n (n is 128-mult)."""
    for t in range(max_tile, 0, -_LANE):
        if n % t == 0:
            return t
    return n


# ----------------------------------------------------------------------------
# Kernel 1: MLP head   z = relu(x @ W1 + b1) @ W2 + b2 ;  hidden0 = temp[0]*z
# ----------------------------------------------------------------------------
def _mlp_kernel(x_ref, w1_ref, b1_ref, w2_ref, b2_ref, g0_ref, z_ref, h_ref):
    h1 = jnp.dot(x_ref[...], w1_ref[...], preferred_element_type=jnp.float32)
    h1 = jnp.maximum(h1 + b1_ref[...], 0.0)
    z = jnp.dot(h1.astype(w2_ref.dtype), w2_ref[...],
                preferred_element_type=jnp.float32) + b2_ref[...]
    z_ref[...] = z.astype(z_ref.dtype)                    # bf16 for propagation
    h_ref[...] = (g0_ref[...] * z).astype(h_ref.dtype)    # f32 GPR accumulator


def mlp_head(x, w1, b1, w2, b2, gamma0, *, tm):
    n, f_in = x.shape
    h_dim = w1.shape[1]
    c_dim = w2.shape[1]
    flops = 2 * n * f_in * h_dim + 2 * n * h_dim * c_dim
    bytes_accessed = (n * f_in * 2 + f_in * h_dim * 2 + h_dim * c_dim * 2
                      + (h_dim + c_dim) * 4 + n * c_dim * (2 + 4))
    return pl.pallas_call(
        _mlp_kernel,
        out_shape=(jax.ShapeDtypeStruct((n, c_dim), jnp.bfloat16),
                   jax.ShapeDtypeStruct((n, c_dim), jnp.float32)),
        grid_spec=pltpu.PrefetchScalarGridSpec(
            num_scalar_prefetch=0,
            grid=(n // tm,),
            in_specs=[
                pl.BlockSpec((tm, f_in), lambda i: (i, 0)),      # x tile
                pl.BlockSpec((f_in, h_dim), lambda i: (0, 0)),   # W1 (resident)
                pl.BlockSpec((1, h_dim), lambda i: (0, 0)),      # b1
                pl.BlockSpec((h_dim, c_dim), lambda i: (0, 0)),  # W2 (resident)
                pl.BlockSpec((1, c_dim), lambda i: (0, 0)),      # b2
                pl.BlockSpec((1, 1), lambda i: (0, 0)),          # temp[0]
            ],
            out_specs=(
                pl.BlockSpec((tm, c_dim), lambda i: (i, 0)),
                pl.BlockSpec((tm, c_dim), lambda i: (i, 0)),
            ),
        ),
        compiler_params=pltpu.CompilerParams(
            dimension_semantics=("parallel",),
            vmem_limit_bytes=_VMEM_LIMIT),
        cost_estimate=pl.CostEstimate(flops=flops, transcendentals=0,
                                      bytes_accessed=bytes_accessed),
    )(x, w1, b1, w2, b2, gamma0)


# ----------------------------------------------------------------------------
# Kernel 2: one GPR propagation hop
#   z_new = A_hat @ z ;  hidden_new = hidden + temp[k+1] * z_new
# Tiled (rows, k) with f32 VMEM accumulator across the k reduction axis.
# ----------------------------------------------------------------------------
def _gpr_step_kernel(a_ref, z_ref, hin_ref, g_ref, zout_ref, hout_ref, acc_ref):
    k = pl.program_id(1)

    @pl.when(k == 0)
    def _():
        acc_ref[...] = jnp.zeros_like(acc_ref)

    acc_ref[...] += jnp.dot(a_ref[...], z_ref[...],
                            preferred_element_type=jnp.float32)

    @pl.when(k == pl.num_programs(1) - 1)
    def _():
        z_new = acc_ref[...]
        zout_ref[...] = z_new.astype(zout_ref.dtype)
        hout_ref[...] = hin_ref[...] + g_ref[...] * z_new


def gpr_step(a_hat, z, hidden, gamma, *, tm, tk):
    n = a_hat.shape[0]
    c_dim = z.shape[1]
    flops = 2 * n * n * c_dim
    bytes_accessed = n * n * 2 + n * c_dim * (2 + 4) + n * c_dim * (2 + 4)
    return pl.pallas_call(
        _gpr_step_kernel,
        out_shape=(jax.ShapeDtypeStruct((n, c_dim), jnp.bfloat16),
                   jax.ShapeDtypeStruct((n, c_dim), jnp.float32)),
        grid_spec=pltpu.PrefetchScalarGridSpec(
            num_scalar_prefetch=0,
            grid=(n // tm, n // tk),
            in_specs=[
                pl.BlockSpec((tm, tk), lambda i, k: (i, k)),       # A tile
                pl.BlockSpec((tk, c_dim), lambda i, k: (k, 0)),    # z tile
                pl.BlockSpec((tm, c_dim), lambda i, k: (i, 0)),    # hidden (resident over k)
                pl.BlockSpec((1, 1), lambda i, k: (0, 0)),         # gamma_k
            ],
            out_specs=(
                pl.BlockSpec((tm, c_dim), lambda i, k: (i, 0)),    # z_new
                pl.BlockSpec((tm, c_dim), lambda i, k: (i, 0)),    # hidden_new
            ),
            scratch_shapes=[pltpu.VMEM((tm, c_dim), jnp.float32)],
        ),
        compiler_params=pltpu.CompilerParams(
            dimension_semantics=("parallel", "arbitrary"),
            vmem_limit_bytes=_VMEM_LIMIT),
        cost_estimate=pl.CostEstimate(flops=flops, transcendentals=0,
                                      bytes_accessed=bytes_accessed),
    )(a_hat, z, hidden, gamma)


# ----------------------------------------------------------------------------
# Kernel 3: masked log_softmax over the (padded) class axis
# ----------------------------------------------------------------------------
def _log_softmax_kernel(h_ref, out_ref, *, num_valid):
    h = h_ref[...]
    cols = jax.lax.broadcasted_iota(jnp.int32, h.shape, 1)
    valid = cols < num_valid
    hm = jnp.where(valid, h, jnp.float32(-1e30))
    m = jnp.max(hm, axis=-1, keepdims=True)
    s = hm - m
    e = jnp.where(valid, jnp.exp(s), 0.0)
    lse = jnp.log(jnp.sum(e, axis=-1, keepdims=True))
    out_ref[...] = (s - lse).astype(out_ref.dtype)


def log_softmax_rows(h, *, num_valid, tm):
    n, c_dim = h.shape
    kernel = functools.partial(_log_softmax_kernel, num_valid=num_valid)
    return pl.pallas_call(
        kernel,
        out_shape=jax.ShapeDtypeStruct((n, c_dim), jnp.float32),
        grid_spec=pltpu.PrefetchScalarGridSpec(
            num_scalar_prefetch=0,
            grid=(n // tm,),
            in_specs=[pl.BlockSpec((tm, c_dim), lambda i: (i, 0))],
            out_specs=pl.BlockSpec((tm, c_dim), lambda i: (i, 0)),
        ),
        compiler_params=pltpu.CompilerParams(
            dimension_semantics=("parallel",),
            vmem_limit_bytes=_VMEM_LIMIT),
    )(h)


# ----------------------------------------------------------------------------
# Glue: dense symmetrically-normalized adjacency (gcn_norm with self loops).
# ----------------------------------------------------------------------------
def normalized_adjacency(edge_index, num_nodes):
    src = edge_index[0]
    dst = edge_index[1]
    a = jnp.zeros((num_nodes, num_nodes), jnp.float32)
    # add-aggregation: edge multiplicities accumulate (matches aggr='add')
    a = a.at[dst, src].add(1.0)
    a = a + jnp.eye(num_nodes, dtype=jnp.float32)  # self loops
    deg = jnp.sum(a, axis=1)
    d_inv_sqrt = jnp.where(deg > 0.0, 1.0 / jnp.sqrt(deg), 0.0)
    return d_inv_sqrt[:, None] * a * d_inv_sqrt[None, :]


# ----------------------------------------------------------------------------
# GPRGNN forward (inference)
# ----------------------------------------------------------------------------
def gprgnn_forward(x, edge_index, params, *, max_tile=256):
    gammas = params["temp"].astype(jnp.float32)
    K = gammas.shape[0] - 1
    n, f_in = x.shape
    h_dim = params["w1"].shape[1]
    c_dim = params["w2"].shape[1]

    n_pad = _round_up(n, _LANE)
    f_pad = _round_up(f_in, _LANE)
    h_pad = _round_up(h_dim, _LANE)
    c_pad = _round_up(c_dim, _LANE)

    tm = _pick_tile(n_pad, max_tile)
    tk = _pick_tile(n_pad, max_tile)

    # Dense normalized adjacency, zero-padded, bf16 for HBM/MXU efficiency.
    a_hat = normalized_adjacency(edge_index, n)
    a_hat = jnp.pad(a_hat, ((0, n_pad - n), (0, n_pad - n))).astype(jnp.bfloat16)

    x_p = jnp.pad(x, ((0, n_pad - n), (0, f_pad - f_in))).astype(jnp.bfloat16)
    w1 = jnp.pad(params["w1"],
                 ((0, f_pad - f_in), (0, h_pad - h_dim))).astype(jnp.bfloat16)
    b1 = jnp.pad(params["b1"], (0, h_pad - h_dim)).reshape(1, h_pad).astype(jnp.float32)
    w2 = jnp.pad(params["w2"],
                 ((0, h_pad - h_dim), (0, c_pad - c_dim))).astype(jnp.bfloat16)
    b2 = jnp.pad(params["b2"], (0, c_pad - c_dim)).reshape(1, c_pad).astype(jnp.float32)

    # MLP head (dropout is identity at inference):  z0 and hidden0 = temp[0]*z0
    z, hidden = mlp_head(x_p, w1, b1, w2, b2, gammas[0].reshape(1, 1), tm=tm)

    # K generalized-PageRank hops: z <- A_hat @ z ; hidden += temp[k+1] * z
    for k in range(K):
        z, hidden = gpr_step(a_hat, z, hidden, gammas[k + 1].reshape(1, 1),
                             tm=tm, tk=tk)

    out = log_softmax_rows(hidden, num_valid=c_dim, tm=tm)
    return out[:n, :c_dim]


# ----------------------------------------------------------------------------
# Pure-JAX reference (f32) for validation.
# ----------------------------------------------------------------------------
def reference_forward(x, edge_index, params):
    a = normalized_adjacency(edge_index, x.shape[0])
    h = jnp.maximum(x @ params["w1"] + params["b1"], 0.0)
    z = h @ params["w2"] + params["b2"]
    gam = params["temp"]
    hidden = gam[0] * z
    for k in range(gam.shape[0] - 1):
        z = a @ z
        hidden = hidden + gam[k + 1] * z
    return jax.nn.log_softmax(hidden, axis=1)


def init_params(key, num_features, hidden, num_classes, K, alpha):
    k1, k2 = jax.random.split(key)

    def glorot(k, fan_in, fan_out):
        limit = jnp.sqrt(6.0 / (fan_in + fan_out))
        return jax.random.uniform(k, (fan_in, fan_out), jnp.float32, -limit, limit)

    # GPR_prop 'PPR' init:  temp[k] = alpha*(1-alpha)^k, temp[K] = (1-alpha)^K
    temp = alpha * (1.0 - alpha) ** jnp.arange(K + 1, dtype=jnp.float32)
    temp = temp.at[-1].set((1.0 - alpha) ** K)

    return {
        "w1": glorot(k1, num_features, hidden),
        "b1": jnp.zeros((hidden,), jnp.float32),
        "w2": glorot(k2, hidden, num_classes),
        "b2": jnp.zeros((num_classes,), jnp.float32),
        "temp": temp,
    }


if __name__ == "__main__":
    key = jax.random.PRNGKey(0)

    num_nodes = 512
    num_features = 64
    hidden_dim = 64
    num_classes = 10
    K = 4
    alpha = 0.1
    num_edges = 2048

    k_x, k_e1, k_e2, k_p = jax.random.split(key, 4)
    x = jax.random.normal(k_x, (num_nodes, num_features), jnp.float32)

    src = jax.random.randint(k_e1, (num_edges,), 0, num_nodes)
    dst = jax.random.randint(k_e2, (num_edges,), 0, num_nodes)
    edge_index = jnp.stack(
        [jnp.concatenate([src, dst]), jnp.concatenate([dst, src])], axis=0
    ).astype(jnp.int32)

    params = init_params(k_p, num_features, hidden_dim, num_classes, K, alpha)

    out = jax.jit(gprgnn_forward)(x, edge_index, params)
    out = jax.block_until_ready(out)

    assert out.shape == (num_nodes, num_classes)
    # rows of log_softmax must exp-sum to 1
    assert jnp.allclose(jnp.sum(jnp.exp(out), axis=1), 1.0, atol=1e-3)
    # semantics check against the f32 pure-JAX reference (bf16 tolerance)
    ref = reference_forward(x, edge_index, params)
    assert float(jnp.max(jnp.abs(out - ref))) < 0.2

    print("KERNEL_OK")
</pallas_src>

<mosaic_0001>
module attributes {stable_mosaic.version = 11 : i64} {
  func.func @_gpr_step_kernel(%arg0: i32, %arg1: i32, %arg2: memref<256x256xbf16, #tpu.memory_space<vmem>>, %arg3: memref<256x128xbf16, #tpu.memory_space<vmem>>, %arg4: memref<256x128xf32, #tpu.memory_space<vmem>>, %arg5: memref<1x1xf32, #tpu.memory_space<vmem>>, %arg6: memref<256x128xbf16, #tpu.memory_space<vmem>>, %arg7: memref<256x128xf32, #tpu.memory_space<vmem>>, %arg8: memref<256x128xf32, #tpu.memory_space<vmem>>) attributes {dimension_semantics = [#tpu.dimension_semantics<parallel>, #tpu.dimension_semantics<arbitrary>], iteration_bounds = array<i64: 2, 2>, scalar_prefetch = 0 : i64, scratch_operands = 1 : i64, tpu.core_type = #tpu.core_type<tc>, window_params = [{transform_indices = @transform_0, window_bounds = array<i64: 256, 256>}, {transform_indices = @transform_1, window_bounds = array<i64: 256, 128>}, {transform_indices = @transform_2, window_bounds = array<i64: 256, 128>}, {pipeline_mode = #tpu.pipeline_mode<synchronous>, transform_indices = @transform_3, window_bounds = array<i64: 1, 1>}, {transform_indices = @transform_4, window_bounds = array<i64: 256, 128>}, {transform_indices = @transform_5, window_bounds = array<i64: 256, 128>}]} {
    %c0_i32 = arith.constant 0 : i32
    %0 = arith.cmpi eq, %arg1, %c0_i32 : i32
    %1 = arith.extui %0 : i1 to i32
    %c0_i32_0 = arith.constant 0 : i32
    %2 = arith.cmpi ne, %1, %c0_i32_0 : i32
    scf.if %2 {
      %cst_9 = arith.constant 0.000000e+00 : f32
      %12 = vector.broadcast %cst_9 : f32 to vector<256x128xf32>
      %c0_10 = arith.constant 0 : index
      %c0_11 = arith.constant 0 : index
      %13 = vector.load %arg8[%c0_10, %c0_11] : memref<256x128xf32, #tpu.memory_space<vmem>>, vector<256x128xf32>
      tpu.vector_store %arg8[%c0_10, %c0_11], %12 {strides = array<i32>} : memref<256x128xf32, #tpu.memory_space<vmem>>, vector<256x128xf32>,
    } else {
    }
    %c0 = arith.constant 0 : index
    %c0_1 = arith.constant 0 : index
    %3 = vector.load %arg8[%c0, %c0_1] : memref<256x128xf32, #tpu.memory_space<vmem>>, vector<256x128xf32>
    %c0_2 = arith.constant 0 : index
    %c0_3 = arith.constant 0 : index
    %4 = vector.load %arg2[%c0_2, %c0_3] : memref<256x256xbf16, #tpu.memory_space<vmem>>, vector<256x256xbf16>
    %c0_4 = arith.constant 0 : index
    %c0_5 = arith.constant 0 : index
    %5 = vector.load %arg3[%c0_4, %c0_5] : memref<256x128xbf16, #tpu.memory_space<vmem>>, vector<256x128xbf16>
    %cst = arith.constant dense<0.000000e+00> : vector<256x128xf32>
    %6 = tpu.matmul %4, %5, %cst {dimension_numbers = #tpu.dot_dimension_numbers<[1], [0], [0], [1], [0, 0, 1, 1], [], []>} : vector<256x256xbf16>, vector<256x128xbf16>, vector<256x128xf32> -> vector<256x128xf32>
    %7 = arith.addf %3, %6 : vector<256x128xf32>
    %c0_6 = arith.constant 0 : index
    %c0_7 = arith.constant 0 : index
    %8 = vector.load %arg8[%c0_6, %c0_7] : memref<256x128xf32, #tpu.memory_space<vmem>>, vector<256x128xf32>
    tpu.vector_store %arg8[%c0_6, %c0_7], %7 {strides = array<i32>} : memref<256x128xf32, #tpu.memory_space<vmem>>, vector<256x128xf32>,
    %c1_i32 = arith.constant 1 : i32
    %9 = arith.cmpi eq, %arg1, %c1_i32 : i32
    %10 = arith.extui %9 : i1 to i32
    %c0_i32_8 = arith.constant 0 : i32
    %11 = arith.cmpi ne, %10, %c0_i32_8 : i32
    scf.if %11 {
      %c0_9 = arith.constant 0 : index
      %c0_10 = arith.constant 0 : index
      %12 = vector.load %arg8[%c0_9, %c0_10] : memref<256x128xf32, #tpu.memory_space<vmem>>, vector<256x128xf32>
      %13 = arith.truncf %12 : vector<256x128xf32> to vector<256x128xbf16>
      %c0_11 = arith.constant 0 : index
      %c0_12 = arith.constant 0 : index
      %14 = vector.load %arg6[%c0_11, %c0_12] : memref<256x128xbf16, #tpu.memory_space<vmem>>, vector<256x128xbf16>
      tpu.vector_store %arg6[%c0_11, %c0_12], %13 {strides = array<i32>} : memref<256x128xbf16, #tpu.memory_space<vmem>>, vector<256x128xbf16>,
      %c0_13 = arith.constant 0 : index
      %c0_14 = arith.constant 0 : index
      %15 = vector.load %arg4[%c0_13, %c0_14] : memref<256x128xf32, #tpu.memory_space<vmem>>, vector<256x128xf32>
      %c0_15 = arith.constant 0 : index
      %c0_16 = arith.constant 0 : index
      %16 = vector.load %arg5[%c0_15, %c0_16] : memref<1x1xf32, #tpu.memory_space<vmem>>, vector<1x1xf32>
      %17 = vector.broadcast %16 : vector<1x1xf32> to vector<256x128xf32>
      %18 = arith.mulf %17, %12 : vector<256x128xf32>
      %19 = arith.addf %15, %18 : vector<256x128xf32>
      %c0_17 = arith.constant 0 : index
      %c0_18 = arith.constant 0 : index
      %20 = vector.load %arg7[%c0_17, %c0_18] : memref<256x128xf32, #tpu.memory_space<vmem>>, vector<256x128xf32>
      tpu.vector_store %arg7[%c0_17, %c0_18], %19 {strides = array<i32>} : memref<256x128xf32, #tpu.memory_space<vmem>>, vector<256x128xf32>,
    } else {
    }
    return
  }
  func.func @transform_0(%arg0: i32, %arg1: i32) -> (i32, i32) {
    %c0_i32 = arith.constant 0 : i32
    return %arg0, %arg1 : i32, i32
  }
  func.func @transform_1(%arg0: i32, %arg1: i32) -> (i32, i32) {
    %c0_i32 = arith.constant 0 : i32
    %c0_i32_0 = arith.constant 0 : i32
    return %arg1, %c0_i32 : i32, i32
  }
  func.func @transform_2(%arg0: i32, %arg1: i32) -> (i32, i32) {
    %c0_i32 = arith.constant 0 : i32
    %c0_i32_0 = arith.constant 0 : i32
    return %arg0, %c0_i32 : i32, i32
  }
  func.func @transform_3(%arg0: i32, %arg1: i32) -> (i32, i32) {
    %c0_i32 = arith.constant 0 : i32
    %c0_i32_0 = arith.constant 0 : i32
    %c0_i32_1 = arith.constant 0 : i32
    return %c0_i32, %c0_i32_0 : i32, i32
  }
  func.func @transform_4(%arg0: i32, %arg1: i32) -> (i32, i32) {
    %c0_i32 = arith.constant 0 : i32
    %c0_i32_0 = arith.constant 0 : i32
    return %arg0, %c0_i32 : i32, i32
  }
  func.func @transform_5(%arg0: i32, %arg1: i32) -> (i32, i32) {
    %c0_i32 = arith.constant 0 : i32
    %c0_i32_0 = arith.constant 0 : i32
    return %arg0, %c0_i32 : i32, i32
  }
}

module attributes {stable_mosaic.version = 11 : i64} {
  func.func @_mlp_kernel(%arg0: i32, %arg1: memref<256x128xbf16, #tpu.memory_space<vmem>>, %arg2: memref<128x128xbf16, #tpu.memory_space<vmem>>, %arg3: memref<1x128xf32, #tpu.memory_space<vmem>>, %arg4: memref<128x128xbf16, #tpu.memory_space<vmem>>, %arg5: memref<1x128xf32, #tpu.memory_space<vmem>>, %arg6: memref<1x1xf32, #tpu.memory_space<vmem>>, %arg7: memref<256x128xbf16, #tpu.memory_space<vmem>>, %arg8: memref<256x128xf32, #tpu.memory_space<vmem>>) attributes {dimension_semantics = [#tpu.dimension_semantics<parallel>], iteration_bounds = array<i64: 2>, scalar_prefetch = 0 : i64, scratch_operands = 0 : i64, tpu.core_type = #tpu.core_type<tc>, window_params = [{transform_indices = @transform_0, window_bounds = array<i64: 256, 128>}, {pipeline_mode = #tpu.pipeline_mode<synchronous>, transform_indices = @transform_1, window_bounds = array<i64: 128, 128>}, {pipeline_mode = #tpu.pipeline_mode<synchronous>, transform_indices = @transform_2, window_bounds = array<i64: 1, 128>}, {pipeline_mode = #tpu.pipeline_mode<synchronous>, transform_indices = @transform_3, window_bounds = array<i64: 128, 128>}, {pipeline_mode = #tpu.pipeline_mode<synchronous>, transform_indices = @transform_4, window_bounds = array<i64: 1, 128>}, {pipeline_mode = #tpu.pipeline_mode<synchronous>, transform_indices = @transform_5, window_bounds = array<i64: 1, 1>}, {transform_indices = @transform_6, window_bounds = array<i64: 256, 128>}, {transform_indices = @transform_7, window_bounds = array<i64: 256, 128>}]} {
    %c0 = arith.constant 0 : index
    %c0_0 = arith.constant 0 : index
    %0 = vector.load %arg1[%c0, %c0_0] : memref<256x128xbf16, #tpu.memory_space<vmem>>, vector<256x128xbf16>
    %c0_1 = arith.constant 0 : index
    %c0_2 = arith.constant 0 : index
    %1 = vector.load %arg2[%c0_1, %c0_2] : memref<128x128xbf16, #tpu.memory_space<vmem>>, vector<128x128xbf16>
    %cst = arith.constant dense<0.000000e+00> : vector<256x128xf32>
    %2 = tpu.matmul %0, %1, %cst {dimension_numbers = #tpu.dot_dimension_numbers<[1], [0], [0], [1], [0, 0, 1, 1], [], []>} : vector<256x128xbf16>, vector<128x128xbf16>, vector<256x128xf32> -> vector<256x128xf32>
    %c0_3 = arith.constant 0 : index
    %c0_4 = arith.constant 0 : index
    %3 = vector.load %arg3[%c0_3, %c0_4] : memref<1x128xf32, #tpu.memory_space<vmem>>, vector<1x128xf32>
    %4 = vector.broadcast %3 : vector<1x128xf32> to vector<256x128xf32>
    %5 = arith.addf %2, %4 : vector<256x128xf32>
    %cst_5 = arith.constant 0.000000e+00 : f32
    %6 = vector.broadcast %cst_5 : f32 to vector<256x128xf32>
    %7 = arith.maximumf %5, %6 : vector<256x128xf32>
    %8 = arith.truncf %7 : vector<256x128xf32> to vector<256x128xbf16>
    %c0_6 = arith.constant 0 : index
    %c0_7 = arith.constant 0 : index
    %9 = vector.load %arg4[%c0_6, %c0_7] : memref<128x128xbf16, #tpu.memory_space<vmem>>, vector<128x128xbf16>
    %cst_8 = arith.constant dense<0.000000e+00> : vector<256x128xf32>
    %10 = tpu.matmul %8, %9, %cst_8 {dimension_numbers = #tpu.dot_dimension_numbers<[1], [0], [0], [1], [0, 0, 1, 1], [], []>} : vector<256x128xbf16>, vector<128x128xbf16>, vector<256x128xf32> -> vector<256x128xf32>
    %c0_9 = arith.constant 0 : index
    %c0_10 = arith.constant 0 : index
    %11 = vector.load %arg5[%c0_9, %c0_10] : memref<1x128xf32, #tpu.memory_space<vmem>>, vector<1x128xf32>
    %12 = vector.broadcast %11 : vector<1x128xf32> to vector<256x128xf32>
    %13 = arith.addf %10, %12 : vector<256x128xf32>
    %14 = arith.truncf %13 : vector<256x128xf32> to vector<256x128xbf16>
    %c0_11 = arith.constant 0 : index
    %c0_12 = arith.constant 0 : index
    %15 = vector.load %arg7[%c0_11, %c0_12] : memref<256x128xbf16, #tpu.memory_space<vmem>>, vector<256x128xbf16>
    tpu.vector_store %arg7[%c0_11, %c0_12], %14 {strides = array<i32>} : memref<256x128xbf16, #tpu.memory_space<vmem>>, vector<256x128xbf16>,
    %c0_13 = arith.constant 0 : index
    %c0_14 = arith.constant 0 : index
    %16 = vector.load %arg6[%c0_13, %c0_14] : memref<1x1xf32, #tpu.memory_space<vmem>>, vector<1x1xf32>
    %17 = vector.broadcast %16 : vector<1x1xf32> to vector<256x128xf32>
    %18 = arith.mulf %17, %13 : vector<256x128xf32>
    %c0_15 = arith.constant 0 : index
    %c0_16 = arith.constant 0 : index
    %19 = vector.load %arg8[%c0_15, %c0_16] : memref<256x128xf32, #tpu.memory_space<vmem>>, vector<256x128xf32>
    tpu.vector_store %arg8[%c0_15, %c0_16], %18 {strides = array<i32>} : memref<256x128xf32, #tpu.memory_space<vmem>>, vector<256x128xf32>,
    return
  }
  func.func @transform_0(%arg0: i32) -> (i32, i32) {
    %c0_i32 = arith.constant 0 : i32
    %c0_i32_0 = arith.constant 0 : i32
    return %arg0, %c0_i32 : i32, i32
  }
  func.func @transform_1(%arg0: i32) -> (i32, i32) {
    %c0_i32 = arith.constant 0 : i32
    %c0_i32_0 = arith.constant 0 : i32
    %c0_i32_1 = arith.constant 0 : i32
    return %c0_i32, %c0_i32_0 : i32, i32
  }
  func.func @transform_2(%arg0: i32) -> (i32, i32) {
    %c0_i32 = arith.constant 0 : i32
    %c0_i32_0 = arith.constant 0 : i32
    %c0_i32_1 = arith.constant 0 : i32
    return %c0_i32, %c0_i32_0 : i32, i32
  }
  func.func @transform_3(%arg0: i32) -> (i32, i32) {
    %c0_i32 = arith.constant 0 : i32
    %c0_i32_0 = arith.constant 0 : i32
    %c0_i32_1 = arith.constant 0 : i32
    return %c0_i32, %c0_i32_0 : i32, i32
  }
  func.func @transform_4(%arg0: i32) -> (i32, i32) {
    %c0_i32 = arith.constant 0 : i32
    %c0_i32_0 = arith.constant 0 : i32
    %c0_i32_1 = arith.constant 0 : i32
    return %c0_i32, %c0_i32_0 : i32, i32
  }
  func.func @transform_5(%arg0: i32) -> (i32, i32) {
    %c0_i32 = arith.constant 0 : i32
    %c0_i32_0 = arith.constant 0 : i32
    %c0_i32_1 = arith.constant 0 : i32
    return %c0_i32, %c0_i32_0 : i32, i32
  }
  func.func @transform_6(%arg0: i32) -> (i32, i32) {
    %c0_i32 = arith.constant 0 : i32
    %c0_i32_0 = arith.constant 0 : i32
    return %arg0, %c0_i32 : i32, i32
  }
  func.func @transform_7(%arg0: i32) -> (i32, i32) {
    %c0_i32 = arith.constant 0 : i32
    %c0_i32_0 = arith.constant 0 : i32
    return %arg0, %c0_i32 : i32, i32
  }
}

module attributes {stable_mosaic.version = 11 : i64} {
  func.func @_gpr_step_kernel(%arg0: i32, %arg1: i32, %arg2: memref<256x256xbf16, #tpu.memory_space<vmem>>, %arg3: memref<256x128xbf16, #tpu.memory_space<vmem>>, %arg4: memref<256x128xf32, #tpu.memory_space<vmem>>, %arg5: memref<1x1xf32, #tpu.memory_space<vmem>>, %arg6: memref<256x128xbf16, #tpu.memory_space<vmem>>, %arg7: memref<256x128xf32, #tpu.memory_space<vmem>>, %arg8: memref<256x128xf32, #tpu.memory_space<vmem>>) attributes {dimension_semantics = [#tpu.dimension_semantics<parallel>, #tpu.dimension_semantics<arbitrary>], iteration_bounds = array<i64: 2, 2>, scalar_prefetch = 0 : i64, scratch_operands = 1 : i64, tpu.core_type = #tpu.core_type<tc>, window_params = [{transform_indices = @transform_0, window_bounds = array<i64: 256, 256>}, {transform_indices = @transform_1, window_bounds = array<i64: 256, 128>}, {transform_indices = @transform_2, window_bounds = array<i64: 256, 128>}, {pipeline_mode = #tpu.pipeline_mode<synchronous>, transform_indices = @transform_3, window_bounds = array<i64: 1, 1>}, {transform_indices = @transform_4, window_bounds = array<i64: 256, 128>}, {transform_indices = @transform_5, window_bounds = array<i64: 256, 128>}]} {
    %c0_i32 = arith.constant 0 : i32
    %0 = arith.cmpi eq, %arg1, %c0_i32 : i32
    %1 = arith.extui %0 : i1 to i32
    %c0_i32_0 = arith.constant 0 : i32
    %2 = arith.cmpi ne, %1, %c0_i32_0 : i32
    scf.if %2 {
      %cst_9 = arith.constant 0.000000e+00 : f32
      %12 = vector.broadcast %cst_9 : f32 to vector<256x128xf32>
      %c0_10 = arith.constant 0 : index
      %c0_11 = arith.constant 0 : index
      %13 = vector.load %arg8[%c0_10, %c0_11] : memref<256x128xf32, #tpu.memory_space<vmem>>, vector<256x128xf32>
      tpu.vector_store %arg8[%c0_10, %c0_11], %12 {strides = array<i32>} : memref<256x128xf32, #tpu.memory_space<vmem>>, vector<256x128xf32>,
    } else {
    }
    %c0 = arith.constant 0 : index
    %c0_1 = arith.constant 0 : index
    %3 = vector.load %arg8[%c0, %c0_1] : memref<256x128xf32, #tpu.memory_space<vmem>>, vector<256x128xf32>
    %c0_2 = arith.constant 0 : index
    %c0_3 = arith.constant 0 : index
    %4 = vector.load %arg2[%c0_2, %c0_3] : memref<256x256xbf16, #tpu.memory_space<vmem>>, vector<256x256xbf16>
    %c0_4 = arith.constant 0 : index
    %c0_5 = arith.constant 0 : index
    %5 = vector.load %arg3[%c0_4, %c0_5] : memref<256x128xbf16, #tpu.memory_space<vmem>>, vector<256x128xbf16>
    %cst = arith.constant dense<0.000000e+00> : vector<256x128xf32>
    %6 = tpu.matmul %4, %5, %cst {dimension_numbers = #tpu.dot_dimension_numbers<[1], [0], [0], [1], [0, 0, 1, 1], [], []>} : vector<256x256xbf16>, vector<256x128xbf16>, vector<256x128xf32> -> vector<256x128xf32>
    %7 = arith.addf %3, %6 : vector<256x128xf32>
    %c0_6 = arith.constant 0 : index
    %c0_7 = arith.constant 0 : index
    %8 = vector.load %arg8[%c0_6, %c0_7] : memref<256x128xf32, #tpu.memory_space<vmem>>, vector<256x128xf32>
    tpu.vector_store %arg8[%c0_6, %c0_7], %7 {strides = array<i32>} : memref<256x128xf32, #tpu.memory_space<vmem>>, vector<256x128xf32>,
    %c1_i32 = arith.constant 1 : i32
    %9 = arith.cmpi eq, %arg1, %c1_i32 : i32
    %10 = arith.extui %9 : i1 to i32
    %c0_i32_8 = arith.constant 0 : i32
    %11 = arith.cmpi ne, %10, %c0_i32_8 : i32
    scf.if %11 {
      %c0_9 = arith.constant 0 : index
      %c0_10 = arith.constant 0 : index
      %12 = vector.load %arg8[%c0_9, %c0_10] : memref<256x128xf32, #tpu.memory_space<vmem>>, vector<256x128xf32>
      %13 = arith.truncf %12 : vector<256x128xf32> to vector<256x128xbf16>
      %c0_11 = arith.constant 0 : index
      %c0_12 = arith.constant 0 : index
      %14 = vector.load %arg6[%c0_11, %c0_12] : memref<256x128xbf16, #tpu.memory_space<vmem>>, vector<256x128xbf16>
      tpu.vector_store %arg6[%c0_11, %c0_12], %13 {strides = array<i32>} : memref<256x128xbf16, #tpu.memory_space<vmem>>, vector<256x128xbf16>,
      %c0_13 = arith.constant 0 : index
      %c0_14 = arith.constant 0 : index
      %15 = vector.load %arg4[%c0_13, %c0_14] : memref<256x128xf32, #tpu.memory_space<vmem>>, vector<256x128xf32>
      %c0_15 = arith.constant 0 : index
      %c0_16 = arith.constant 0 : index
      %16 = vector.load %arg5[%c0_15, %c0_16] : memref<1x1xf32, #tpu.memory_space<vmem>>, vector<1x1xf32>
      %17 = vector.broadcast %16 : vector<1x1xf32> to vector<256x128xf32>
      %18 = arith.mulf %17, %12 : vector<256x128xf32>
      %19 = arith.addf %15, %18 : vector<256x128xf32>
      %c0_17 = arith.constant 0 : index
      %c0_18 = arith.constant 0 : index
      %20 = vector.load %arg7[%c0_17, %c0_18] : memref<256x128xf32, #tpu.memory_space<vmem>>, vector<256x128xf32>
      tpu.vector_store %arg7[%c0_17, %c0_18], %19 {strides = array<i32>} : memref<256x128xf32, #tpu.memory_space<vmem>>, vector<256x128xf32>,
    } else {
    }
    return
  }
  func.func @transform_0(%arg0: i32, %arg1: i32) -> (i32, i32) {
    %c0_i32 = arith.constant 0 : i32
    return %arg0, %arg1 : i32, i32
  }
  func.func @transform_1(%arg0: i32, %arg1: i32) -> (i32, i32) {
    %c0_i32 = arith.constant 0 : i32
    %c0_i32_0 = arith.constant 0 : i32
    return %arg1, %c0_i32 : i32, i32
  }
  func.func @transform_2(%arg0: i32, %arg1: i32) -> (i32, i32) {
    %c0_i32 = arith.constant 0 : i32
    %c0_i32_0 = arith.constant 0 : i32
    return %arg0, %c0_i32 : i32, i32
  }
  func.func @transform_3(%arg0: i32, %arg1: i32) -> (i32, i32) {
    %c0_i32 = arith.constant 0 : i32
    %c0_i32_0 = arith.constant 0 : i32
    %c0_i32_1 = arith.constant 0 : i32
    return %c0_i32, %c0_i32_0 : i32, i32
  }
  func.func @transform_4(%arg0: i32, %arg1: i32) -> (i32, i32) {
    %c0_i32 = arith.constant 0 : i32
    %c0_i32_0 = arith.constant 0 : i32
    return %arg0, %c0_i32 : i32, i32
  }
  func.func @transform_5(%arg0: i32, %arg1: i32) -> (i32, i32) {
    %c0_i32 = arith.constant 0 : i32
    %c0_i32_0 = arith.constant 0 : i32
    return %arg0, %c0_i32 : i32, i32
  }
}

module attributes {stable_mosaic.version = 11 : i64} {
  func.func @_log_softmax_kernel(%arg0: i32, %arg1: memref<256x128xf32, #tpu.memory_space<vmem>>, %arg2: memref<256x128xf32, #tpu.memory_space<vmem>>) attributes {dimension_semantics = [#tpu.dimension_semantics<parallel>], iteration_bounds = array<i64: 2>, scalar_prefetch = 0 : i64, scratch_operands = 0 : i64, tpu.core_type = #tpu.core_type<tc>, window_params = [{transform_indices = @transform_0, window_bounds = array<i64: 256, 128>}, {transform_indices = @transform_1, window_bounds = array<i64: 256, 128>}]} {
    %c0 = arith.constant 0 : index
    %c0_0 = arith.constant 0 : index
    %0 = vector.load %arg1[%c0, %c0_0] : memref<256x128xf32, #tpu.memory_space<vmem>>, vector<256x128xf32>
    %1 = tpu.iota {dimensions = array<i32: 1>} : vector<256x128xi32>
    %c10_i32 = arith.constant 10 : i32
    %2 = vector.broadcast %c10_i32 : i32 to vector<256x128xi32>
    %3 = arith.cmpi slt, %1, %2 : vector<256x128xi32>
    %cst = arith.constant -1.000000e+30 : f32
    %4 = vector.broadcast %cst : f32 to vector<256x128xf32>
    %5 = arith.select %3, %0, %4 : vector<256x128xi1>, vector<256x128xf32>
    %cst_1 = arith.constant dense<0xFF800000> : vector<256xf32>
    %6 = vector.multi_reduction <maximumf>, %5, %cst_1 [1] : vector<256x128xf32> to vector<256xf32>
    %7 = vector.shape_cast %6 : vector<256xf32> to vector<256x1xf32>
    %8 = vector.broadcast %7 : vector<256x1xf32> to vector<256x128xf32>
    %9 = arith.subf %5, %8 : vector<256x128xf32>
    %10 = math.exp %9 : vector<256x128xf32>
    %cst_2 = arith.constant 0.000000e+00 : f32
    %11 = vector.broadcast %cst_2 : f32 to vector<256x128xf32>
    %12 = arith.select %3, %10, %11 : vector<256x128xi1>, vector<256x128xf32>
    %cst_3 = arith.constant dense<0.000000e+00> : vector<256xf32>
    %13 = vector.multi_reduction <add>, %12, %cst_3 [1] : vector<256x128xf32> to vector<256xf32>
    %14 = vector.shape_cast %13 : vector<256xf32> to vector<256x1xf32>
    %15 = math.log %14 : vector<256x1xf32>
    %16 = vector.broadcast %15 : vector<256x1xf32> to vector<256x128xf32>
    %17 = arith.subf %9, %16 : vector<256x128xf32>
    %c0_4 = arith.constant 0 : index
    %c0_5 = arith.constant 0 : index
    %18 = vector.load %arg2[%c0_4, %c0_5] : memref<256x128xf32, #tpu.memory_space<vmem>>, vector<256x128xf32>
    tpu.vector_store %arg2[%c0_4, %c0_5], %17 {strides = array<i32>} : memref<256x128xf32, #tpu.memory_space<vmem>>, vector<256x128xf32>,
    return
  }
  func.func @transform_0(%arg0: i32) -> (i32, i32) {
    %c0_i32 = arith.constant 0 : i32
    %c0_i32_0 = arith.constant 0 : i32
    return %arg0, %c0_i32 : i32, i32
  }
  func.func @transform_1(%arg0: i32) -> (i32, i32) {
    %c0_i32 = arith.constant 0 : i32
    %c0_i32_0 = arith.constant 0 : i32
    return %arg0, %c0_i32 : i32, i32
  }
}

</mosaic_0001>

<llo_original>
// kernel: gprgnn_forward.7
$region0: #{gprgnn_forward.7}
  #allocation0 [shape = 'u32[]', space=smem, size = 0x4, offset = 0x4, fixed_abs, tag = 'smem constant byte address 0x4 - core index']
  #allocation1 [shape = 'u32[72,128]{1,0:T(1,128)}', space=vmem, size = 0x9000, scoped, tag = 'internal scratch']
  #allocation2 [shape = 'f32[256,128]{1,0:T(8,128)}', space=vmem, size = 0x20000, scoped, tag = 'scratch operand']
  #allocation3 [shape = 'f32[1,1]{1,0:T(1,128)S(1)}', space=vmem, size = 0x200, scoped, tag = 'scoped memory for gprgnn_forward.7']
  %s0 = inlined_call_operand.vmem [shape: bf16[512,512], index: 0, kind: input, shape index: {}]
  %s1 = inlined_call_operand.vmem [shape: bf16[512,128], index: 1, kind: input, shape index: {}]
  %s2 = inlined_call_operand.vmem [shape: f32[512,128], index: 2, kind: input, shape index: {}]
  %s3 = inlined_call_operand.<no memory space> [shape: f32[1,1], index: 3, kind: input, shape index: {}]
  %s4 = inlined_call_operand.vmem [shape: bf16[512,128], index: 4, kind: output, shape index: {0}]
  %s5 = inlined_call_operand.vmem [shape: f32[512,128], index: 5, kind: output, shape index: {1}]
  %6 = xla_tuple %s4, %s5
  %s7 = sld [smem:[#allocation0]]
  $region103: #{gprgnn_forward.7} parent=0
    _
  %s9 = ssub.s32 1, %s7
  %s10 = scalar_select 0, %s9, %s7
  %v11 = vstv %s3
  %12 = vst [vmem:[#allocation3] sm:$0x1] %v11
  $region1: #{gprgnn_forward.7} parent=0
    #allocation4 [shape = 'u8[262144]{0}', space=vmem, size = 0x40000, scoped, tag = 'input window, operand 0']
    loop: start=0, step=1, limit=6
    $region2: #{gprgnn_forward.7} parent=1 // loop_pre_header
      _
    $region3: #{gprgnn_forward.7} parent=1 // loop_header
      %s14 = sphi 0, %s18
      %p15 = scmp.ge.s32.totalorder %s14, 6
      %s21 = sphi 0, %s33
      %s22 = sphi 0, %s29
      %s23 = sphi 0, %s21
      %s24 = sphi 0, %s22
      %s25 = sphi 0, %s23
      %s26 = sphi 0, %s24
      %s38 = sphi 0, %s40
      %s41 = sphi 0, %s38
      %s42 = sphi 0, %s41
      %s58 = sphi 0, %s42
      %s64 = sphi 0, %s66
      %s67 = sphi 0, %s64
      %s68 = sphi 0, %s67
      %s84 = sphi 0, %s68
      %s90 = sphi 0, %s92
      %s93 = sphi 0, %s90
      %s94 = sphi 0, %s93
      %s110 = sphi 0, %s94
      %s114 = sphi 0, %s114
      %s116 = sphi 0, %s114
      %s117 = sphi 0, %s116
      %s131 = sphi 0, %s117
      %s137 = sphi 0, %s139
      %s140 = sphi 0, %s137
      %s141 = sphi 0, %s140
      %s157 = sphi 0, %s141
      %s163 = sphi 0, %s165
      %s166 = sphi 0, %s163
      %s167 = sphi 0, %s166
      %s183 = sphi 0, %s167
    $region4: #{gprgnn_forward.7} parent=1 // loop_header_branch
      %17 = sbr.rel (%p15) target = $region8
    $region5: #{gprgnn_forward.7} parent=1 // loop_body
      %s19 = ssub.s32 %s14, 1
      %s20 = ssub.s32 %s14, 2
      %s27 = sadd.s32 1, %s22
      %p28 = scmp.ge.s32.totalorder %s27, 2
      %s29 = scalar_select %p28, 0, %s27
      %s30 = sadd.s32 1, %s21
      %s31 = scalar_select %p28, %s30, %s21
      %p32 = scmp.ge.s32.totalorder %s31, 2
      %s33 = scalar_select %p32, 0, %s31
      %s34 = ssub.s32 %s21, %s33
      %s35 = ssub.s32 %s22, %s29
      %s36 = sor.u32 %s34, %s35
      %p37 = scmp.eq.s32.totalorder %s36, 0
      %s39 = sadd.s32 %s38, 1
      %s40 = scalar_select %p37, %s38, %s39
      %p43 = pneg %p37
      %p44 = scmp.eq.s32.totalorder %s14, 3
      %p45 = por %p43, %p44
      %p46 = scmp.ne.s32.totalorder %s38, %s41
      %p47 = scmp.eq.s32.totalorder %s14, 0
      %p48 = por %p46, %p47
      %p49 = scmp.ne.s32.totalorder %s38, %s41
      %p50 = scmp.eq.s32.totalorder %s19, 3
      %p51 = por %p49, %p50
      %p52 = scmp.ne.s32.totalorder %s41, %s42
      %p53 = scmp.eq.s32.totalorder %s19, 0
      %p54 = por %p52, %p53
      %p55 = scmp.ne.s32.totalorder %s41, %s42
      %p56 = scmp.eq.s32.totalorder %s20, 3
      %p57 = por %p55, %p56
      %p59 = scmp.ne.s32.totalorder %s42, %s58
      %p60 = scmp.eq.s32.totalorder %s20, 0
      %p61 = por %p59, %p60
      %s62 = ssub.s32 %s22, %s29
      %p63 = scmp.eq.s32.totalorder %s62, 0
      %s65 = sadd.s32 %s64, 1
      %s66 = scalar_select %p63, %s64, %s65
      %p69 = pneg %p63
      %p70 = scmp.eq.s32.totalorder %s14, 3
      %p71 = por %p69, %p70
      %p72 = scmp.ne.s32.totalorder %s64, %s67
      %p73 = scmp.eq.s32.totalorder %s14, 0
      %p74 = por %p72, %p73
      %p75 = scmp.ne.s32.totalorder %s64, %s67
      %p76 = scmp.eq.s32.totalorder %s19, 3
      %p77 = por %p75, %p76
      %p78 = scmp.ne.s32.totalorder %s67, %s68
      %p79 = scmp.eq.s32.totalorder %s19, 0
      %p80 = por %p78, %p79
      %p81 = scmp.ne.s32.totalorder %s67, %s68
      %p82 = scmp.eq.s32.totalorder %s20, 3
      %p83 = por %p81, %p82
      %p85 = scmp.ne.s32.totalorder %s68, %s84
      %p86 = scmp.eq.s32.totalorder %s20, 0
      %p87 = por %p85, %p86
      %s88 = ssub.s32 %s21, %s33
      %p89 = scmp.eq.s32.totalorder %s88, 0
      %s91 = sadd.s32 %s90, 1
      %s92 = scalar_select %p89, %s90, %s91
      %p95 = pneg %p89
      %p96 = scmp.eq.s32.totalorder %s14, 3
      %p97 = por %p95, %p96
      %p98 = scmp.ne.s32.totalorder %s90, %s93
      %p99 = scmp.eq.s32.totalorder %s14, 0
      %p100 = por %p98, %p99
      %p101 = scmp.ne.s32.totalorder %s90, %s93
      %p102 = scmp.eq.s32.totalorder %s19, 3
      %p103 = por %p101, %p102
      %p104 = scmp.ne.s32.totalorder %s93, %s94
      %p105 = scmp.eq.s32.totalorder %s19, 0
      %p106 = por %p104, %p105
      %p107 = scmp.ne.s32.totalorder %s93, %s94
      %p108 = scmp.eq.s32.totalorder %s20, 3
      %p109 = por %p107, %p108
      %p111 = scmp.ne.s32.totalorder %s94, %s110
      %p112 = scmp.eq.s32.totalorder %s20, 0
      %p113 = por %p111, %p112
      %s115 = sadd.s32 %s114, 1
      %p118 = scmp.eq.s32.totalorder %s14, 3
      %p119 = scmp.ne.s32.totalorder %s114, %s116
      %p120 = scmp.eq.s32.totalorder %s14, 0
      %p121 = por %p119, %p120
      %p122 = scmp.ne.s32.totalorder %s114, %s116
      %p123 = scmp.eq.s32.totalorder %s19, 3
      %p124 = por %p122, %p123
      %p125 = scmp.ne.s32.totalorder %s116, %s117
      %p126 = scmp.eq.s32.totalorder %s19, 0
      %p127 = por %p125, %p126
      %p128 = scmp.ne.s32.totalorder %s116, %s117
      %p129 = scmp.eq.s32.totalorder %s20, 3
      %p130 = por %p128, %p129
      %p132 = scmp.ne.s32.totalorder %s117, %s131
      %p133 = scmp.eq.s32.totalorder %s20, 0
      %p134 = por %p132, %p133
      %s135 = ssub.s32 %s21, %s33
      %p136 = scmp.eq.s32.totalorder %s135, 0
      %s138 = sadd.s32 %s137, 1
      %s139 = scalar_select %p136, %s137, %s138
      %p142 = pneg %p136
      %p143 = scmp.eq.s32.totalorder %s14, 3
      %p144 = por %p142, %p143
      %p145 = scmp.ne.s32.totalorder %s137, %s140
      %p146 = scmp.eq.s32.totalorder %s14, 0
      %p147 = por %p145, %p146
      %p148 = scmp.ne.s32.totalorder %s137, %s140
      %p149 = scmp.eq.s32.totalorder %s19, 3
      %p150 = por %p148, %p149
      %p151 = scmp.ne.s32.totalorder %s140, %s141
      %p152 = scmp.eq.s32.totalorder %s19, 0
      %p153 = por %p151, %p152
      %p154 = scmp.ne.s32.totalorder %s140, %s141
      %p155 = scmp.eq.s32.totalorder %s20, 3
      %p156 = por %p154, %p155
      %p158 = scmp.ne.s32.totalorder %s141, %s157
      %p159 = scmp.eq.s32.totalorder %s20, 0
      %p160 = por %p158, %p159
      %s161 = ssub.s32 %s21, %s33
      %p162 = scmp.eq.s32.totalorder %s161, 0
      %s164 = sadd.s32 %s163, 1
      %s165 = scalar_select %p162, %s163, %s164
      %p168 = pneg %p162
      %p169 = scmp.eq.s32.totalorder %s14, 3
      %p170 = por %p168, %p169
      %p171 = scmp.ne.s32.totalorder %s163, %s166
      %p172 = scmp.eq.s32.totalorder %s14, 0
      %p173 = por %p171, %p172
      %p174 = scmp.ne.s32.totalorder %s163, %s166
      %p175 = scmp.eq.s32.totalorder %s19, 3
      %p176 = por %p174, %p175
      %p177 = scmp.ne.s32.totalorder %s166, %s167
      %p178 = scmp.eq.s32.totalorder %s19, 0
      %p179 = por %p177, %p178
      %p180 = scmp.ne.s32.totalorder %s166, %s167
      %p181 = scmp.eq.s32.totalorder %s20, 3
      %p182 = por %p180, %p181
      %p184 = scmp.ne.s32.totalorder %s167, %s183
      %p185 = scmp.eq.s32.totalorder %s20, 0
      %p186 = por %p184, %p185
      %p187 = scmp.le.s32.totalorder 1, %s14
      %p188 = scmp.lt.s32.totalorder %s14, 5
      %p189 = pnand %p187, %p188
      %p190 = pneg %p189
      // Predicated region
      $region9: #{gprgnn_forward.7} parent=5 // pred_check
        _
      $region10: #{gprgnn_forward.7} parent=5 // pred_check_branch
        %192 = sbr.rel (%p189) target = $region12
      $region11: #{gprgnn_forward.7} parent=5 // pred_region
        %s193 = ssub.s32 %s14, 1
        // Predicated region
        $region13: #{gprgnn_forward.7} parent=11 // pred_check
          %p194 = pneg %p127
        $region14: #{gprgnn_forward.7} parent=11 // pred_check_branch
          %196 = sbr.rel (%p194) target = $region16
        $region15: #{gprgnn_forward.7} parent=11 // pred_region
          _
        $region16: #{gprgnn_forward.7} parent=11 // pred_fallthru
          _
      $region12: #{gprgnn_forward.7} parent=5 // pred_fallthru
        _
      %p197 = scmp.lt.s32.totalorder %s14, 4
      // Predicated region
      $region17: #{gprgnn_forward.7} parent=5 // pred_check
        %p198 = pneg %p197
      $region18: #{gprgnn_forward.7} parent=5 // pred_check_branch
        %200 = sbr.rel (%p198) target = $region20
      $region19: #{gprgnn_forward.7} parent=5 // pred_region
        // Predicated region
        $region21: #{gprgnn_forward.7} parent=19 // pred_check
          %p201 = pneg %p48
        $region22: #{gprgnn_forward.7} parent=19 // pred_check_branch
          %203 = sbr.rel (%p201) target = $region24
        $region23: #{gprgnn_forward.7} parent=19 // pred_region
          %s204 = sand.u32 %s38, 1
          %s205 = sand.u32 %s38, 1
          %s206 = smul.addr %s205, 256
          %s207 = scalar_lea.vmem [#allocation4], %s206
          %s208 = smul.u32 32, %s21
          %s209 = smul.u32 2, %s22
          %s210 = smul.addr %s208, 4
          %s211 = sadd.s32 %s209, %s210
          %s212 = smul.addr %s211, 4
          %s213 = scalar_lea.vmem %s0, %s212
          // Predicated region
          $region25: #{gprgnn_forward.7} parent=23 // pred_check
            _
          $region26: #{gprgnn_forward.7} parent=23 // pred_check_branch
            %215 = sbr.rel (0) target = $region28
          $region27: #{gprgnn_forward.7} parent=23 // pred_region
            // Predicated region
            $region29: #{gprgnn_forward.7} parent=27 // pred_check
              _
            $region30: #{gprgnn_forward.7} parent=27 // pred_check_branch
              %217 = sbr.rel (0) target = $region32
            $region31: #{gprgnn_forward.7} parent=27 // pred_region
              // Predicated region
              $region44: #{gprgnn_forward.7} parent=31 // pred_check
                _
              $region45: #{gprgnn_forward.7} parent=31 // pred_check_branch
                %295 = sbr.rel (0) target = $region47
              $region46: #{gprgnn_forward.7} parent=31 // pred_region
                loop: start=0, step=1, limit=1
                $region48: #{gprgnn_forward.7} parent=46 // loop_pre_header
                  _
                $region49: #{gprgnn_forward.7} parent=46 // loop_header
                  %s297 = sphi 0, %s301
                  %p298 = scmp.ge.s32.totalorder %s297, 1
                  %s302 = sphi %s213, %s213
                  %s303 = sphi %s207, %s207
                $region50: #{gprgnn_forward.7} parent=46 // loop_header_branch
                  %300 = sbr.rel (%p298) target = $region54
                $region51: #{gprgnn_forward.7} parent=46 // loop_body
                  %v304 = vld [vmem:[%s302] sm:$0xff]
                  %305 = vst [vmem:[%s303] sm:$0xff] %v304
                  %v306 = vld [vmem:[%s302 + $0x10] sm:$0xff]
                  %307 = vst [vmem:[%s303 + $0x8] sm:$0xff] %v306
                  %v308 = vld [vmem:[%s302 + $0x20] sm:$0xff]
                  %309 = vst [vmem:[%s303 + $0x10] sm:$0xff] %v308
                  %v310 = vld [vmem:[%s302 + $0x30] sm:$0xff]
                  %311 = vst [vmem:[%s303 + $0x18] sm:$0xff] %v310
                  %v312 = vld [vmem:[%s302 + $0x40] sm:$0xff]
                  %313 = vst [vmem:[%s303 + $0x20] sm:$0xff] %v312
                  %v314 = vld [vmem:[%s302 + $0x50] sm:$0xff]
                  %315 = vst [vmem:[%s303 + $0x28] sm:$0xff] %v314
                  %v316 = vld [vmem:[%s302 + $0x60] sm:$0xff]
                  %317 = vst [vmem:[%s303 + $0x30] sm:$0xff] %v316
                  %v318 = vld [vmem:[%s302 + $0x70] sm:$0xff]
                  %319 = vst [vmem:[%s303 + $0x38] sm:$0xff] %v318
                  %v320 = vld [vmem:[%s302 + $0x80] sm:$0xff]
                  %321 = vst [vmem:[%s303 + $0x40] sm:$0xff] %v320
                  %v322 = vld [vmem:[%s302 + $0x90] sm:$0xff]
                  %323 = vst [vmem:[%s303 + $0x48] sm:$0xff] %v322
                  %v324 = vld [vmem:[%s302 + $0xa0] sm:$0xff]
                  %325 = vst [vmem:[%s303 + $0x50] sm:$0xff] %v324
                  %v326 = vld [vmem:[%s302 + $0xb0] sm:$0xff]
                  %327 = vst [vmem:[%s303 + $0x58] sm:$0xff] %v326
                  %v328 = vld [vmem:[%s302 + $0xc0] sm:$0xff]
                  %329 = vst [vmem:[%s303 + $0x60] sm:$0xff] %v328
                  %v330 = vld [vmem:[%s302 + $0xd0] sm:$0xff]
                  %331 = vst [vmem:[%s303 + $0x68] sm:$0xff] %v330
                  %v332 = vld [vmem:[%s302 + $0xe0] sm:$0xff]
                  %333 = vst [vmem:[%s303 + $0x70] sm:$0xff] %v332
                  %v334 = vld [vmem:[%s302 + $0xf0] sm:$0xff]
                  %335 = vst [vmem:[%s303 + $0x78] sm:$0xff] %v334
                  %v336 = vld [vmem:[%s302 + $0x100] sm:$0xff]
                  %337 = vst [vmem:[%s303 + $0x80] sm:$0xff] %v336
                  %v338 = vld [vmem:[%s302 + $0x110] sm:$0xff]
                  %339 = vst [vmem:[%s303 + $0x88] sm:$0xff] %v338
                  %v340 = vld [vmem:[%s302 + $0x120] sm:$0xff]
                  %341 = vst [vmem:[%s303 + $0x90] sm:$0xff] %v340
                  %v342 = vld [vmem:[%s302 + $0x130] sm:$0xff]
                  %343 = vst [vmem:[%s303 + $0x98] sm:$0xff] %v342
                  %v344 = vld [vmem:[%s302 + $0x140] sm:$0xff]
                  %345 = vst [vmem:[%s303 + $0xa0] sm:$0xff] %v344
                  %v346 = vld [vmem:[%s302 + $0x150] sm:$0xff]
                  %347 = vst [vmem:[%s303 + $0xa8] sm:$0xff] %v346
                  %v348 = vld [vmem:[%s302 + $0x160] sm:$0xff]
                  %349 = vst [vmem:[%s303 + $0xb0] sm:$0xff] %v348
                  %v350 = vld [vmem:[%s302 + $0x170] sm:$0xff]
                  %351 = vst [vmem:[%s303 + $0xb8] sm:$0xff] %v350
                  %v352 = vld [vmem:[%s302 + $0x180] sm:$0xff]
                  %353 = vst [vmem:[%s303 + $0xc0] sm:$0xff] %v352
                  %v354 = vld [vmem:[%s302 + $0x190] sm:$0xff]
                  %355 = vst [vmem:[%s303 + $0xc8] sm:$0xff] %v354
                  %v356 = vld [vmem:[%s302 + $0x1a0] sm:$0xff]
                  %357 = vst [vmem:[%s303 + $0xd0] sm:$0xff] %v356
                  %v358 = vld [vmem:[%s302 + $0x1b0] sm:$0xff]
                  %359 = vst [vmem:[%s303 + $0xd8] sm:$0xff] %v358
                  %v360 = vld [vmem:[%s302 + $0x1c0] sm:$0xff]
                  %361 = vst [vmem:[%s303 + $0xe0] sm:$0xff] %v360
                  %v362 = vld [vmem:[%s302 + $0x1d0] sm:$0xff]
                  %363 = vst [vmem:[%s303 + $0xe8] sm:$0xff] %v362
                  %v364 = vld [vmem:[%s302 + $0x1e0] sm:$0xff]
                  %365 = vst [vmem:[%s303 + $0xf0] sm:$0xff] %v364
                  %v366 = vld [vmem:[%s302 + $0x1f0] sm:$0xff]
                  %367 = vst [vmem:[%s303 + $0xf8] sm:$0xff] %v366
                $region52: #{gprgnn_forward.7} parent=46 // loop_footer
                  %s301 = sadd.s32 1, %s297
                $region53: #{gprgnn_forward.7} parent=46 // loop_footer_branch
                  %296 = sbr.rel target = $region49
                $region54: #{gprgnn_forward.7} parent=46 // loop_exit
                  _
              $region47: #{gprgnn_forward.7} parent=31 // pred_fallthru
                _
              // Predicated region
              $region55: #{gprgnn_forward.7} parent=31 // pred_check
                _
              $region56: #{gprgnn_forward.7} parent=31 // pred_check_branch
                %369 = sbr.rel target = $region58
              $region57: #{gprgnn_forward.7} parent=31 // pred_region
                _
              $region58: #{gprgnn_forward.7} parent=31 // pred_fallthru
                _
            $region32: #{gprgnn_forward.7} parent=27 // pred_fallthru
              _
            // Predicated region
            $region33: #{gprgnn_forward.7} parent=27 // pred_check
              _
            $region34: #{gprgnn_forward.7} parent=27 // pred_check_branch
              %219 = sbr.rel target = $region36
            $region35: #{gprgnn_forward.7} parent=27 // pred_region
              %s221 = ssub.s32 256, 1
              loop: start=0, step=1, limit=1
              $region37: #{gprgnn_forward.7} parent=35 // loop_pre_header
                _
              $region38: #{gprgnn_forward.7} parent=35 // loop_header
                %s223 = sphi 0, %s227
                %p224 = scmp.ge.s32.totalorder %s223, 1
                %s228 = sphi %s213, %s213
                %s229 = sphi %s207, %s207
              $region39: #{gprgnn_forward.7} parent=35 // loop_header_branch
                %226 = sbr.rel (%p224) target = $region43
              $region40: #{gprgnn_forward.7} parent=35 // loop_body
                %v230 = vld [vmem:[%s228] sm:%s221]
                %231 = vst [vmem:[%s229] sm:%s221] %v230
                %v232 = vld [vmem:[%s228 + $0x10] sm:%s221]
                %233 = vst [vmem:[%s229 + $0x8] sm:%s221] %v232
                %v234 = vld [vmem:[%s228 + $0x20] sm:%s221]
                %235 = vst [vmem:[%s229 + $0x10] sm:%s221] %v234
                %v236 = vld [vmem:[%s228 + $0x30] sm:%s221]
                %237 = vst [vmem:[%s229 + $0x18] sm:%s221] %v236
                %v238 = vld [vmem:[%s228 + $0x40] sm:%s221]
                %239 = vst [vmem:[%s229 + $0x20] sm:%s221] %v238
                %v240 = vld [vmem:[%s228 + $0x50] sm:%s221]
                %241 = vst [vmem:[%s229 + $0x28] sm:%s221] %v240
                %v242 = vld [vmem:[%s228 + $0x60] sm:%s221]
                %243 = vst [vmem:[%s229 + $0x30] sm:%s221] %v242
                %v244 = vld [vmem:[%s228 + $0x70] sm:%s221]
                %245 = vst [vmem:[%s229 + $0x38] sm:%s221] %v244
                %v246 = vld [vmem:[%s228 + $0x80] sm:%s221]
                %247 = vst [vmem:[%s229 + $0x40] sm:%s221] %v246
                %v248 = vld [vmem:[%s228 + $0x90] sm:%s221]
                %249 = vst [vmem:[%s229 + $0x48] sm:%s221] %v248
                %v250 = vld [vmem:[%s228 + $0xa0] sm:%s221]
                %251 = vst [vmem:[%s229 + $0x50] sm:%s221] %v250
                %v252 = vld [vmem:[%s228 + $0xb0] sm:%s221]
                %253 = vst [vmem:[%s229 + $0x58] sm:%s221] %v252
                %v254 = vld [vmem:[%s228 + $0xc0] sm:%s221]
                %255 = vst [vmem:[%s229 + $0x60] sm:%s221] %v254
                %v256 = vld [vmem:[%s228 + $0xd0] sm:%s221]
                %257 = vst [vmem:[%s229 + $0x68] sm:%s221] %v256
                %v258 = vld [vmem:[%s228 + $0xe0] sm:%s221]
                %259 = vst [vmem:[%s229 + $0x70] sm:%s221] %v258
                %v260 = vld [vmem:[%s228 + $0xf0] sm:%s221]
                %261 = vst [vmem:[%s229 + $0x78] sm:%s221] %v260
                %v262 = vld [vmem:[%s228 + $0x100] sm:%s221]
                %263 = vst [vmem:[%s229 + $0x80] sm:%s221] %v262
                %v264 = vld [vmem:[%s228 + $0x110] sm:%s221]
                %265 = vst [vmem:[%s229 + $0x88] sm:%s221] %v264
                %v266 = vld [vmem:[%s228 + $0x120] sm:%s221]
                %267 = vst [vmem:[%s229 + $0x90] sm:%s221] %v266
                %v268 = vld [vmem:[%s228 + $0x130] sm:%s221]
                %269 = vst [vmem:[%s229 + $0x98] sm:%s221] %v268
                %v270 = vld [vmem:[%s228 + $0x140] sm:%s221]
                %271 = vst [vmem:[%s229 + $0xa0] sm:%s221] %v270
                %v272 = vld [vmem:[%s228 + $0x150] sm:%s221]
                %273 = vst [vmem:[%s229 + $0xa8] sm:%s221] %v272
                %v274 = vld [vmem:[%s228 + $0x160] sm:%s221]
                %275 = vst [vmem:[%s229 + $0xb0] sm:%s221] %v274
                %v276 = vld [vmem:[%s228 + $0x170] sm:%s221]
                %277 = vst [vmem:[%s229 + $0xb8] sm:%s221] %v276
                %v278 = vld [vmem:[%s228 + $0x180] sm:%s221]
                %279 = vst [vmem:[%s229 + $0xc0] sm:%s221] %v278
                %v280 = vld [vmem:[%s228 + $0x190] sm:%s221]
                %281 = vst [vmem:[%s229 + $0xc8] sm:%s221] %v280
                %v282 = vld [vmem:[%s228 + $0x1a0] sm:%s221]
                %283 = vst [vmem:[%s229 + $0xd0] sm:%s221] %v282
                %v284 = vld [vmem:[%s228 + $0x1b0] sm:%s221]
                %285 = vst [vmem:[%s229 + $0xd8] sm:%s221] %v284
                %v286 = vld [vmem:[%s228 + $0x1c0] sm:%s221]
                %287 = vst [vmem:[%s229 + $0xe0] sm:%s221] %v286
                %v288 = vld [vmem:[%s228 + $0x1d0] sm:%s221]
                %289 = vst [vmem:[%s229 + $0xe8] sm:%s221] %v288
                %v290 = vld [vmem:[%s228 + $0x1e0] sm:%s221]
                %291 = vst [vmem:[%s229 + $0xf0] sm:%s221] %v290
                %v292 = vld [vmem:[%s228 + $0x1f0] sm:%s221]
                %293 = vst [vmem:[%s229 + $0xf8] sm:%s221] %v292
              $region41: #{gprgnn_forward.7} parent=35 // loop_footer
                %s227 = sadd.s32 1, %s223
              $region42: #{gprgnn_forward.7} parent=35 // loop_footer_branch
                %222 = sbr.rel target = $region38
              $region43: #{gprgnn_forward.7} parent=35 // loop_exit
                _
            $region36: #{gprgnn_forward.7} parent=27 // pred_fallthru
              _
          $region28: #{gprgnn_forward.7} parent=23 // pred_fallthru
            _
          %370 = vnop
        $region24: #{gprgnn_forward.7} parent=19 // pred_fallthru
          _
        // Predicated region
        $region59: #{gprgnn_forward.7} parent=19 // pred_check
          %p371 = pneg %p74
        $region60: #{gprgnn_forward.7} parent=19 // pred_check_branch
          %373 = sbr.rel (%p371) target = $region62
        $region61: #{gprgnn_forward.7} parent=19 // pred_region
          %s374 = smul.u32 32, %s22
          %p375 = scmp.lt.s32.totalorder %s374, 63
          %s376 = scalar_select %p375, %s374, 63
          %s377 = smul.addr %s376, 4
          %s378 = scalar_lea.vmem %s1, %s377
          %s379 = smul.u32 32, %s22
        $region62: #{gprgnn_forward.7} parent=19 // pred_fallthru
          _
        // Predicated region
        $region63: #{gprgnn_forward.7} parent=19 // pred_check
          %p380 = pneg %p100
        $region64: #{gprgnn_forward.7} parent=19 // pred_check_branch
          %382 = sbr.rel (%p380) target = $region66
        $region65: #{gprgnn_forward.7} parent=19 // pred_region
          %s383 = smul.u32 32, %s21
          %p384 = scmp.lt.s32.totalorder %s383, 63
          %s385 = scalar_select %p384, %s383, 63
          %s386 = smul.addr %s385, 8
          %s387 = scalar_lea.vmem %s2, %s386
          %s388 = smul.u32 32, %s21
        $region66: #{gprgnn_forward.7} parent=19 // pred_fallthru
          _
      $region20: #{gprgnn_forward.7} parent=5 // pred_fallthru
        _
      %p389 = scmp.le.s32.totalorder 1, %s14
      %p390 = scmp.lt.s32.totalorder %s14, 5
      %p391 = pnand %p389, %p390
      %p392 = pneg %p391
      // Predicated region
      $region67: #{gprgnn_forward.7} parent=5 // pred_check
        _
      $region68: #{gprgnn_forward.7} parent=5 // pred_check_branch
        %394 = sbr.rel (%p391) target = $region70
      $region69: #{gprgnn_forward.7} parent=5 // pred_region
        %s395 = ssub.s32 %s14, 1
        %s396 = sand.u32 %s41, 1
        %s397 = sand.u32 %s41, 1
        %s398 = smul.addr %s397, 256
        %s399 = scalar_lea.vmem [#allocation4], %s398
        // Predicated region
        $region71: #{gprgnn_forward.7} parent=69 // pred_check
          %p400 = pneg %p54
        $region72: #{gprgnn_forward.7} parent=69 // pred_check_branch
          %402 = sbr.rel (%p400) target = $region74
        $region73: #{gprgnn_forward.7} parent=69 // pred_region
          _
        $region74: #{gprgnn_forward.7} parent=69 // pred_fallthru
          _
        %s403 = sand.u32 %s41, 1
        %s404 = sand.u32 %s41, 1
        %s405 = smul.addr %s404, 256
        %s406 = scalar_lea.vmem [#allocation4], %s405
        %p407 = pneg %p54
        %p408 = pneg %p51
        %s409 = smul.u32 32, %s24
        %p410 = scmp.lt.s32.totalorder %s409, 63
        %s411 = scalar_select %p410, %s409, 63
        %s412 = smul.addr %s411, 4
        %s413 = scalar_lea.vmem %s1, %s412
        %p414 = pneg %p80
        %p415 = pneg %p77
        %s416 = smul.u32 32, %s23
        %p417 = scmp.lt.s32.totalorder %s416, 63
        %s418 = scalar_select %p417, %s416, 63
        %s419 = smul.addr %s418, 8
        %s420 = scalar_lea.vmem %s2, %s419
        %p421 = pneg %p106
        %p422 = pneg %p103
        %p423 = pneg %p127
        %p424 = pneg %p124
        %p425 = pneg %p153
        %p426 = pneg %p150
        %s427 = smul.u32 32, %s23
        %p428 = scmp.lt.s32.totalorder %s427, 63
        %s429 = scalar_select %p428, %s427, 63
        %s430 = smul.addr %s429, 4
        %s431 = scalar_lea.vmem %s4, %s430
        %p432 = pneg %p179
        %p433 = pneg %p176
        %s434 = smul.u32 32, %s23
        %p435 = scmp.lt.s32.totalorder %s434, 63
        %s436 = scalar_select %p435, %s434, 63
        %s437 = smul.addr %s436, 8
        %s438 = scalar_lea.vmem %s5, %s437
        %s439 = smul.u32 32, %s23
        %s440 = smul.u32 2, %s24
        %s441 = smul.u32 32, %s24
        %p442 = scmp.lt.s32.totalorder %s441, 63
        %s443 = scalar_select %p442, %s441, 63
        %s444 = smul.addr %s443, 4
        %s445 = scalar_lea.vmem %s1, %s444
        %s446 = smul.u32 32, %s24
        %s447 = smul.u32 32, %s23
        %p448 = scmp.lt.s32.totalorder %s447, 63
        %s449 = scalar_select %p448, %s447, 63
        %s450 = smul.addr %s449, 8
        %s451 = scalar_lea.vmem %s2, %s450
        %s452 = smul.u32 32, %s23
        %s453 = smul.u32 32, %s23
        %p454 = scmp.lt.s32.totalorder %s453, 63
        %s455 = scalar_select %p454, %s453, 63
        %s456 = smul.addr %s455, 4
        %s457 = scalar_lea.vmem %s4, %s456
        %s458 = smul.u32 32, %s23
        %s459 = smul.u32 32, %s23
        %p460 = scmp.lt.s32.totalorder %s459, 63
        %s461 = scalar_select %p460, %s459, 63
        %s462 = smul.addr %s461, 8
        %s463 = scalar_lea.vmem %s5, %s462
        %s464 = smul.u32 32, %s23
        %p465 = scmp.eq.s32.totalorder %s24, 0
        // Predicated region
        $region75: #{gprgnn_forward.7} parent=69 // pred_check
          %p466 = pneg %p465
        $region76: #{gprgnn_forward.7} parent=69 // pred_check_branch
          %468 = sbr.rel (%p466) target = $region78
        $region77: #{gprgnn_forward.7} parent=69 // pred_region
          %469 = vst [vmem:[#allocation2] sm:$0xff] 0.0
          %470 = vst [vmem:[#allocation2 + $0x8] sm:$0xff] 0.0
          %471 = vst [vmem:[#allocation2 + $0x10] sm:$0xff] 0.0
          %472 = vst [vmem:[#allocation2 + $0x18] sm:$0xff] 0.0
          %473 = vst [vmem:[#allocation2 + $0x20] sm:$0xff] 0.0
          %474 = vst [vmem:[#allocation2 + $0x28] sm:$0xff] 0.0
          %475 = vst [vmem:[#allocation2 + $0x30] sm:$0xff] 0.0
          %476 = vst [vmem:[#allocation2 + $0x38] sm:$0xff] 0.0
          %477 = vst [vmem:[#allocation2 + $0x40] sm:$0xff] 0.0
          %478 = vst [vmem:[#allocation2 + $0x48] sm:$0xff] 0.0
          %479 = vst [vmem:[#allocation2 + $0x50] sm:$0xff] 0.0
          %480 = vst [vmem:[#allocation2 + $0x58] sm:$0xff] 0.0
          %481 = vst [vmem:[#allocation2 + $0x60] sm:$0xff] 0.0
          %482 = vst [vmem:[#allocation2 + $0x68] sm:$0xff] 0.0
          %483 = vst [vmem:[#allocation2 + $0x70] sm:$0xff] 0.0
          %484 = vst [vmem:[#allocation2 + $0x78] sm:$0xff] 0.0
          %485 = vst [vmem:[#allocation2 + $0x80] sm:$0xff] 0.0
          %486 = vst [vmem:[#allocation2 + $0x88] sm:$0xff] 0.0
          %487 = vst [vmem:[#allocation2 + $0x90] sm:$0xff] 0.0
          %488 = vst [vmem:[#allocation2 + $0x98] sm:$0xff] 0.0
          %489 = vst [vmem:[#allocation2 + $0xa0] sm:$0xff] 0.0
          %490 = vst [vmem:[#allocation2 + $0xa8] sm:$0xff] 0.0
          %491 = vst [vmem:[#allocation2 + $0xb0] sm:$0xff] 0.0
          %492 = vst [vmem:[#allocation2 + $0xb8] sm:$0xff] 0.0
          %493 = vst [vmem:[#allocation2 + $0xc0] sm:$0xff] 0.0
          %494 = vst [vmem:[#allocation2 + $0xc8] sm:$0xff] 0.0
          %495 = vst [vmem:[#allocation2 + $0xd0] sm:$0xff] 0.0
          %496 = vst [vmem:[#allocation2 + $0xd8] sm:$0xff] 0.0
          %497 = vst [vmem:[#allocation2 + $0xe0] sm:$0xff] 0.0
          %498 = vst [vmem:[#allocation2 + $0xe8] sm:$0xff] 0.0
          %499 = vst [vmem:[#allocation2 + $0xf0] sm:$0xff] 0.0
          %500 = vst [vmem:[#allocation2 + $0xf8] sm:$0xff] 0.0
        $region78: #{gprgnn_forward.7} parent=69 // pred_fallthru
          _
        %v501 = vld [vmem:[#allocation2] sm:$0xff]
        %v502 = vld [vmem:[#allocation2 + $0x8] sm:$0xff]
        %v503 = vld [vmem:[#allocation2 + $0x10] sm:$0xff]
        %v504 = vld [vmem:[#allocation2 + $0x18] sm:$0xff]
        %v505 = vld [vmem:[#allocation2 + $0x20] sm:$0xff]
        %v506 = vld [vmem:[#allocation2 + $0x28] sm:$0xff]
        %v507 = vld [vmem:[#allocation2 + $0x30] sm:$0xff]
        %v508 = vld [vmem:[#allocation2 + $0x38] sm:$0xff]
        %v509 = vld [vmem:[#allocation2 + $0x40] sm:$0xff]
        %v510 = vld [vmem:[#allocation2 + $0x48] sm:$0xff]
        %v511 = vld [vmem:[#allocation2 + $0x50] sm:$0xff]
        %v512 = vld [vmem:[#allocation2 + $0x58] sm:$0xff]
        %v513 = vld [vmem:[#allocation2 + $0x60] sm:$0xff]
        %v514 = vld [vmem:[#allocation2 + $0x68] sm:$0xff]
        %v515 = vld [vmem:[#allocation2 + $0x70] sm:$0xff]
        %v516 = vld [vmem:[#allocation2 + $0x78] sm:$0xff]
        %v517 = vld [vmem:[#allocation2 + $0x80] sm:$0xff]
        %v518 = vld [vmem:[#allocation2 + $0x88] sm:$0xff]
        %v519 = vld [vmem:[#allocation2 + $0x90] sm:$0xff]
        %v520 = vld [vmem:[#allocation2 + $0x98] sm:$0xff]
        %v521 = vld [vmem:[#allocation2 + $0xa0] sm:$0xff]
        %v522 = vld [vmem:[#allocation2 + $0xa8] sm:$0xff]
        %v523 = vld [vmem:[#allocation2 + $0xb0] sm:$0xff]
        %v524 = vld [vmem:[#allocation2 + $0xb8] sm:$0xff]
        %v525 = vld [vmem:[#allocation2 + $0xc0] sm:$0xff]
        %v526 = vld [vmem:[#allocation2 + $0xc8] sm:$0xff]
        %v527 = vld [vmem:[#allocation2 + $0xd0] sm:$0xff]
        %v528 = vld [vmem:[#allocation2 + $0xd8] sm:$0xff]
        %v529 = vld [vmem:[#allocation2 + $0xe0] sm:$0xff]
        %v530 = vld [vmem:[#allocation2 + $0xe8] sm:$0xff]
        %v531 = vld [vmem:[#allocation2 + $0xf0] sm:$0xff]
        %v532 = vld [vmem:[#allocation2 + $0xf8] sm:$0xff]
        %v533 = vld [vmem:[%s399] sm:$0xff]
        %v534 = vld [vmem:[%s399 + $0x8] sm:$0xff]
        %v535 = vld [vmem:[%s399 + $0x10] sm:$0xff]
        %v536 = vld [vmem:[%s399 + $0x18] sm:$0xff]
        %v537 = vld [vmem:[%s399 + $0x20] sm:$0xff]
        %v538 = vld [vmem:[%s399 + $0x28] sm:$0xff]
        %v539 = vld [vmem:[%s399 + $0x30] sm:$0xff]
        %v540 = vld [vmem:[%s399 + $0x38] sm:$0xff]
        %v541 = vld [vmem:[%s399 + $0x40] sm:$0xff]
        %v542 = vld [vmem:[%s399 + $0x48] sm:$0xff]
        %v543 = vld [vmem:[%s399 + $0x50] sm:$0xff]
        %v544 = vld [vmem:[%s399 + $0x58] sm:$0xff]
        %v545 = vld [vmem:[%s399 + $0x60] sm:$0xff]
        %v546 = vld [vmem:[%s399 + $0x68] sm:$0xff]
        %v547 = vld [vmem:[%s399 + $0x70] sm:$0xff]
        %v548 = vld [vmem:[%s399 + $0x78] sm:$0xff]
        %v549 = vld [vmem:[%s399 + $0x80] sm:$0xff]
        %v550 = vld [vmem:[%s399 + $0x88] sm:$0xff]
        %v551 = vld [vmem:[%s399 + $0x90] sm:$0xff]
        %v552 = vld [vmem:[%s399 + $0x98] sm:$0xff]
        %v553 = vld [vmem:[%s399 + $0xa0] sm:$0xff]
        %v554 = vld [vmem:[%s399 + $0xa8] sm:$0xff]
        %v555 = vld [vmem:[%s399 + $0xb0] sm:$0xff]
        %v556 = vld [vmem:[%s399 + $0xb8] sm:$0xff]
        %v557 = vld [vmem:[%s399 + $0xc0] sm:$0xff]
        %v558 = vld [vmem:[%s399 + $0xc8] sm:$0xff]
        %v559 = vld [vmem:[%s399 + $0xd0] sm:$0xff]
        %v560 = vld [vmem:[%s399 + $0xd8] sm:$0xff]
        %v561 = vld [vmem:[%s399 + $0xe0] sm:$0xff]
        %v562 = vld [vmem:[%s399 + $0xe8] sm:$0xff]
        %v563 = vld [vmem:[%s399 + $0xf0] sm:$0xff]
        %v564 = vld [vmem:[%s399 + $0xf8] sm:$0xff]
        %v565 = vld [vmem:[%s445] sm:$0xf]
        %v566 = vld [vmem:[%s445 + $0x4] sm:$0xf]
        %v567 = vld [vmem:[%s445 + $0x8] sm:$0xf]
        %v568 = vld [vmem:[%s445 + $0xc] sm:$0xf]
        %v569 = vld [vmem:[%s445 + $0x10] sm:$0xf]
        %v570 = vld [vmem:[%s445 + $0x14] sm:$0xf]
        %v571 = vld [vmem:[%s445 + $0x18] sm:$0xf]
        %v572 = vld [vmem:[%s445 + $0x1c] sm:$0xf]
        %v573 = vld [vmem:[%s445 + $0x20] sm:$0xf]
        %v574 = vld [vmem:[%s445 + $0x24] sm:$0xf]
        %v575 = vld [vmem:[%s445 + $0x28] sm:$0xf]
        %v576 = vld [vmem:[%s445 + $0x2c] sm:$0xf]
        %v577 = vld [vmem:[%s445 + $0x30] sm:$0xf]
        %v578 = vld [vmem:[%s445 + $0x34] sm:$0xf]
        %v579 = vld [vmem:[%s445 + $0x38] sm:$0xf]
        %v580 = vld [vmem:[%s445 + $0x3c] sm:$0xf]
        %v581 = vld [vmem:[%s445 + $0x40] sm:$0xf]
        %v582 = vld [vmem:[%s445 + $0x44] sm:$0xf]
        %v583 = vld [vmem:[%s445 + $0x48] sm:$0xf]
        %v584 = vld [vmem:[%s445 + $0x4c] sm:$0xf]
        %v585 = vld [vmem:[%s445 + $0x50] sm:$0xf]
        %v586 = vld [vmem:[%s445 + $0x54] sm:$0xf]
        %v587 = vld [vmem:[%s445 + $0x58] sm:$0xf]
        %v588 = vld [vmem:[%s445 + $0x5c] sm:$0xf]
        %v589 = vld [vmem:[%s445 + $0x60] sm:$0xf]
        %v590 = vld [vmem:[%s445 + $0x64] sm:$0xf]
        %v591 = vld [vmem:[%s445 + $0x68] sm:$0xf]
        %v592 = vld [vmem:[%s445 + $0x6c] sm:$0xf]
        %v593 = vld [vmem:[%s445 + $0x70] sm:$0xf]
        %v594 = vld [vmem:[%s445 + $0x74] sm:$0xf]
        %v595 = vld [vmem:[%s445 + $0x78] sm:$0xf]
        %v596 = vld [vmem:[%s445 + $0x7c] sm:$0xf]
        %v629 = vunpack.c.l.b16 %v533
        %v630 = vunpack.c.h.b16 %v533
        %v631 = vunpack.c.l.b16 %v534
        %v632 = vunpack.c.h.b16 %v534
        %v633 = vunpack.c.l.b16 %v535
        %v634 = vunpack.c.h.b16 %v535
        %v635 = vunpack.c.l.b16 %v536
        %v636 = vunpack.c.h.b16 %v536
        %v637 = vunpack.c.l.b16 %v537
        %v638 = vunpack.c.h.b16 %v537
        %v639 = vunpack.c.l.b16 %v538
        %v640 = vunpack.c.h.b16 %v538
        %v641 = vunpack.c.l.b16 %v539
        %v642 = vunpack.c.h.b16 %v539
        %v643 = vunpack.c.l.b16 %v540
        %v644 = vunpack.c.h.b16 %v540
        %v645 = vunpack.c.l.b16 %v541
        %v646 = vunpack.c.h.b16 %v541
        %v647 = vunpack.c.l.b16 %v542
        %v648 = vunpack.c.h.b16 %v542
        %v649 = vunpack.c.l.b16 %v543
        %v650 = vunpack.c.h.b16 %v543
        %v651 = vunpack.c.l.b16 %v544
        %v652 = vunpack.c.h.b16 %v544
        %v653 = vunpack.c.l.b16 %v545
        %v654 = vunpack.c.h.b16 %v545
        %v655 = vunpack.c.l.b16 %v546
        %v656 = vunpack.c.h.b16 %v546
        %v657 = vunpack.c.l.b16 %v547
        %v658 = vunpack.c.h.b16 %v547
        %v659 = vunpack.c.l.b16 %v548
        %v660 = vunpack.c.h.b16 %v548
        %v661 = vunpack.c.l.b16 %v549
        %v662 = vunpack.c.h.b16 %v549
        %v663 = vunpack.c.l.b16 %v550
        %v664 = vunpack.c.h.b16 %v550
        %v665 = vunpack.c.l.b16 %v551
        %v666 = vunpack.c.h.b16 %v551
        %v667 = vunpack.c.l.b16 %v552
        %v668 = vunpack.c.h.b16 %v552
        %v669 = vunpack.c.l.b16 %v553
        %v670 = vunpack.c.h.b16 %v553
        %v671 = vunpack.c.l.b16 %v554
        %v672 = vunpack.c.h.b16 %v554
        %v673 = vunpack.c.l.b16 %v555
        %v674 = vunpack.c.h.b16 %v555
        %v675 = vunpack.c.l.b16 %v556
        %v676 = vunpack.c.h.b16 %v556
        %v677 = vunpack.c.l.b16 %v557
        %v678 = vunpack.c.h.b16 %v557
        %v679 = vunpack.c.l.b16 %v558
        %v680 = vunpack.c.h.b16 %v558
        %v681 = vunpack.c.l.b16 %v559
        %v682 = vunpack.c.h.b16 %v559
        %v683 = vunpack.c.l.b16 %v560
        %v684 = vunpack.c.h.b16 %v560
        %v685 = vunpack.c.l.b16 %v561
        %v686 = vunpack.c.h.b16 %v561
        %v687 = vunpack.c.l.b16 %v562
        %v688 = vunpack.c.h.b16 %v562
        %v689 = vunpack.c.l.b16 %v563
        %v690 = vunpack.c.h.b16 %v563
        %v691 = vunpack.c.l.b16 %v564
        %v692 = vunpack.c.h.b16 %v564
        %v693 = vpack.c.b16 %v631, %v629
        %v694 = vpack.c.b16 %v632, %v630
        %v695 = vpack.c.b16 %v635, %v633
        %v696 = vpack.c.b16 %v636, %v634
        %v697 = vpack.c.b16 %v639, %v637
        %v698 = vpack.c.b16 %v640, %v638
        %v699 = vpack.c.b16 %v643, %v641
        %v700 = vpack.c.b16 %v644, %v642
        %v701 = vpack.c.b16 %v647, %v645
        %v702 = vpack.c.b16 %v648, %v646
        %v703 = vpack.c.b16 %v651, %v649
        %v704 = vpack.c.b16 %v652, %v650
        %v705 = vpack.c.b16 %v655, %v653
        %v706 = vpack.c.b16 %v656, %v654
        %v707 = vpack.c.b16 %v659, %v657
        %v708 = vpack.c.b16 %v660, %v658
        %v709 = vpack.c.b16 %v663, %v661
        %v710 = vpack.c.b16 %v664, %v662
        %v711 = vpack.c.b16 %v667, %v665
        %v712 = vpack.c.b16 %v668, %v666
        %v713 = vpack.c.b16 %v671, %v669
        %v714 = vpack.c.b16 %v672, %v670
        %v715 = vpack.c.b16 %v675, %v673
        %v716 = vpack.c.b16 %v676, %v674
        %v717 = vpack.c.b16 %v679, %v677
        %v718 = vpack.c.b16 %v680, %v678
        %v719 = vpack.c.b16 %v683, %v681
        %v720 = vpack.c.b16 %v684, %v682
        %v721 = vpack.c.b16 %v687, %v685
        %v722 = vpack.c.b16 %v688, %v686
        %v723 = vpack.c.b16 %v691, %v689
        %v724 = vpack.c.b16 %v692, %v690
        %v789 = vunpack.c.l.b16 %v565
        %v790 = vunpack.c.l.b16 %v566
        %v791 = vunpack.c.l.b16 %v567
        %v792 = vunpack.c.l.b16 %v568
        %v793 = vunpack.c.l.b16 %v569
        %v794 = vunpack.c.l.b16 %v570
        %v795 = vunpack.c.l.b16 %v571
        %v796 = vunpack.c.l.b16 %v572
        %v797 = vunpack.c.l.b16 %v573
        %v798 = vunpack.c.l.b16 %v574
        %v799 = vunpack.c.l.b16 %v575
        %v800 = vunpack.c.l.b16 %v576
        %v801 = vunpack.c.l.b16 %v577
        %v802 = vunpack.c.l.b16 %v578
        %v803 = vunpack.c.l.b16 %v579
        %v804 = vunpack.c.l.b16 %v580
        %v805 = vunpack.c.l.b16 %v581
        %v806 = vunpack.c.l.b16 %v582
        %v807 = vunpack.c.l.b16 %v583
        %v808 = vunpack.c.l.b16 %v584
        %v809 = vunpack.c.l.b16 %v585
        %v810 = vunpack.c.l.b16 %v586
        %v811 = vunpack.c.l.b16 %v587
        %v812 = vunpack.c.l.b16 %v588
        %v813 = vunpack.c.l.b16 %v589
        %v814 = vunpack.c.l.b16 %v590
        %v815 = vunpack.c.l.b16 %v591
        %v816 = vunpack.c.l.b16 %v592
        %v817 = vunpack.c.l.b16 %v593
        %v818 = vunpack.c.l.b16 %v594
        %v819 = vunpack.c.l.b16 %v595
        %v820 = vunpack.c.l.b16 %v596
        %v821 = vpack.c.b16 %v790, %v789
        %v822 = vpack.c.b16 %v792, %v791
        %v823 = vpack.c.b16 %v794, %v793
        %v824 = vpack.c.b16 %v796, %v795
        %v825 = vpack.c.b16 %v798, %v797
        %v826 = vpack.c.b16 %v800, %v799
        %v827 = vpack.c.b16 %v802, %v801
        %v828 = vpack.c.b16 %v804, %v803
        %v829 = vpack.c.b16 %v806, %v805
        %v830 = vpack.c.b16 %v808, %v807
        %v831 = vpack.c.b16 %v810, %v809
        %v832 = vpack.c.b16 %v812, %v811
        %v833 = vpack.c.b16 %v814, %v813
        %v834 = vpack.c.b16 %v816, %v815
        %v835 = vpack.c.b16 %v818, %v817
        %v836 = vpack.c.b16 %v820, %v819
        %853 = vmatpush.bf16.msra.mxu0 %v828
        %854 = vmatpush.bf16.msra.mxu0 %v827
        %855 = vmatpush.bf16.msra.mxu0 %v826
        %856 = vmatpush.bf16.msra.mxu0 %v825
        %857 = vmatpush.bf16.msra.mxu0 %v824
        %858 = vmatpush.bf16.msra.mxu0 %v823
        %859 = vmatpush.bf16.msra.mxu0 %v822
        %860 = vmatpush.bf16.msra.mxu0 %v821
        %861 = vmatmul.bf16.gmra.mxu0 %v693
        %v862 = vpop.f32.mrf.mxu0
        %v863 = vadd.f32 0.0, %v862
        %v864 = vpop.f32.mrf.mxu0
        %v865 = vadd.f32 0.0, %v864
        %866 = vmatmul.bf16.gmra.mxu0 %v695
        %v867 = vpop.f32.mrf.mxu0
        %v868 = vadd.f32 0.0, %v867
        %v869 = vpop.f32.mrf.mxu0
        %v870 = vadd.f32 0.0, %v869
        %871 = vmatmul.bf16.gmra.mxu0 %v697
        %v872 = vpop.f32.mrf.mxu0
        %v873 = vadd.f32 0.0, %v872
        %v874 = vpop.f32.mrf.mxu0
        %v875 = vadd.f32 0.0, %v874
        %876 = vmatmul.bf16.gmra.mxu0 %v699
        %v877 = vpop.f32.mrf.mxu0
        %v878 = vadd.f32 0.0, %v877
        %v879 = vpop.f32.mrf.mxu0
        %v880 = vadd.f32 0.0, %v879
        %881 = vmatmul.bf16.gmra.mxu0 %v701
        %v882 = vpop.f32.mrf.mxu0
        %v883 = vadd.f32 0.0, %v882
        %v884 = vpop.f32.mrf.mxu0
        %v885 = vadd.f32 0.0, %v884
        %886 = vmatmul.bf16.gmra.mxu0 %v703
        %v887 = vpop.f32.mrf.mxu0
        %v888 = vadd.f32 0.0, %v887
        %v889 = vpop.f32.mrf.mxu0
        %v890 = vadd.f32 0.0, %v889
        %891 = vmatmul.bf16.gmra.mxu0 %v705
        %v892 = vpop.f32.mrf.mxu0
        %v893 = vadd.f32 0.0, %v892
        %v894 = vpop.f32.mrf.mxu0
        %v895 = vadd.f32 0.0, %v894
        %896 = vmatmul.bf16.gmra.mxu0 %v707
        %v897 = vpop.f32.mrf.mxu0
        %v898 = vadd.f32 0.0, %v897
        %v899 = vpop.f32.mrf.mxu0
        %v900 = vadd.f32 0.0, %v899
        %901 = vmatmul.bf16.gmra.mxu0 %v709
        %v902 = vpop.f32.mrf.mxu0
        %v903 = vadd.f32 0.0, %v902
        %v904 = vpop.f32.mrf.mxu0
        %v905 = vadd.f32 0.0, %v904
        %906 = vmatmul.bf16.gmra.mxu0 %v711
        %v907 = vpop.f32.mrf.mxu0
        %v908 = vadd.f32 0.0, %v907
        %v909 = vpop.f32.mrf.mxu0
        %v910 = vadd.f32 0.0, %v909
        %911 = vmatmul.bf16.gmra.mxu0 %v713
        %v912 = vpop.f32.mrf.mxu0
        %v913 = vadd.f32 0.0, %v912
        %v914 = vpop.f32.mrf.mxu0
        %v915 = vadd.f32 0.0, %v914
        %916 = vmatmul.bf16.gmra.mxu0 %v715
        %v917 = vpop.f32.mrf.mxu0
        %v918 = vadd.f32 0.0, %v917
        %v919 = vpop.f32.mrf.mxu0
        %v920 = vadd.f32 0.0, %v919
        %921 = vmatmul.bf16.gmra.mxu0 %v717
        %v922 = vpop.f32.mrf.mxu0
        %v923 = vadd.f32 0.0, %v922
        %v924 = vpop.f32.mrf.mxu0
        %v925 = vadd.f32 0.0, %v924
        %926 = vmatmul.bf16.gmra.mxu0 %v719
        %v927 = vpop.f32.mrf.mxu0
        %v928 = vadd.f32 0.0, %v927
        %v929 = vpop.f32.mrf.mxu0
        %v930 = vadd.f32 0.0, %v929
        %931 = vmatmul.bf16.gmra.mxu0 %v721
        %v932 = vpop.f32.mrf.mxu0
        %v933 = vadd.f32 0.0, %v932
        %v934 = vpop.f32.mrf.mxu0
        %v935 = vadd.f32 0.0, %v934
        %936 = vmatmul.bf16.gmra.mxu0 %v723
        %v937 = vpop.f32.mrf.mxu0
        %v938 = vadd.f32 0.0, %v937
        %v939 = vpop.f32.mrf.mxu0
        %v940 = vadd.f32 0.0, %v939
        %941 = vdwg.mxu0
        %942 = vmatpush.bf16.msra.mxu0 %v836
        %943 = vmatpush.bf16.msra.mxu0 %v835
        %944 = vmatpush.bf16.msra.mxu0 %v834
        %945 = vmatpush.bf16.msra.mxu0 %v833
        %946 = vmatpush.bf16.msra.mxu0 %v832
        %947 = vmatpush.bf16.msra.mxu0 %v831
        %948 = vmatpush.bf16.msra.mxu0 %v830
        %949 = vmatpush.bf16.msra.mxu0 %v829
        %950 = vmatmul.bf16.gmra.mxu0 %v694
        %v951 = vpop.f32.mrf.mxu0
        %v952 = vadd.f32 %v863, %v951
        %v953 = vpop.f32.mrf.mxu0
        %v954 = vadd.f32 %v865, %v953
        %955 = vmatmul.bf16.gmra.mxu0 %v696
        %v956 = vpop.f32.mrf.mxu0
        %v957 = vadd.f32 %v868, %v956
        %v958 = vpop.f32.mrf.mxu0
        %v959 = vadd.f32 %v870, %v958
        %960 = vmatmul.bf16.gmra.mxu0 %v698
        %v961 = vpop.f32.mrf.mxu0
        %v962 = vadd.f32 %v873, %v961
        %v963 = vpop.f32.mrf.mxu0
        %v964 = vadd.f32 %v875, %v963
        %965 = vmatmul.bf16.gmra.mxu0 %v700
        %v966 = vpop.f32.mrf.mxu0
        %v967 = vadd.f32 %v878, %v966
        %v968 = vpop.f32.mrf.mxu0
        %v969 = vadd.f32 %v880, %v968
        %970 = vmatmul.bf16.gmra.mxu0 %v702
        %v971 = vpop.f32.mrf.mxu0
        %v972 = vadd.f32 %v883, %v971
        %v973 = vpop.f32.mrf.mxu0
        %v974 = vadd.f32 %v885, %v973
        %975 = vmatmul.bf16.gmra.mxu0 %v704
        %v976 = vpop.f32.mrf.mxu0
        %v977 = vadd.f32 %v888, %v976
        %v978 = vpop.f32.mrf.mxu0
        %v979 = vadd.f32 %v890, %v978
        %980 = vmatmul.bf16.gmra.mxu0 %v706
        %v981 = vpop.f32.mrf.mxu0
        %v982 = vadd.f32 %v893, %v981
        %v983 = vpop.f32.mrf.mxu0
        %v984 = vadd.f32 %v895, %v983
        %985 = vmatmul.bf16.gmra.mxu0 %v708
        %v986 = vpop.f32.mrf.mxu0
        %v987 = vadd.f32 %v898, %v986
        %v988 = vpop.f32.mrf.mxu0
        %v989 = vadd.f32 %v900, %v988
        %990 = vmatmul.bf16.gmra.mxu0 %v710
        %v991 = vpop.f32.mrf.mxu0
        %v992 = vadd.f32 %v903, %v991
        %v993 = vpop.f32.mrf.mxu0
        %v994 = vadd.f32 %v905, %v993
        %995 = vmatmul.bf16.gmra.mxu0 %v712
        %v996 = vpop.f32.mrf.mxu0
        %v997 = vadd.f32 %v908, %v996
        %v998 = vpop.f32.mrf.mxu0
        %v999 = vadd.f32 %v910, %v998
        %1000 = vmatmul.bf16.gmra.mxu0 %v714
        %v1001 = vpop.f32.mrf.mxu0
        %v1002 = vadd.f32 %v913, %v1001
        %v1003 = vpop.f32.mrf.mxu0
        %v1004 = vadd.f32 %v915, %v1003
        %1005 = vmatmul.bf16.gmra.mxu0 %v716
        %v1006 = vpop.f32.mrf.mxu0
        %v1007 = vadd.f32 %v918, %v1006
        %v1008 = vpop.f32.mrf.mxu0
        %v1009 = vadd.f32 %v920, %v1008
        %1010 = vmatmul.bf16.gmra.mxu0 %v718
        %v1011 = vpop.f32.mrf.mxu0
        %v1012 = vadd.f32 %v923, %v1011
        %v1013 = vpop.f32.mrf.mxu0
        %v1014 = vadd.f32 %v925, %v1013
        %1015 = vmatmul.bf16.gmra.mxu0 %v720
        %v1016 = vpop.f32.mrf.mxu0
        %v1017 = vadd.f32 %v928, %v1016
        %v1018 = vpop.f32.mrf.mxu0
        %v1019 = vadd.f32 %v930, %v1018
        %1020 = vmatmul.bf16.gmra.mxu0 %v722
        %v1021 = vpop.f32.mrf.mxu0
        %v1022 = vadd.f32 %v933, %v1021
        %v1023 = vpop.f32.mrf.mxu0
        %v1024 = vadd.f32 %v935, %v1023
        %1025 = vmatmul.bf16.gmra.mxu0 %v724
        %v1026 = vpop.f32.mrf.mxu0
        %v1027 = vadd.f32 %v938, %v1026
        %v1028 = vpop.f32.mrf.mxu0
        %v1029 = vadd.f32 %v940, %v1028
        %1030 = vdwg.mxu0
        %v1031 = vadd.f32 %v501, %v952
        %v1032 = vadd.f32 %v502, %v954
        %v1033 = vadd.f32 %v503, %v957
        %v1034 = vadd.f32 %v504, %v959
        %v1035 = vadd.f32 %v505, %v962
        %v1036 = vadd.f32 %v506, %v964
        %v1037 = vadd.f32 %v507, %v967
        %v1038 = vadd.f32 %v508, %v969
        %v1039 = vadd.f32 %v509, %v972
        %v1040 = vadd.f32 %v510, %v974
        %v1041 = vadd.f32 %v511, %v977
        %v1042 = vadd.f32 %v512, %v979
        %v1043 = vadd.f32 %v513, %v982
        %v1044 = vadd.f32 %v514, %v984
        %v1045 = vadd.f32 %v515, %v987
        %v1046 = vadd.f32 %v516, %v989
        %v1047 = vadd.f32 %v517, %v992
        %v1048 = vadd.f32 %v518, %v994
        %v1049 = vadd.f32 %v519, %v997
        %v1050 = vadd.f32 %v520, %v999
        %v1051 = vadd.f32 %v521, %v1002
        %v1052 = vadd.f32 %v522, %v1004
        %v1053 = vadd.f32 %v523, %v1007
        %v1054 = vadd.f32 %v524, %v1009
        %v1055 = vadd.f32 %v525, %v1012
        %v1056 = vadd.f32 %v526, %v1014
        %v1057 = vadd.f32 %v527, %v1017
        %v1058 = vadd.f32 %v528, %v1019
        %v1059 = vadd.f32 %v529, %v1022
        %v1060 = vadd.f32 %v530, %v1024
        %v1061 = vadd.f32 %v531, %v1027
        %v1062 = vadd.f32 %v532, %v1029
        %1063 = vst [vmem:[#allocation2] sm:$0xff] %v1031
        %1064 = vst [vmem:[#allocation2 + $0x8] sm:$0xff] %v1032
        %1065 = vst [vmem:[#allocation2 + $0x10] sm:$0xff] %v1033
        %1066 = vst [vmem:[#allocation2 + $0x18] sm:$0xff] %v1034
        %1067 = vst [vmem:[#allocation2 + $0x20] sm:$0xff] %v1035
        %1068 = vst [vmem:[#allocation2 + $0x28] sm:$0xff] %v1036
        %1069 = vst [vmem:[#allocation2 + $0x30] sm:$0xff] %v1037
        %1070 = vst [vmem:[#allocation2 + $0x38] sm:$0xff] %v1038
        %1071 = vst [vmem:[#allocation2 + $0x40] sm:$0xff] %v1039
        %1072 = vst [vmem:[#allocation2 + $0x48] sm:$0xff] %v1040
        %1073 = vst [vmem:[#allocation2 + $0x50] sm:$0xff] %v1041
        %1074 = vst [vmem:[#allocation2 + $0x58] sm:$0xff] %v1042
        %1075 = vst [vmem:[#allocation2 + $0x60] sm:$0xff] %v1043
        %1076 = vst [vmem:[#allocation2 + $0x68] sm:$0xff] %v1044
        %1077 = vst [vmem:[#allocation2 + $0x70] sm:$0xff] %v1045
        %1078 = vst [vmem:[#allocation2 + $0x78] sm:$0xff] %v1046
        %1079 = vst [vmem:[#allocation2 + $0x80] sm:$0xff] %v1047
        %1080 = vst [vmem:[#allocation2 + $0x88] sm:$0xff] %v1048
        %1081 = vst [vmem:[#allocation2 + $0x90] sm:$0xff] %v1049
        %1082 = vst [vmem:[#allocation2 + $0x98] sm:$0xff] %v1050
        %1083 = vst [vmem:[#allocation2 + $0xa0] sm:$0xff] %v1051
        %1084 = vst [vmem:[#allocation2 + $0xa8] sm:$0xff] %v1052
        %1085 = vst [vmem:[#allocation2 + $0xb0] sm:$0xff] %v1053
        %1086 = vst [vmem:[#allocation2 + $0xb8] sm:$0xff] %v1054
        %1087 = vst [vmem:[#allocation2 + $0xc0] sm:$0xff] %v1055
        %1088 = vst [vmem:[#allocation2 + $0xc8] sm:$0xff] %v1056
        %1089 = vst [vmem:[#allocation2 + $0xd0] sm:$0xff] %v1057
        %1090 = vst [vmem:[#allocation2 + $0xd8] sm:$0xff] %v1058
        %1091 = vst [vmem:[#allocation2 + $0xe0] sm:$0xff] %v1059
        %1092 = vst [vmem:[#allocation2 + $0xe8] sm:$0xff] %v1060
        %1093 = vst [vmem:[#allocation2 + $0xf0] sm:$0xff] %v1061
        %1094 = vst [vmem:[#allocation2 + $0xf8] sm:$0xff] %v1062
        %p1095 = scmp.eq.s32.totalorder %s24, 1
        // Predicated region
        $region79: #{gprgnn_forward.7} parent=69 // pred_check
          %p1096 = pneg %p1095
        $region80: #{gprgnn_forward.7} parent=69 // pred_check_branch
          %1098 = sbr.rel (%p1096) target = $region82
        $region81: #{gprgnn_forward.7} parent=69 // pred_region
          %v1099 = vld [vmem:[#allocation2] sm:$0xff]
          %v1100 = vld [vmem:[#allocation2 + $0x8] sm:$0xff]
          %v1101 = vld [vmem:[#allocation2 + $0x10] sm:$0xff]
          %v1102 = vld [vmem:[#allocation2 + $0x18] sm:$0xff]
          %v1103 = vld [vmem:[#allocation2 + $0x20] sm:$0xff]
          %v1104 = vld [vmem:[#allocation2 + $0x28] sm:$0xff]
          %v1105 = vld [vmem:[#allocation2 + $0x30] sm:$0xff]
          %v1106 = vld [vmem:[#allocation2 + $0x38] sm:$0xff]
          %v1107 = vld [vmem:[#allocation2 + $0x40] sm:$0xff]
          %v1108 = vld [vmem:[#allocation2 + $0x48] sm:$0xff]
          %v1109 = vld [vmem:[#allocation2 + $0x50] sm:$0xff]
          %v1110 = vld [vmem:[#allocation2 + $0x58] sm:$0xff]
          %v1111 = vld [vmem:[#allocation2 + $0x60] sm:$0xff]
          %v1112 = vld [vmem:[#allocation2 + $0x68] sm:$0xff]
          %v1113 = vld [vmem:[#allocation2 + $0x70] sm:$0xff]
          %v1114 = vld [vmem:[#allocation2 + $0x78] sm:$0xff]
          %v1115 = vld [vmem:[#allocation2 + $0x80] sm:$0xff]
          %v1116 = vld [vmem:[#allocation2 + $0x88] sm:$0xff]
          %v1117 = vld [vmem:[#allocation2 + $0x90] sm:$0xff]
          %v1118 = vld [vmem:[#allocation2 + $0x98] sm:$0xff]
          %v1119 = vld [vmem:[#allocation2 + $0xa0] sm:$0xff]
          %v1120 = vld [vmem:[#allocation2 + $0xa8] sm:$0xff]
          %v1121 = vld [vmem:[#allocation2 + $0xb0] sm:$0xff]
          %v1122 = vld [vmem:[#allocation2 + $0xb8] sm:$0xff]
          %v1123 = vld [vmem:[#allocation2 + $0xc0] sm:$0xff]
          %v1124 = vld [vmem:[#allocation2 + $0xc8] sm:$0xff]
          %v1125 = vld [vmem:[#allocation2 + $0xd0] sm:$0xff]
          %v1126 = vld [vmem:[#allocation2 + $0xd8] sm:$0xff]
          %v1127 = vld [vmem:[#allocation2 + $0xe0] sm:$0xff]
          %v1128 = vld [vmem:[#allocation2 + $0xe8] sm:$0xff]
          %v1129 = vld [vmem:[#allocation2 + $0xf0] sm:$0xff]
          %v1130 = vld [vmem:[#allocation2 + $0xf8] sm:$0xff]
          %v1131 = vpack.c.bf16 %v1099, %v1099
          %v1132 = vpack.c.bf16 %v1100, %v1100
          %v1133 = vpack.c.bf16 %v1101, %v1101
          %v1134 = vpack.c.bf16 %v1102, %v1102
          %v1135 = vpack.c.bf16 %v1103, %v1103
          %v1136 = vpack.c.bf16 %v1104, %v1104
          %v1137 = vpack.c.bf16 %v1105, %v1105
          %v1138 = vpack.c.bf16 %v1106, %v1106
          %v1139 = vpack.c.bf16 %v1107, %v1107
          %v1140 = vpack.c.bf16 %v1108, %v1108
          %v1141 = vpack.c.bf16 %v1109, %v1109
          %v1142 = vpack.c.bf16 %v1110, %v1110
          %v1143 = vpack.c.bf16 %v1111, %v1111
          %v1144 = vpack.c.bf16 %v1112, %v1112
          %v1145 = vpack.c.bf16 %v1113, %v1113
          %v1146 = vpack.c.bf16 %v1114, %v1114
          %v1147 = vpack.c.bf16 %v1115, %v1115
          %v1148 = vpack.c.bf16 %v1116, %v1116
          %v1149 = vpack.c.bf16 %v1117, %v1117
          %v1150 = vpack.c.bf16 %v1118, %v1118
          %v1151 = vpack.c.bf16 %v1119, %v1119
          %v1152 = vpack.c.bf16 %v1120, %v1120
          %v1153 = vpack.c.bf16 %v1121, %v1121
          %v1154 = vpack.c.bf16 %v1122, %v1122
          %v1155 = vpack.c.bf16 %v1123, %v1123
          %v1156 = vpack.c.bf16 %v1124, %v1124
          %v1157 = vpack.c.bf16 %v1125, %v1125
          %v1158 = vpack.c.bf16 %v1126, %v1126
          %v1159 = vpack.c.bf16 %v1127, %v1127
          %v1160 = vpack.c.bf16 %v1128, %v1128
          %v1161 = vpack.c.bf16 %v1129, %v1129
          %v1162 = vpack.c.bf16 %v1130, %v1130
          %1163 = vst [vmem:[%s457] sm:$0xf] %v1131
          %1164 = vst [vmem:[%s457 + $0x4] sm:$0xf] %v1132
          %1165 = vst [vmem:[%s457 + $0x8] sm:$0xf] %v1133
          %1166 = vst [vmem:[%s457 + $0xc] sm:$0xf] %v1134
          %1167 = vst [vmem:[%s457 + $0x10] sm:$0xf] %v1135
          %1168 = vst [vmem:[%s457 + $0x14] sm:$0xf] %v1136
          %1169 = vst [vmem:[%s457 + $0x18] sm:$0xf] %v1137
          %1170 = vst [vmem:[%s457 + $0x1c] sm:$0xf] %v1138
          %1171 = vst [vmem:[%s457 + $0x20] sm:$0xf] %v1139
          %1172 = vst [vmem:[%s457 + $0x24] sm:$0xf] %v1140
          %1173 = vst [vmem:[%s457 + $0x28] sm:$0xf] %v1141
          %1174 = vst [vmem:[%s457 + $0x2c] sm:$0xf] %v1142
          %1175 = vst [vmem:[%s457 + $0x30] sm:$0xf] %v1143
          %1176 = vst [vmem:[%s457 + $0x34] sm:$0xf] %v1144
          %1177 = vst [vmem:[%s457 + $0x38] sm:$0xf] %v1145
          %1178 = vst [vmem:[%s457 + $0x3c] sm:$0xf] %v1146
          %1179 = vst [vmem:[%s457 + $0x40] sm:$0xf] %v1147
          %1180 = vst [vmem:[%s457 + $0x44] sm:$0xf] %v1148
          %1181 = vst [vmem:[%s457 + $0x48] sm:$0xf] %v1149
          %1182 = vst [vmem:[%s457 + $0x4c] sm:$0xf] %v1150
          %1183 = vst [vmem:[%s457 + $0x50] sm:$0xf] %v1151
          %1184 = vst [vmem:[%s457 + $0x54] sm:$0xf] %v1152
          %1185 = vst [vmem:[%s457 + $0x58] sm:$0xf] %v1153
          %1186 = vst [vmem:[%s457 + $0x5c] sm:$0xf] %v1154
          %1187 = vst [vmem:[%s457 + $0x60] sm:$0xf] %v1155
          %1188 = vst [vmem:[%s457 + $0x64] sm:$0xf] %v1156
          %1189 = vst [vmem:[%s457 + $0x68] sm:$0xf] %v1157
          %1190 = vst [vmem:[%s457 + $0x6c] sm:$0xf] %v1158
          %1191 = vst [vmem:[%s457 + $0x70] sm:$0xf] %v1159
          %1192 = vst [vmem:[%s457 + $0x74] sm:$0xf] %v1160
          %1193 = vst [vmem:[%s457 + $0x78] sm:$0xf] %v1161
          %1194 = vst [vmem:[%s457 + $0x7c] sm:$0xf] %v1162
          %v1195 = vld [vmem:[%s451] sm:$0xff]
          %v1196 = vld [vmem:[%s451 + $0x8] sm:$0xff]
          %v1197 = vld [vmem:[%s451 + $0x10] sm:$0xff]
          %v1198 = vld [vmem:[%s451 + $0x18] sm:$0xff]
          %v1199 = vld [vmem:[%s451 + $0x20] sm:$0xff]
          %v1200 = vld [vmem:[%s451 + $0x28] sm:$0xff]
          %v1201 = vld [vmem:[%s451 + $0x30] sm:$0xff]
          %v1202 = vld [vmem:[%s451 + $0x38] sm:$0xff]
          %v1203 = vld [vmem:[%s451 + $0x40] sm:$0xff]
          %v1204 = vld [vmem:[%s451 + $0x48] sm:$0xff]
          %v1205 = vld [vmem:[%s451 + $0x50] sm:$0xff]
          %v1206 = vld [vmem:[%s451 + $0x58] sm:$0xff]
          %v1207 = vld [vmem:[%s451 + $0x60] sm:$0xff]
          %v1208 = vld [vmem:[%s451 + $0x68] sm:$0xff]
          %v1209 = vld [vmem:[%s451 + $0x70] sm:$0xff]
          %v1210 = vld [vmem:[%s451 + $0x78] sm:$0xff]
          %v1211 = vld [vmem:[%s451 + $0x80] sm:$0xff]
          %v1212 = vld [vmem:[%s451 + $0x88] sm:$0xff]
          %v1213 = vld [vmem:[%s451 + $0x90] sm:$0xff]
          %v1214 = vld [vmem:[%s451 + $0x98] sm:$0xff]
          %v1215 = vld [vmem:[%s451 + $0xa0] sm:$0xff]
          %v1216 = vld [vmem:[%s451 + $0xa8] sm:$0xff]
          %v1217 = vld [vmem:[%s451 + $0xb0] sm:$0xff]
          %v1218 = vld [vmem:[%s451 + $0xb8] sm:$0xff]
          %v1219 = vld [vmem:[%s451 + $0xc0] sm:$0xff]
          %v1220 = vld [vmem:[%s451 + $0xc8] sm:$0xff]
          %v1221 = vld [vmem:[%s451 + $0xd0] sm:$0xff]
          %v1222 = vld [vmem:[%s451 + $0xd8] sm:$0xff]
          %v1223 = vld [vmem:[%s451 + $0xe0] sm:$0xff]
          %v1224 = vld [vmem:[%s451 + $0xe8] sm:$0xff]
          %v1225 = vld [vmem:[%s451 + $0xf0] sm:$0xff]
          %v1226 = vld [vmem:[%s451 + $0xf8] sm:$0xff]
          %v1227 = vld [vmem:[#allocation3] sm:$0x1]
          %v1229 = vperm.slane %v1227, 0
          %1230 = vset.pattern.permute.xlu0 0
          %1231 = vperm.xlu0 %1230, %v1229
          %v1232 = vpop.permute.xlu0 %1231
          %v1234 = vmul.f32 %v1232, %v1099
          %v1235 = vmul.f32 %v1232, %v1100
          %v1236 = vmul.f32 %v1232, %v1101
          %v1237 = vmul.f32 %v1232, %v1102
          %v1238 = vmul.f32 %v1232, %v1103
          %v1239 = vmul.f32 %v1232, %v1104
          %v1240 = vmul.f32 %v1232, %v1105
          %v1241 = vmul.f32 %v1232, %v1106
          %v1242 = vmul.f32 %v1232, %v1107
          %v1243 = vmul.f32 %v1232, %v1108
          %v1244 = vmul.f32 %v1232, %v1109
          %v1245 = vmul.f32 %v1232, %v1110
          %v1246 = vmul.f32 %v1232, %v1111
          %v1247 = vmul.f32 %v1232, %v1112
          %v1248 = vmul.f32 %v1232, %v1113
          %v1249 = vmul.f32 %v1232, %v1114
          %v1250 = vmul.f32 %v1232, %v1115
          %v1251 = vmul.f32 %v1232, %v1116
          %v1252 = vmul.f32 %v1232, %v1117
          %v1253 = vmul.f32 %v1232, %v1118
          %v1254 = vmul.f32 %v1232, %v1119
          %v1255 = vmul.f32 %v1232, %v1120
          %v1256 = vmul.f32 %v1232, %v1121
          %v1257 = vmul.f32 %v1232, %v1122
          %v1258 = vmul.f32 %v1232, %v1123
          %v1259 = vmul.f32 %v1232, %v1124
          %v1260 = vmul.f32 %v1232, %v1125
          %v1261 = vmul.f32 %v1232, %v1126
          %v1262 = vmul.f32 %v1232, %v1127
          %v1263 = vmul.f32 %v1232, %v1128
          %v1264 = vmul.f32 %v1232, %v1129
          %v1265 = vmul.f32 %v1232, %v1130
          %v1266 = vadd.f32 %v1195, %v1234
          %v1267 = vadd.f32 %v1196, %v1235
          %v1268 = vadd.f32 %v1197, %v1236
          %v1269 = vadd.f32 %v1198, %v1237
          %v1270 = vadd.f32 %v1199, %v1238
          %v1271 = vadd.f32 %v1200, %v1239
          %v1272 = vadd.f32 %v1201, %v1240
          %v1273 = vadd.f32 %v1202, %v1241
          %v1274 = vadd.f32 %v1203, %v1242
          %v1275 = vadd.f32 %v1204, %v1243
          %v1276 = vadd.f32 %v1205, %v1244
          %v1277 = vadd.f32 %v1206, %v1245
          %v1278 = vadd.f32 %v1207, %v1246
          %v1279 = vadd.f32 %v1208, %v1247
          %v1280 = vadd.f32 %v1209, %v1248
          %v1281 = vadd.f32 %v1210, %v1249
          %v1282 = vadd.f32 %v1211, %v1250
          %v1283 = vadd.f32 %v1212, %v1251
          %v1284 = vadd.f32 %v1213, %v1252
          %v1285 = vadd.f32 %v1214, %v1253
          %v1286 = vadd.f32 %v1215, %v1254
          %v1287 = vadd.f32 %v1216, %v1255
          %v1288 = vadd.f32 %v1217, %v1256
          %v1289 = vadd.f32 %v1218, %v1257
          %v1290 = vadd.f32 %v1219, %v1258
          %v1291 = vadd.f32 %v1220, %v1259
          %v1292 = vadd.f32 %v1221, %v1260
          %v1293 = vadd.f32 %v1222, %v1261
          %v1294 = vadd.f32 %v1223, %v1262
          %v1295 = vadd.f32 %v1224, %v1263
          %v1296 = vadd.f32 %v1225, %v1264
          %v1297 = vadd.f32 %v1226, %v1265
          %1298 = vst [vmem:[%s463] sm:$0xff] %v1266
          %1299 = vst [vmem:[%s463 + $0x8] sm:$0xff] %v1267
          %1300 = vst [vmem:[%s463 + $0x10] sm:$0xff] %v1268
          %1301 = vst [vmem:[%s463 + $0x18] sm:$0xff] %v1269
          %1302 = vst [vmem:[%s463 + $0x20] sm:$0xff] %v1270
          %1303 = vst [vmem:[%s463 + $0x28] sm:$0xff] %v1271
          %1304 = vst [vmem:[%s463 + $0x30] sm:$0xff] %v1272
          %1305 = vst [vmem:[%s463 + $0x38] sm:$0xff] %v1273
          %1306 = vst [vmem:[%s463 + $0x40] sm:$0xff] %v1274
          %1307 = vst [vmem:[%s463 + $0x48] sm:$0xff] %v1275
          %1308 = vst [vmem:[%s463 + $0x50] sm:$0xff] %v1276
          %1309 = vst [vmem:[%s463 + $0x58] sm:$0xff] %v1277
          %1310 = vst [vmem:[%s463 + $0x60] sm:$0xff] %v1278
          %1311 = vst [vmem:[%s463 + $0x68] sm:$0xff] %v1279
          %1312 = vst [vmem:[%s463 + $0x70] sm:$0xff] %v1280
          %1313 = vst [vmem:[%s463 + $0x78] sm:$0xff] %v1281
          %1314 = vst [vmem:[%s463 + $0x80] sm:$0xff] %v1282
          %1315 = vst [vmem:[%s463 + $0x88] sm:$0xff] %v1283
          %1316 = vst [vmem:[%s463 + $0x90] sm:$0xff] %v1284
          %1317 = vst [vmem:[%s463 + $0x98] sm:$0xff] %v1285
          %1318 = vst [vmem:[%s463 + $0xa0] sm:$0xff] %v1286
          %1319 = vst [vmem:[%s463 + $0xa8] sm:$0xff] %v1287
          %1320 = vst [vmem:[%s463 + $0xb0] sm:$0xff] %v1288
          %1321 = vst [vmem:[%s463 + $0xb8] sm:$0xff] %v1289
          %1322 = vst [vmem:[%s463 + $0xc0] sm:$0xff] %v1290
          %1323 = vst [vmem:[%s463 + $0xc8] sm:$0xff] %v1291
          %1324 = vst [vmem:[%s463 + $0xd0] sm:$0xff] %v1292
          %1325 = vst [vmem:[%s463 + $0xd8] sm:$0xff] %v1293
          %1326 = vst [vmem:[%s463 + $0xe0] sm:$0xff] %v1294
          %1327 = vst [vmem:[%s463 + $0xe8] sm:$0xff] %v1295
          %1328 = vst [vmem:[%s463 + $0xf0] sm:$0xff] %v1296
          %1329 = vst [vmem:[%s463 + $0xf8] sm:$0xff] %v1297
        $region82: #{gprgnn_forward.7} parent=69 // pred_fallthru
          _
        %s1330 = smul.u32 32, %s23
        %p1331 = scmp.lt.s32.totalorder %s1330, 63
        %s1332 = scalar_select %p1331, %s1330, 63
        %s1333 = smul.addr %s1332, 4
        %s1334 = scalar_lea.vmem %s4, %s1333
        %s1335 = smul.u32 32, %s23
        %p1336 = scmp.lt.s32.totalorder %s1335, 63
        %s1337 = scalar_select %p1336, %s1335, 63
        %s1338 = smul.addr %s1337, 8
        %s1339 = scalar_lea.vmem %s5, %s1338
        // Predicated region
        $region83: #{gprgnn_forward.7} parent=69 // pred_check
          %p1340 = pneg %p150
        $region84: #{gprgnn_forward.7} parent=69 // pred_check_branch
          %1342 = sbr.rel (%p1340) target = $region86
        $region85: #{gprgnn_forward.7} parent=69 // pred_region
          %s1343 = smul.u32 32, %s23
        $region86: #{gprgnn_forward.7} parent=69 // pred_fallthru
          _
        // Predicated region
        $region87: #{gprgnn_forward.7} parent=69 // pred_check
          %p1344 = pneg %p176
        $region88: #{gprgnn_forward.7} parent=69 // pred_check_branch
          %1346 = sbr.rel (%p1344) target = $region90
        $region89: #{gprgnn_forward.7} parent=69 // pred_region
          %s1347 = smul.u32 32, %s23
        $region90: #{gprgnn_forward.7} parent=69 // pred_fallthru
          _
      $region70: #{gprgnn_forward.7} parent=5 // pred_fallthru
        _
      %p1348 = scmp.le.s32.totalorder 2, %s14
      // Predicated region
      $region91: #{gprgnn_forward.7} parent=5 // pred_check
        %p1349 = pneg %p1348
      $region92: #{gprgnn_forward.7} parent=5 // pred_check_branch
        %1351 = sbr.rel (%p1349) target = $region94
      $region93: #{gprgnn_forward.7} parent=5 // pred_region
        %s1352 = ssub.s32 %s14, 2
        // Predicated region
        $region95: #{gprgnn_forward.7} parent=93 // pred_check
          %p1353 = pneg %p156
        $region96: #{gprgnn_forward.7} parent=93 // pred_check_branch
          %1355 = sbr.rel (%p1353) target = $region98
        $region97: #{gprgnn_forward.7} parent=93 // pred_region
          %s1356 = smul.u32 32, %s25
          %p1357 = scmp.lt.s32.totalorder %s1356, 63
          %s1358 = scalar_select %p1357, %s1356, 63
          %s1359 = smul.addr %s1358, 4
          %s1360 = scalar_lea.vmem %s4, %s1359
        $region98: #{gprgnn_forward.7} parent=93 // pred_fallthru
          _
        // Predicated region
        $region99: #{gprgnn_forward.7} parent=93 // pred_check
          %p1361 = pneg %p182
        $region100: #{gprgnn_forward.7} parent=93 // pred_check_branch
          %1363 = sbr.rel (%p1361) target = $region102
        $region101: #{gprgnn_forward.7} parent=93 // pred_region
          %s1364 = smul.u32 32, %s25
          %p1365 = scmp.lt.s32.totalorder %s1364, 63
          %s1366 = scalar_select %p1365, %s1364, 63
          %s1367 = smul.addr %s1366, 8
          %s1368 = scalar_lea.vmem %s5, %s1367
        $region102: #{gprgnn_forward.7} parent=93 // pred_fallthru
          _
      $region94: #{gprgnn_forward.7} parent=5 // pred_fallthru
        _
    $region6: #{gprgnn_forward.7} parent=1 // loop_footer
      %s18 = sadd.s32 1, %s14
    $region7: #{gprgnn_forward.7} parent=1 // loop_footer_branch
      %13 = sbr.rel target = $region3
    $region8: #{gprgnn_forward.7} parent=1 // loop_exit
      _

// kernel: gprgnn_forward.6
$region0: #{gprgnn_forward.6}
  #allocation0 [shape = 'u32[]', space=smem, size = 0x4, offset = 0x4, fixed_abs, tag = 'smem constant byte address 0x4 - core index']
  #allocation1 [shape = 'u32[72,128]{1,0:T(1,128)}', space=vmem, size = 0x9000, scoped, tag = 'internal scratch']
  #allocation2 [shape = 'f32[1,1]{1,0:T(1,128)S(1)}', space=vmem, size = 0x200, scoped, tag = 'scoped memory for gprgnn_forward.6']
  %s0 = inlined_call_operand.vmem [shape: bf16[512,128], index: 0, kind: input, shape index: {}]
  %s1 = inlined_call_operand.vmem [shape: bf16[128,128], index: 1, kind: input, shape index: {}]
  %s2 = inlined_call_operand.vmem [shape: f32[1,128], index: 2, kind: input, shape index: {}]
  %s3 = inlined_call_operand.vmem [shape: bf16[128,128], index: 3, kind: input, shape index: {}]
  %s4 = inlined_call_operand.vmem [shape: f32[1,128], index: 4, kind: input, shape index: {}]
  %s5 = inlined_call_operand.<no memory space> [shape: f32[1,1], index: 5, kind: input, shape index: {}]
  %s6 = inlined_call_operand.vmem [shape: bf16[512,128], index: 6, kind: output, shape index: {0}]
  %s7 = inlined_call_operand.vmem [shape: f32[512,128], index: 7, kind: output, shape index: {1}]
  %8 = xla_tuple %s6, %s7
  %s9 = sld [smem:[#allocation0]]
  $region65: #{gprgnn_forward.6} parent=0
    _
  %s11 = ssub.s32 1, %s9
  %s12 = scalar_select 0, %s11, %s9
  %v13 = vstv %s5
  %14 = vst [vmem:[#allocation2] sm:$0x1] %v13
  loop: start=0, step=1, limit=4
  $region2: #{gprgnn_forward.6} parent=0 // loop_pre_header
    _
  $region3: #{gprgnn_forward.6} parent=0 // loop_header
    %s16 = sphi 0, %s20
    %p17 = scmp.ge.s32.totalorder %s16, 4
    %s26 = sphi 0, %s28
    %s29 = sphi 0, %s26
    %s30 = sphi 0, %s29
    %s46 = sphi 0, %s30
    %s50 = sphi 0, %s50
    %s52 = sphi 0, %s50
    %s53 = sphi 0, %s52
    %s67 = sphi 0, %s53
    %s71 = sphi 0, %s71
    %s73 = sphi 0, %s71
    %s74 = sphi 0, %s73
    %s88 = sphi 0, %s74
    %s92 = sphi 0, %s92
    %s94 = sphi 0, %s92
    %s95 = sphi 0, %s94
    %s109 = sphi 0, %s95
    %s113 = sphi 0, %s113
    %s115 = sphi 0, %s113
    %s116 = sphi 0, %s115
    %s130 = sphi 0, %s116
    %s134 = sphi 0, %s134
    %s136 = sphi 0, %s134
    %s137 = sphi 0, %s136
    %s151 = sphi 0, %s137
    %s157 = sphi 0, %s159
    %s160 = sphi 0, %s157
    %s161 = sphi 0, %s160
    %s177 = sphi 0, %s161
    %s183 = sphi 0, %s185
    %s186 = sphi 0, %s183
    %s187 = sphi 0, %s186
    %s203 = sphi 0, %s187
  $region4: #{gprgnn_forward.6} parent=0 // loop_header_branch
    %19 = sbr.rel (%p17) target = $region8
  $region5: #{gprgnn_forward.6} parent=0 // loop_body
    %s21 = ssub.s32 %s16, 1
    %s22 = ssub.s32 %s16, 2
    %s23 = sadd.s32 %s16, 1
    %s24 = ssub.s32 %s16, %s23
    %p25 = scmp.eq.s32.totalorder %s24, 0
    %s27 = sadd.s32 %s26, 1
    %s28 = scalar_select %p25, %s26, %s27
    %p31 = pneg %p25
    %p32 = scmp.eq.s32.totalorder %s16, 1
    %p33 = por %p31, %p32
    %p34 = scmp.ne.s32.totalorder %s26, %s29
    %p35 = scmp.eq.s32.totalorder %s16, 0
    %p36 = por %p34, %p35
    %p37 = scmp.ne.s32.totalorder %s26, %s29
    %p38 = scmp.eq.s32.totalorder %s21, 1
    %p39 = por %p37, %p38
    %p40 = scmp.ne.s32.totalorder %s29, %s30
    %p41 = scmp.eq.s32.totalorder %s21, 0
    %p42 = por %p40, %p41
    %p43 = scmp.ne.s32.totalorder %s29, %s30
    %p44 = scmp.eq.s32.totalorder %s22, 1
    %p45 = por %p43, %p44
    %p47 = scmp.ne.s32.totalorder %s30, %s46
    %p48 = scmp.eq.s32.totalorder %s22, 0
    %p49 = por %p47, %p48
    %s51 = sadd.s32 %s50, 1
    %p54 = scmp.eq.s32.totalorder %s16, 1
    %p55 = scmp.ne.s32.totalorder %s50, %s52
    %p56 = scmp.eq.s32.totalorder %s16, 0
    %p57 = por %p55, %p56
    %p58 = scmp.ne.s32.totalorder %s50, %s52
    %p59 = scmp.eq.s32.totalorder %s21, 1
    %p60 = por %p58, %p59
    %p61 = scmp.ne.s32.totalorder %s52, %s53
    %p62 = scmp.eq.s32.totalorder %s21, 0
    %p63 = por %p61, %p62
    %p64 = scmp.ne.s32.totalorder %s52, %s53
    %p65 = scmp.eq.s32.totalorder %s22, 1
    %p66 = por %p64, %p65
    %p68 = scmp.ne.s32.totalorder %s53, %s67
    %p69 = scmp.eq.s32.totalorder %s22, 0
    %p70 = por %p68, %p69
    %s72 = sadd.s32 %s71, 1
    %p75 = scmp.eq.s32.totalorder %s16, 1
    %p76 = scmp.ne.s32.totalorder %s71, %s73
    %p77 = scmp.eq.s32.totalorder %s16, 0
    %p78 = por %p76, %p77
    %p79 = scmp.ne.s32.totalorder %s71, %s73
    %p80 = scmp.eq.s32.totalorder %s21, 1
    %p81 = por %p79, %p80
    %p82 = scmp.ne.s32.totalorder %s73, %s74
    %p83 = scmp.eq.s32.totalorder %s21, 0
    %p84 = por %p82, %p83
    %p85 = scmp.ne.s32.totalorder %s73, %s74
    %p86 = scmp.eq.s32.totalorder %s22, 1
    %p87 = por %p85, %p86
    %p89 = scmp.ne.s32.totalorder %s74, %s88
    %p90 = scmp.eq.s32.totalorder %s22, 0
    %p91 = por %p89, %p90
    %s93 = sadd.s32 %s92, 1
    %p96 = scmp.eq.s32.totalorder %s16, 1
    %p97 = scmp.ne.s32.totalorder %s92, %s94
    %p98 = scmp.eq.s32.totalorder %s16, 0
    %p99 = por %p97, %p98
    %p100 = scmp.ne.s32.totalorder %s92, %s94
    %p101 = scmp.eq.s32.totalorder %s21, 1
    %p102 = por %p100, %p101
    %p103 = scmp.ne.s32.totalorder %s94, %s95
    %p104 = scmp.eq.s32.totalorder %s21, 0
    %p105 = por %p103, %p104
    %p106 = scmp.ne.s32.totalorder %s94, %s95
    %p107 = scmp.eq.s32.totalorder %s22, 1
    %p108 = por %p106, %p107
    %p110 = scmp.ne.s32.totalorder %s95, %s109
    %p111 = scmp.eq.s32.totalorder %s22, 0
    %p112 = por %p110, %p111
    %s114 = sadd.s32 %s113, 1
    %p117 = scmp.eq.s32.totalorder %s16, 1
    %p118 = scmp.ne.s32.totalorder %s113, %s115
    %p119 = scmp.eq.s32.totalorder %s16, 0
    %p120 = por %p118, %p119
    %p121 = scmp.ne.s32.totalorder %s113, %s115
    %p122 = scmp.eq.s32.totalorder %s21, 1
    %p123 = por %p121, %p122
    %p124 = scmp.ne.s32.totalorder %s115, %s116
    %p125 = scmp.eq.s32.totalorder %s21, 0
    %p126 = por %p124, %p125
    %p127 = scmp.ne.s32.totalorder %s115, %s116
    %p128 = scmp.eq.s32.totalorder %s22, 1
    %p129 = por %p127, %p128
    %p131 = scmp.ne.s32.totalorder %s116, %s130
    %p132 = scmp.eq.s32.totalorder %s22, 0
    %p133 = por %p131, %p132
    %s135 = sadd.s32 %s134, 1
    %p138 = scmp.eq.s32.totalorder %s16, 1
    %p139 = scmp.ne.s32.totalorder %s134, %s136
    %p140 = scmp.eq.s32.totalorder %s16, 0
    %p141 = por %p139, %p140
    %p142 = scmp.ne.s32.totalorder %s134, %s136
    %p143 = scmp.eq.s32.totalorder %s21, 1
    %p144 = por %p142, %p143
    %p145 = scmp.ne.s32.totalorder %s136, %s137
    %p146 = scmp.eq.s32.totalorder %s21, 0
    %p147 = por %p145, %p146
    %p148 = scmp.ne.s32.totalorder %s136, %s137
    %p149 = scmp.eq.s32.totalorder %s22, 1
    %p150 = por %p148, %p149
    %p152 = scmp.ne.s32.totalorder %s137, %s151
    %p153 = scmp.eq.s32.totalorder %s22, 0
    %p154 = por %p152, %p153
    %s155 = ssub.s32 %s16, %s23
    %p156 = scmp.eq.s32.totalorder %s155, 0
    %s158 = sadd.s32 %s157, 1
    %s159 = scalar_select %p156, %s157, %s158
    %p162 = pneg %p156
    %p163 = scmp.eq.s32.totalorder %s16, 1
    %p164 = por %p162, %p163
    %p165 = scmp.ne.s32.totalorder %s157, %s160
    %p166 = scmp.eq.s32.totalorder %s16, 0
    %p167 = por %p165, %p166
    %p168 = scmp.ne.s32.totalorder %s157, %s160
    %p169 = scmp.eq.s32.totalorder %s21, 1
    %p170 = por %p168, %p169
    %p171 = scmp.ne.s32.totalorder %s160, %s161
    %p172 = scmp.eq.s32.totalorder %s21, 0
    %p173 = por %p171, %p172
    %p174 = scmp.ne.s32.totalorder %s160, %s161
    %p175 = scmp.eq.s32.totalorder %s22, 1
    %p176 = por %p174, %p175
    %p178 = scmp.ne.s32.totalorder %s161, %s177
    %p179 = scmp.eq.s32.totalorder %s22, 0
    %p180 = por %p178, %p179
    %s181 = ssub.s32 %s16, %s23
    %p182 = scmp.eq.s32.totalorder %s181, 0
    %s184 = sadd.s32 %s183, 1
    %s185 = scalar_select %p182, %s183, %s184
    %p188 = pneg %p182
    %p189 = scmp.eq.s32.totalorder %s16, 1
    %p190 = por %p188, %p189
    %p191 = scmp.ne.s32.totalorder %s183, %s186
    %p192 = scmp.eq.s32.totalorder %s16, 0
    %p193 = por %p191, %p192
    %p194 = scmp.ne.s32.totalorder %s183, %s186
    %p195 = scmp.eq.s32.totalorder %s21, 1
    %p196 = por %p194, %p195
    %p197 = scmp.ne.s32.totalorder %s186, %s187
    %p198 = scmp.eq.s32.totalorder %s21, 0
    %p199 = por %p197, %p198
    %p200 = scmp.ne.s32.totalorder %s186, %s187
    %p201 = scmp.eq.s32.totalorder %s22, 1
    %p202 = por %p200, %p201
    %p204 = scmp.ne.s32.totalorder %s187, %s203
    %p205 = scmp.eq.s32.totalorder %s22, 0
    %p206 = por %p204, %p205
    %p207 = scmp.le.s32.totalorder 1, %s16
    %p208 = scmp.lt.s32.totalorder %s16, 3
    %p209 = pnand %p207, %p208
    %p210 = pneg %p209
    // Predicated region
    $region9: #{gprgnn_forward.6} parent=5 // pred_check
      _
    $region10: #{gprgnn_forward.6} parent=5 // pred_check_branch
      %212 = sbr.rel (%p209) target = $region12
    $region11: #{gprgnn_forward.6} parent=5 // pred_region
      %s213 = ssub.s32 %s16, 1
      // Predicated region
      $region13: #{gprgnn_forward.6} parent=11 // pred_check
        %p214 = pneg %p63
      $region14: #{gprgnn_forward.6} parent=11 // pred_check_branch
        %216 = sbr.rel (%p214) target = $region16
      $region15: #{gprgnn_forward.6} parent=11 // pred_region
        _
      $region16: #{gprgnn_forward.6} parent=11 // pred_fallthru
        _
      // Predicated region
      $region17: #{gprgnn_forward.6} parent=11 // pred_check
        %p217 = pneg %p84
      $region18: #{gprgnn_forward.6} parent=11 // pred_check_branch
        %219 = sbr.rel (%p217) target = $region20
      $region19: #{gprgnn_forward.6} parent=11 // pred_region
        _
      $region20: #{gprgnn_forward.6} parent=11 // pred_fallthru
        _
      // Predicated region
      $region21: #{gprgnn_forward.6} parent=11 // pred_check
        %p220 = pneg %p105
      $region22: #{gprgnn_forward.6} parent=11 // pred_check_branch
        %222 = sbr.rel (%p220) target = $region24
      $region23: #{gprgnn_forward.6} parent=11 // pred_region
        _
      $region24: #{gprgnn_forward.6} parent=11 // pred_fallthru
        _
      // Predicated region
      $region25: #{gprgnn_forward.6} parent=11 // pred_check
        %p223 = pneg %p126
      $region26: #{gprgnn_forward.6} parent=11 // pred_check_branch
        %225 = sbr.rel (%p223) target = $region28
      $region27: #{gprgnn_forward.6} parent=11 // pred_region
        _
      $region28: #{gprgnn_forward.6} parent=11 // pred_fallthru
        _
      // Predicated region
      $region29: #{gprgnn_forward.6} parent=11 // pred_check
        %p226 = pneg %p147
      $region30: #{gprgnn_forward.6} parent=11 // pred_check_branch
        %228 = sbr.rel (%p226) target = $region32
      $region31: #{gprgnn_forward.6} parent=11 // pred_region
        _
      $region32: #{gprgnn_forward.6} parent=11 // pred_fallthru
        _
    $region12: #{gprgnn_forward.6} parent=5 // pred_fallthru
      _
    %p229 = scmp.lt.s32.totalorder %s16, 2
    // Predicated region
    $region33: #{gprgnn_forward.6} parent=5 // pred_check
      %p230 = pneg %p229
    $region34: #{gprgnn_forward.6} parent=5 // pred_check_branch
      %232 = sbr.rel (%p230) target = $region36
    $region35: #{gprgnn_forward.6} parent=5 // pred_region
      // Predicated region
      $region37: #{gprgnn_forward.6} parent=35 // pred_check
        %p233 = pneg %p36
      $region38: #{gprgnn_forward.6} parent=35 // pred_check_branch
        %235 = sbr.rel (%p233) target = $region40
      $region39: #{gprgnn_forward.6} parent=35 // pred_region
        %s236 = smul.u32 32, %s16
        %p237 = scmp.lt.s32.totalorder %s236, 63
        %s238 = scalar_select %p237, %s236, 63
        %s239 = smul.addr %s238, 4
        %s240 = scalar_lea.vmem %s0, %s239
        %s241 = smul.u32 32, %s16
      $region40: #{gprgnn_forward.6} parent=35 // pred_fallthru
        _
    $region36: #{gprgnn_forward.6} parent=5 // pred_fallthru
      _
    %p242 = scmp.le.s32.totalorder 1, %s16
    %p243 = scmp.lt.s32.totalorder %s16, 3
    %p244 = pnand %p242, %p243
    %p245 = pneg %p244
    // Predicated region
    $region41: #{gprgnn_forward.6} parent=5 // pred_check
      _
    $region42: #{gprgnn_forward.6} parent=5 // pred_check_branch
      %247 = sbr.rel (%p244) target = $region44
    $region43: #{gprgnn_forward.6} parent=5 // pred_region
      %s248 = ssub.s32 %s16, 1
      %s249 = smul.u32 32, %s21
      %p250 = scmp.lt.s32.totalorder %s249, 63
      %s251 = scalar_select %p250, %s249, 63
      %s252 = smul.addr %s251, 4
      %s253 = scalar_lea.vmem %s0, %s252
      %p254 = pneg %p42
      %p255 = pneg %p39
      %p256 = pneg %p63
      %p257 = pneg %p60
      %p258 = pneg %p84
      %p259 = pneg %p81
      %p260 = pneg %p105
      %p261 = pneg %p102
      %p262 = pneg %p126
      %p263 = pneg %p123
      %p264 = pneg %p147
      %p265 = pneg %p144
      %p266 = pneg %p173
      %p267 = pneg %p170
      %s268 = smul.u32 32, %s21
      %p269 = scmp.lt.s32.totalorder %s268, 63
      %s270 = scalar_select %p269, %s268, 63
      %s271 = smul.addr %s270, 4
      %s272 = scalar_lea.vmem %s6, %s271
      %p273 = pneg %p199
      %p274 = pneg %p196
      %s275 = smul.u32 32, %s21
      %p276 = scmp.lt.s32.totalorder %s275, 63
      %s277 = scalar_select %p276, %s275, 63
      %s278 = smul.addr %s277, 8
      %s279 = scalar_lea.vmem %s7, %s278
      %s280 = smul.u32 32, %s21
      %p281 = scmp.lt.s32.totalorder %s280, 63
      %s282 = scalar_select %p281, %s280, 63
      %s283 = smul.addr %s282, 4
      %s284 = scalar_lea.vmem %s0, %s283
      %s285 = smul.u32 32, %s21
      %s286 = smul.u32 32, %s21
      %p287 = scmp.lt.s32.totalorder %s286, 63
      %s288 = scalar_select %p287, %s286, 63
      %s289 = smul.addr %s288, 4
      %s290 = scalar_lea.vmem %s6, %s289
      %s291 = smul.u32 32, %s21
      %s292 = smul.u32 32, %s21
      %p293 = scmp.lt.s32.totalorder %s292, 63
      %s294 = scalar_select %p293, %s292, 63
      %s295 = smul.addr %s294, 8
      %s296 = scalar_lea.vmem %s7, %s295
      %s297 = smul.u32 32, %s21
      %v298 = vld [vmem:[%s284] sm:$0xf]
      %v299 = vld [vmem:[%s284 + $0x4] sm:$0xf]
      %v300 = vld [vmem:[%s284 + $0x8] sm:$0xf]
      %v301 = vld [vmem:[%s284 + $0xc] sm:$0xf]
      %v302 = vld [vmem:[%s284 + $0x10] sm:$0xf]
      %v303 = vld [vmem:[%s284 + $0x14] sm:$0xf]
      %v304 = vld [vmem:[%s284 + $0x18] sm:$0xf]
      %v305 = vld [vmem:[%s284 + $0x1c] sm:$0xf]
      %v306 = vld [vmem:[%s284 + $0x20] sm:$0xf]
      %v307 = vld [vmem:[%s284 + $0x24] sm:$0xf]
      %v308 = vld [vmem:[%s284 + $0x28] sm:$0xf]
      %v309 = vld [vmem:[%s284 + $0x2c] sm:$0xf]
      %v310 = vld [vmem:[%s284 + $0x30] sm:$0xf]
      %v311 = vld [vmem:[%s284 + $0x34] sm:$0xf]
      %v312 = vld [vmem:[%s284 + $0x38] sm:$0xf]
      %v313 = vld [vmem:[%s284 + $0x3c] sm:$0xf]
      %v314 = vld [vmem:[%s284 + $0x40] sm:$0xf]
      %v315 = vld [vmem:[%s284 + $0x44] sm:$0xf]
      %v316 = vld [vmem:[%s284 + $0x48] sm:$0xf]
      %v317 = vld [vmem:[%s284 + $0x4c] sm:$0xf]
      %v318 = vld [vmem:[%s284 + $0x50] sm:$0xf]
      %v319 = vld [vmem:[%s284 + $0x54] sm:$0xf]
      %v320 = vld [vmem:[%s284 + $0x58] sm:$0xf]
      %v321 = vld [vmem:[%s284 + $0x5c] sm:$0xf]
      %v322 = vld [vmem:[%s284 + $0x60] sm:$0xf]
      %v323 = vld [vmem:[%s284 + $0x64] sm:$0xf]
      %v324 = vld [vmem:[%s284 + $0x68] sm:$0xf]
      %v325 = vld [vmem:[%s284 + $0x6c] sm:$0xf]
      %v326 = vld [vmem:[%s284 + $0x70] sm:$0xf]
      %v327 = vld [vmem:[%s284 + $0x74] sm:$0xf]
      %v328 = vld [vmem:[%s284 + $0x78] sm:$0xf]
      %v329 = vld [vmem:[%s284 + $0x7c] sm:$0xf]
      %v330 = vld [vmem:[%s1] sm:$0xf]
      %v331 = vld [vmem:[%s1 + $0x4] sm:$0xf]
      %v332 = vld [vmem:[%s1 + $0x8] sm:$0xf]
      %v333 = vld [vmem:[%s1 + $0xc] sm:$0xf]
      %v334 = vld [vmem:[%s1 + $0x10] sm:$0xf]
      %v335 = vld [vmem:[%s1 + $0x14] sm:$0xf]
      %v336 = vld [vmem:[%s1 + $0x18] sm:$0xf]
      %v337 = vld [vmem:[%s1 + $0x1c] sm:$0xf]
      %v338 = vld [vmem:[%s1 + $0x20] sm:$0xf]
      %v339 = vld [vmem:[%s1 + $0x24] sm:$0xf]
      %v340 = vld [vmem:[%s1 + $0x28] sm:$0xf]
      %v341 = vld [vmem:[%s1 + $0x2c] sm:$0xf]
      %v342 = vld [vmem:[%s1 + $0x30] sm:$0xf]
      %v343 = vld [vmem:[%s1 + $0x34] sm:$0xf]
      %v344 = vld [vmem:[%s1 + $0x38] sm:$0xf]
      %v345 = vld [vmem:[%s1 + $0x3c] sm:$0xf]
      %v346 = vld [vmem:[%s2] sm:$0x1]
      %v348 = vperm.slane %v346, 0
      %v382 = vunpack.c.l.b16 %v298
      %v383 = vunpack.c.l.b16 %v299
      %v384 = vunpack.c.l.b16 %v300
      %v385 = vunpack.c.l.b16 %v301
      %v386 = vunpack.c.l.b16 %v302
      %v387 = vunpack.c.l.b16 %v303
      %v388 = vunpack.c.l.b16 %v304
      %v389 = vunpack.c.l.b16 %v305
      %v390 = vunpack.c.l.b16 %v306
      %v391 = vunpack.c.l.b16 %v307
      %v392 = vunpack.c.l.b16 %v308
      %v393 = vunpack.c.l.b16 %v309
      %v394 = vunpack.c.l.b16 %v310
      %v395 = vunpack.c.l.b16 %v311
      %v396 = vunpack.c.l.b16 %v312
      %v397 = vunpack.c.l.b16 %v313
      %v398 = vunpack.c.l.b16 %v314
      %v399 = vunpack.c.l.b16 %v315
      %v400 = vunpack.c.l.b16 %v316
      %v401 = vunpack.c.l.b16 %v317
      %v402 = vunpack.c.l.b16 %v318
      %v403 = vunpack.c.l.b16 %v319
      %v404 = vunpack.c.l.b16 %v320
      %v405 = vunpack.c.l.b16 %v321
      %v406 = vunpack.c.l.b16 %v322
      %v407 = vunpack.c.l.b16 %v323
      %v408 = vunpack.c.l.b16 %v324
      %v409 = vunpack.c.l.b16 %v325
      %v410 = vunpack.c.l.b16 %v326
      %v411 = vunpack.c.l.b16 %v327
      %v412 = vunpack.c.l.b16 %v328
      %v413 = vunpack.c.l.b16 %v329
      %v414 = vpack.c.b16 %v383, %v382
      %v415 = vpack.c.b16 %v385, %v384
      %v416 = vpack.c.b16 %v387, %v386
      %v417 = vpack.c.b16 %v389, %v388
      %v418 = vpack.c.b16 %v391, %v390
      %v419 = vpack.c.b16 %v393, %v392
      %v420 = vpack.c.b16 %v395, %v394
      %v421 = vpack.c.b16 %v397, %v396
      %v422 = vpack.c.b16 %v399, %v398
      %v423 = vpack.c.b16 %v401, %v400
      %v424 = vpack.c.b16 %v403, %v402
      %v425 = vpack.c.b16 %v405, %v404
      %v426 = vpack.c.b16 %v407, %v406
      %v427 = vpack.c.b16 %v409, %v408
      %v428 = vpack.c.b16 %v411, %v410
      %v429 = vpack.c.b16 %v413, %v412
      %v462 = vunpack.c.l.b16 %v330
      %v463 = vunpack.c.l.b16 %v331
      %v464 = vunpack.c.l.b16 %v332
      %v465 = vunpack.c.l.b16 %v333
      %v466 = vunpack.c.l.b16 %v334
      %v467 = vunpack.c.l.b16 %v335
      %v468 = vunpack.c.l.b16 %v336
      %v469 = vunpack.c.l.b16 %v337
      %v470 = vunpack.c.l.b16 %v338
      %v471 = vunpack.c.l.b16 %v339
      %v472 = vunpack.c.l.b16 %v340
      %v473 = vunpack.c.l.b16 %v341
      %v474 = vunpack.c.l.b16 %v342
      %v475 = vunpack.c.l.b16 %v343
      %v476 = vunpack.c.l.b16 %v344
      %v477 = vunpack.c.l.b16 %v345
      %v478 = vpack.c.b16 %v463, %v462
      %v479 = vpack.c.b16 %v465, %v464
      %v480 = vpack.c.b16 %v467, %v466
      %v481 = vpack.c.b16 %v469, %v468
      %v482 = vpack.c.b16 %v471, %v470
      %v483 = vpack.c.b16 %v473, %v472
      %v484 = vpack.c.b16 %v475, %v474
      %v485 = vpack.c.b16 %v477, %v476
      %494 = vmatpush.bf16.msra.mxu0 %v485
      %495 = vmatpush.bf16.msra.mxu0 %v484
      %496 = vmatpush.bf16.msra.mxu0 %v483
      %497 = vmatpush.bf16.msra.mxu0 %v482
      %498 = vmatpush.bf16.msra.mxu0 %v481
      %499 = vmatpush.bf16.msra.mxu0 %v480
      %500 = vmatpush.bf16.msra.mxu0 %v479
      %501 = vmatpush.bf16.msra.mxu0 %v478
      %502 = vmatmul.bf16.gmra.mxu0 %v414
      %v503 = vpop.f32.mrf.mxu0
      %v504 = vadd.f32 %v348, %v503
      %v505 = vpop.f32.mrf.mxu0
      %v506 = vadd.f32 %v348, %v505
      %507 = vmatmul.bf16.gmra.mxu0 %v415
      %v508 = vpop.f32.mrf.mxu0
      %v509 = vadd.f32 %v348, %v508
      %v510 = vpop.f32.mrf.mxu0
      %v511 = vadd.f32 %v348, %v510
      %512 = vmatmul.bf16.gmra.mxu0 %v416
      %v513 = vpop.f32.mrf.mxu0
      %v514 = vadd.f32 %v348, %v513
      %v515 = vpop.f32.mrf.mxu0
      %v516 = vadd.f32 %v348, %v515
      %517 = vmatmul.bf16.gmra.mxu0 %v417
      %v518 = vpop.f32.mrf.mxu0
      %v519 = vadd.f32 %v348, %v518
      %v520 = vpop.f32.mrf.mxu0
      %v521 = vadd.f32 %v348, %v520
      %522 = vmatmul.bf16.gmra.mxu0 %v418
      %v523 = vpop.f32.mrf.mxu0
      %v524 = vadd.f32 %v348, %v523
      %v525 = vpop.f32.mrf.mxu0
      %v526 = vadd.f32 %v348, %v525
      %527 = vmatmul.bf16.gmra.mxu0 %v419
      %v528 = vpop.f32.mrf.mxu0
      %v529 = vadd.f32 %v348, %v528
      %v530 = vpop.f32.mrf.mxu0
      %v531 = vadd.f32 %v348, %v530
      %532 = vmatmul.bf16.gmra.mxu0 %v420
      %v533 = vpop.f32.mrf.mxu0
      %v534 = vadd.f32 %v348, %v533
      %v535 = vpop.f32.mrf.mxu0
      %v536 = vadd.f32 %v348, %v535
      %537 = vmatmul.bf16.gmra.mxu0 %v421
      %v538 = vpop.f32.mrf.mxu0
      %v539 = vadd.f32 %v348, %v538
      %v540 = vpop.f32.mrf.mxu0
      %v541 = vadd.f32 %v348, %v540
      %542 = vmatmul.bf16.gmra.mxu0 %v422
      %v543 = vpop.f32.mrf.mxu0
      %v544 = vadd.f32 %v348, %v543
      %v545 = vpop.f32.mrf.mxu0
      %v546 = vadd.f32 %v348, %v545
      %547 = vmatmul.bf16.gmra.mxu0 %v423
      %v548 = vpop.f32.mrf.mxu0
      %v549 = vadd.f32 %v348, %v548
      %v550 = vpop.f32.mrf.mxu0
      %v551 = vadd.f32 %v348, %v550
      %552 = vmatmul.bf16.gmra.mxu0 %v424
      %v553 = vpop.f32.mrf.mxu0
      %v554 = vadd.f32 %v348, %v553
      %v555 = vpop.f32.mrf.mxu0
      %v556 = vadd.f32 %v348, %v555
      %557 = vmatmul.bf16.gmra.mxu0 %v425
      %v558 = vpop.f32.mrf.mxu0
      %v559 = vadd.f32 %v348, %v558
      %v560 = vpop.f32.mrf.mxu0
      %v561 = vadd.f32 %v348, %v560
      %562 = vmatmul.bf16.gmra.mxu0 %v426
      %v563 = vpop.f32.mrf.mxu0
      %v564 = vadd.f32 %v348, %v563
      %v565 = vpop.f32.mrf.mxu0
      %v566 = vadd.f32 %v348, %v565
      %567 = vmatmul.bf16.gmra.mxu0 %v427
      %v568 = vpop.f32.mrf.mxu0
      %v569 = vadd.f32 %v348, %v568
      %v570 = vpop.f32.mrf.mxu0
      %v571 = vadd.f32 %v348, %v570
      %572 = vmatmul.bf16.gmra.mxu0 %v428
      %v573 = vpop.f32.mrf.mxu0
      %v574 = vadd.f32 %v348, %v573
      %v575 = vpop.f32.mrf.mxu0
      %v576 = vadd.f32 %v348, %v575
      %577 = vmatmul.bf16.gmra.mxu0 %v429
      %v578 = vpop.f32.mrf.mxu0
      %v579 = vadd.f32 %v348, %v578
      %v580 = vpop.f32.mrf.mxu0
      %v581 = vadd.f32 %v348, %v580
      %582 = vdwg.mxu0
      %v583 = vmax.f32 %v504, 0.0
      %v584 = vmax.f32 %v506, 0.0
      %v585 = vmax.f32 %v509, 0.0
      %v586 = vmax.f32 %v511, 0.0
      %v587 = vmax.f32 %v514, 0.0
      %v588 = vmax.f32 %v516, 0.0
      %v589 = vmax.f32 %v519, 0.0
      %v590 = vmax.f32 %v521, 0.0
      %v591 = vmax.f32 %v524, 0.0
      %v592 = vmax.f32 %v526, 0.0
      %v593 = vmax.f32 %v529, 0.0
      %v594 = vmax.f32 %v531, 0.0
      %v595 = vmax.f32 %v534, 0.0
      %v596 = vmax.f32 %v536, 0.0
      %v597 = vmax.f32 %v539, 0.0
      %v598 = vmax.f32 %v541, 0.0
      %v599 = vmax.f32 %v544, 0.0
      %v600 = vmax.f32 %v546, 0.0
      %v601 = vmax.f32 %v549, 0.0
      %v602 = vmax.f32 %v551, 0.0
      %v603 = vmax.f32 %v554, 0.0
      %v604 = vmax.f32 %v556, 0.0
      %v605 = vmax.f32 %v559, 0.0
      %v606 = vmax.f32 %v561, 0.0
      %v607 = vmax.f32 %v564, 0.0
      %v608 = vmax.f32 %v566, 0.0
      %v609 = vmax.f32 %v569, 0.0
      %v610 = vmax.f32 %v571, 0.0
      %v611 = vmax.f32 %v574, 0.0
      %v612 = vmax.f32 %v576, 0.0
      %v613 = vmax.f32 %v579, 0.0
      %v614 = vmax.f32 %v581, 0.0
      %v615 = vpack.c.bf16 %v584, %v583
      %v616 = vpack.c.bf16 %v586, %v585
      %v617 = vpack.c.bf16 %v588, %v587
      %v618 = vpack.c.bf16 %v590, %v589
      %v619 = vpack.c.bf16 %v592, %v591
      %v620 = vpack.c.bf16 %v594, %v593
      %v621 = vpack.c.bf16 %v596, %v595
      %v622 = vpack.c.bf16 %v598, %v597
      %v623 = vpack.c.bf16 %v600, %v599
      %v624 = vpack.c.bf16 %v602, %v601
      %v625 = vpack.c.bf16 %v604, %v603
      %v626 = vpack.c.bf16 %v606, %v605
      %v627 = vpack.c.bf16 %v608, %v607
      %v628 = vpack.c.bf16 %v610, %v609
      %v629 = vpack.c.bf16 %v612, %v611
      %v630 = vpack.c.bf16 %v614, %v613
      %v631 = vld [vmem:[%s3] sm:$0xf]
      %v632 = vld [vmem:[%s3 + $0x4] sm:$0xf]
      %v633 = vld [vmem:[%s3 + $0x8] sm:$0xf]
      %v634 = vld [vmem:[%s3 + $0xc] sm:$0xf]
      %v635 = vld [vmem:[%s3 + $0x10] sm:$0xf]
      %v636 = vld [vmem:[%s3 + $0x14] sm:$0xf]
      %v637 = vld [vmem:[%s3 + $0x18] sm:$0xf]
      %v638 = vld [vmem:[%s3 + $0x1c] sm:$0xf]
      %v639 = vld [vmem:[%s3 + $0x20] sm:$0xf]
      %v640 = vld [vmem:[%s3 + $0x24] sm:$0xf]
      %v641 = vld [vmem:[%s3 + $0x28] sm:$0xf]
      %v642 = vld [vmem:[%s3 + $0x2c] sm:$0xf]
      %v643 = vld [vmem:[%s3 + $0x30] sm:$0xf]
      %v644 = vld [vmem:[%s3 + $0x34] sm:$0xf]
      %v645 = vld [vmem:[%s3 + $0x38] sm:$0xf]
      %v646 = vld [vmem:[%s3 + $0x3c] sm:$0xf]
      %v647 = vld [vmem:[%s4] sm:$0x1]
      %v649 = vperm.slane %v647, 0
      %v667 = vunpack.c.l.b16 %v631
      %v668 = vunpack.c.l.b16 %v632
      %v669 = vunpack.c.l.b16 %v633
      %v670 = vunpack.c.l.b16 %v634
      %v671 = vunpack.c.l.b16 %v635
      %v672 = vunpack.c.l.b16 %v636
      %v673 = vunpack.c.l.b16 %v637
      %v674 = vunpack.c.l.b16 %v638
      %v675 = vunpack.c.l.b16 %v639
      %v676 = vunpack.c.l.b16 %v640
      %v677 = vunpack.c.l.b16 %v641
      %v678 = vunpack.c.l.b16 %v642
      %v679 = vunpack.c.l.b16 %v643
      %v680 = vunpack.c.l.b16 %v644
      %v681 = vunpack.c.l.b16 %v645
      %v682 = vunpack.c.l.b16 %v646
      %v683 = vpack.c.b16 %v668, %v667
      %v684 = vpack.c.b16 %v670, %v669
      %v685 = vpack.c.b16 %v672, %v671
      %v686 = vpack.c.b16 %v674, %v673
      %v687 = vpack.c.b16 %v676, %v675
      %v688 = vpack.c.b16 %v678, %v677
      %v689 = vpack.c.b16 %v680, %v679
      %v690 = vpack.c.b16 %v682, %v681
      %699 = vmatpush.bf16.msra.mxu0 %v690
      %700 = vmatpush.bf16.msra.mxu0 %v689
      %701 = vmatpush.bf16.msra.mxu0 %v688
      %702 = vmatpush.bf16.msra.mxu0 %v687
      %703 = vmatpush.bf16.msra.mxu0 %v686
      %704 = vmatpush.bf16.msra.mxu0 %v685
      %705 = vmatpush.bf16.msra.mxu0 %v684
      %706 = vmatpush.bf16.msra.mxu0 %v683
      %707 = vmatmul.bf16.gmra.mxu0 %v615
      %v708 = vpop.f32.mrf.mxu0
      %v709 = vadd.f32 %v649, %v708
      %v710 = vpop.f32.mrf.mxu0
      %v711 = vadd.f32 %v649, %v710
      %712 = vmatmul.bf16.gmra.mxu0 %v616
      %v713 = vpop.f32.mrf.mxu0
      %v714 = vadd.f32 %v649, %v713
      %v715 = vpop.f32.mrf.mxu0
      %v716 = vadd.f32 %v649, %v715
      %717 = vmatmul.bf16.gmra.mxu0 %v617
      %v718 = vpop.f32.mrf.mxu0
      %v719 = vadd.f32 %v649, %v718
      %v720 = vpop.f32.mrf.mxu0
      %v721 = vadd.f32 %v649, %v720
      %722 = vmatmul.bf16.gmra.mxu0 %v618
      %v723 = vpop.f32.mrf.mxu0
      %v724 = vadd.f32 %v649, %v723
      %v725 = vpop.f32.mrf.mxu0
      %v726 = vadd.f32 %v649, %v725
      %727 = vmatmul.bf16.gmra.mxu0 %v619
      %v728 = vpop.f32.mrf.mxu0
      %v729 = vadd.f32 %v649, %v728
      %v730 = vpop.f32.mrf.mxu0
      %v731 = vadd.f32 %v649, %v730
      %732 = vmatmul.bf16.gmra.mxu0 %v620
      %v733 = vpop.f32.mrf.mxu0
      %v734 = vadd.f32 %v649, %v733
      %v735 = vpop.f32.mrf.mxu0
      %v736 = vadd.f32 %v649, %v735
      %737 = vmatmul.bf16.gmra.mxu0 %v621
      %v738 = vpop.f32.mrf.mxu0
      %v739 = vadd.f32 %v649, %v738
      %v740 = vpop.f32.mrf.mxu0
      %v741 = vadd.f32 %v649, %v740
      %742 = vmatmul.bf16.gmra.mxu0 %v622
      %v743 = vpop.f32.mrf.mxu0
      %v744 = vadd.f32 %v649, %v743
      %v745 = vpop.f32.mrf.mxu0
      %v746 = vadd.f32 %v649, %v745
      %747 = vmatmul.bf16.gmra.mxu0 %v623
      %v748 = vpop.f32.mrf.mxu0
      %v749 = vadd.f32 %v649, %v748
      %v750 = vpop.f32.mrf.mxu0
      %v751 = vadd.f32 %v649, %v750
      %752 = vmatmul.bf16.gmra.mxu0 %v624
      %v753 = vpop.f32.mrf.mxu0
      %v754 = vadd.f32 %v649, %v753
      %v755 = vpop.f32.mrf.mxu0
      %v756 = vadd.f32 %v649, %v755
      %757 = vmatmul.bf16.gmra.mxu0 %v625
      %v758 = vpop.f32.mrf.mxu0
      %v759 = vadd.f32 %v649, %v758
      %v760 = vpop.f32.mrf.mxu0
      %v761 = vadd.f32 %v649, %v760
      %762 = vmatmul.bf16.gmra.mxu0 %v626
      %v763 = vpop.f32.mrf.mxu0
      %v764 = vadd.f32 %v649, %v763
      %v765 = vpop.f32.mrf.mxu0
      %v766 = vadd.f32 %v649, %v765
      %767 = vmatmul.bf16.gmra.mxu0 %v627
      %v768 = vpop.f32.mrf.mxu0
      %v769 = vadd.f32 %v649, %v768
      %v770 = vpop.f32.mrf.mxu0
      %v771 = vadd.f32 %v649, %v770
      %772 = vmatmul.bf16.gmra.mxu0 %v628
      %v773 = vpop.f32.mrf.mxu0
      %v774 = vadd.f32 %v649, %v773
      %v775 = vpop.f32.mrf.mxu0
      %v776 = vadd.f32 %v649, %v775
      %777 = vmatmul.bf16.gmra.mxu0 %v629
      %v778 = vpop.f32.mrf.mxu0
      %v779 = vadd.f32 %v649, %v778
      %v780 = vpop.f32.mrf.mxu0
      %v781 = vadd.f32 %v649, %v780
      %782 = vmatmul.bf16.gmra.mxu0 %v630
      %v783 = vpop.f32.mrf.mxu0
      %v784 = vadd.f32 %v649, %v783
      %v785 = vpop.f32.mrf.mxu0
      %v786 = vadd.f32 %v649, %v785
      %787 = vdwg.mxu0
      %v788 = vpack.c.bf16 %v709, %v709
      %v789 = vpack.c.bf16 %v711, %v711
      %v790 = vpack.c.bf16 %v714, %v714
      %v791 = vpack.c.bf16 %v716, %v716
      %v792 = vpack.c.bf16 %v719, %v719
      %v793 = vpack.c.bf16 %v721, %v721
      %v794 = vpack.c.bf16 %v724, %v724
      %v795 = vpack.c.bf16 %v726, %v726
      %v796 = vpack.c.bf16 %v729, %v729
      %v797 = vpack.c.bf16 %v731, %v731
      %v798 = vpack.c.bf16 %v734, %v734
      %v799 = vpack.c.bf16 %v736, %v736
      %v800 = vpack.c.bf16 %v739, %v739
      %v801 = vpack.c.bf16 %v741, %v741
      %v802 = vpack.c.bf16 %v744, %v744
      %v803 = vpack.c.bf16 %v746, %v746
      %v804 = vpack.c.bf16 %v749, %v749
      %v805 = vpack.c.bf16 %v751, %v751
      %v806 = vpack.c.bf16 %v754, %v754
      %v807 = vpack.c.bf16 %v756, %v756
      %v808 = vpack.c.bf16 %v759, %v759
      %v809 = vpack.c.bf16 %v761, %v761
      %v810 = vpack.c.bf16 %v764, %v764
      %v811 = vpack.c.bf16 %v766, %v766
      %v812 = vpack.c.bf16 %v769, %v769
      %v813 = vpack.c.bf16 %v771, %v771
      %v814 = vpack.c.bf16 %v774, %v774
      %v815 = vpack.c.bf16 %v776, %v776
      %v816 = vpack.c.bf16 %v779, %v779
      %v817 = vpack.c.bf16 %v781, %v781
      %v818 = vpack.c.bf16 %v784, %v784
      %v819 = vpack.c.bf16 %v786, %v786
      %820 = vst [vmem:[%s290] sm:$0xf] %v788
      %821 = vst [vmem:[%s290 + $0x4] sm:$0xf] %v789
      %822 = vst [vmem:[%s290 + $0x8] sm:$0xf] %v790
      %823 = vst [vmem:[%s290 + $0xc] sm:$0xf] %v791
      %824 = vst [vmem:[%s290 + $0x10] sm:$0xf] %v792
      %825 = vst [vmem:[%s290 + $0x14] sm:$0xf] %v793
      %826 = vst [vmem:[%s290 + $0x18] sm:$0xf] %v794
      %827 = vst [vmem:[%s290 + $0x1c] sm:$0xf] %v795
      %828 = vst [vmem:[%s290 + $0x20] sm:$0xf] %v796
      %829 = vst [vmem:[%s290 + $0x24] sm:$0xf] %v797
      %830 = vst [vmem:[%s290 + $0x28] sm:$0xf] %v798
      %831 = vst [vmem:[%s290 + $0x2c] sm:$0xf] %v799
      %832 = vst [vmem:[%s290 + $0x30] sm:$0xf] %v800
      %833 = vst [vmem:[%s290 + $0x34] sm:$0xf] %v801
      %834 = vst [vmem:[%s290 + $0x38] sm:$0xf] %v802
      %835 = vst [vmem:[%s290 + $0x3c] sm:$0xf] %v803
      %836 = vst [vmem:[%s290 + $0x40] sm:$0xf] %v804
      %837 = vst [vmem:[%s290 + $0x44] sm:$0xf] %v805
      %838 = vst [vmem:[%s290 + $0x48] sm:$0xf] %v806
      %839 = vst [vmem:[%s290 + $0x4c] sm:$0xf] %v807
      %840 = vst [vmem:[%s290 + $0x50] sm:$0xf] %v808
      %841 = vst [vmem:[%s290 + $0x54] sm:$0xf] %v809
      %842 = vst [vmem:[%s290 + $0x58] sm:$0xf] %v810
      %843 = vst [vmem:[%s290 + $0x5c] sm:$0xf] %v811
      %844 = vst [vmem:[%s290 + $0x60] sm:$0xf] %v812
      %845 = vst [vmem:[%s290 + $0x64] sm:$0xf] %v813
      %846 = vst [vmem:[%s290 + $0x68] sm:$0xf] %v814
      %847 = vst [vmem:[%s290 + $0x6c] sm:$0xf] %v815
      %848 = vst [vmem:[%s290 + $0x70] sm:$0xf] %v816
      %849 = vst [vmem:[%s290 + $0x74] sm:$0xf] %v817
      %850 = vst [vmem:[%s290 + $0x78] sm:$0xf] %v818
      %851 = vst [vmem:[%s290 + $0x7c] sm:$0xf] %v819
      %v852 = vld [vmem:[#allocation2] sm:$0x1]
      %v854 = vperm.slane %v852, 0
      %855 = vset.pattern.permute.xlu0 0
      %856 = vperm.xlu0 %855, %v854
      %v857 = vpop.permute.xlu0 %856
      %v859 = vmul.f32 %v857, %v709
      %v860 = vmul.f32 %v857, %v711
      %v861 = vmul.f32 %v857, %v714
      %v862 = vmul.f32 %v857, %v716
      %v863 = vmul.f32 %v857, %v719
      %v864 = vmul.f32 %v857, %v721
      %v865 = vmul.f32 %v857, %v724
      %v866 = vmul.f32 %v857, %v726
      %v867 = vmul.f32 %v857, %v729
      %v868 = vmul.f32 %v857, %v731
      %v869 = vmul.f32 %v857, %v734
      %v870 = vmul.f32 %v857, %v736
      %v871 = vmul.f32 %v857, %v739
      %v872 = vmul.f32 %v857, %v741
      %v873 = vmul.f32 %v857, %v744
      %v874 = vmul.f32 %v857, %v746
      %v875 = vmul.f32 %v857, %v749
      %v876 = vmul.f32 %v857, %v751
      %v877 = vmul.f32 %v857, %v754
      %v878 = vmul.f32 %v857, %v756
      %v879 = vmul.f32 %v857, %v759
      %v880 = vmul.f32 %v857, %v761
      %v881 = vmul.f32 %v857, %v764
      %v882 = vmul.f32 %v857, %v766
      %v883 = vmul.f32 %v857, %v769
      %v884 = vmul.f32 %v857, %v771
      %v885 = vmul.f32 %v857, %v774
      %v886 = vmul.f32 %v857, %v776
      %v887 = vmul.f32 %v857, %v779
      %v888 = vmul.f32 %v857, %v781
      %v889 = vmul.f32 %v857, %v784
      %v890 = vmul.f32 %v857, %v786
      %891 = vst [vmem:[%s296] sm:$0xff] %v859
      %892 = vst [vmem:[%s296 + $0x8] sm:$0xff] %v860
      %893 = vst [vmem:[%s296 + $0x10] sm:$0xff] %v861
      %894 = vst [vmem:[%s296 + $0x18] sm:$0xff] %v862
      %895 = vst [vmem:[%s296 + $0x20] sm:$0xff] %v863
      %896 = vst [vmem:[%s296 + $0x28] sm:$0xff] %v864
      %897 = vst [vmem:[%s296 + $0x30] sm:$0xff] %v865
      %898 = vst [vmem:[%s296 + $0x38] sm:$0xff] %v866
      %899 = vst [vmem:[%s296 + $0x40] sm:$0xff] %v867
      %900 = vst [vmem:[%s296 + $0x48] sm:$0xff] %v868
      %901 = vst [vmem:[%s296 + $0x50] sm:$0xff] %v869
      %902 = vst [vmem:[%s296 + $0x58] sm:$0xff] %v870
      %903 = vst [vmem:[%s296 + $0x60] sm:$0xff] %v871
      %904 = vst [vmem:[%s296 + $0x68] sm:$0xff] %v872
      %905 = vst [vmem:[%s296 + $0x70] sm:$0xff] %v873
      %906 = vst [vmem:[%s296 + $0x78] sm:$0xff] %v874
      %907 = vst [vmem:[%s296 + $0x80] sm:$0xff] %v875
      %908 = vst [vmem:[%s296 + $0x88] sm:$0xff] %v876
      %909 = vst [vmem:[%s296 + $0x90] sm:$0xff] %v877
      %910 = vst [vmem:[%s296 + $0x98] sm:$0xff] %v878
      %911 = vst [vmem:[%s296 + $0xa0] sm:$0xff] %v879
      %912 = vst [vmem:[%s296 + $0xa8] sm:$0xff] %v880
      %913 = vst [vmem:[%s296 + $0xb0] sm:$0xff] %v881
      %914 = vst [vmem:[%s296 + $0xb8] sm:$0xff] %v882
      %915 = vst [vmem:[%s296 + $0xc0] sm:$0xff] %v883
      %916 = vst [vmem:[%s296 + $0xc8] sm:$0xff] %v884
      %917 = vst [vmem:[%s296 + $0xd0] sm:$0xff] %v885
      %918 = vst [vmem:[%s296 + $0xd8] sm:$0xff] %v886
      %919 = vst [vmem:[%s296 + $0xe0] sm:$0xff] %v887
      %920 = vst [vmem:[%s296 + $0xe8] sm:$0xff] %v888
      %921 = vst [vmem:[%s296 + $0xf0] sm:$0xff] %v889
      %922 = vst [vmem:[%s296 + $0xf8] sm:$0xff] %v890
      %s923 = smul.u32 32, %s21
      %p924 = scmp.lt.s32.totalorder %s923, 63
      %s925 = scalar_select %p924, %s923, 63
      %s926 = smul.addr %s925, 4
      %s927 = scalar_lea.vmem %s6, %s926
      %s928 = smul.u32 32, %s21
      %p929 = scmp.lt.s32.totalorder %s928, 63
      %s930 = scalar_select %p929, %s928, 63
      %s931 = smul.addr %s930, 8
      %s932 = scalar_lea.vmem %s7, %s931
      // Predicated region
      $region45: #{gprgnn_forward.6} parent=43 // pred_check
        %p933 = pneg %p170
      $region46: #{gprgnn_forward.6} parent=43 // pred_check_branch
        %935 = sbr.rel (%p933) target = $region48
      $region47: #{gprgnn_forward.6} parent=43 // pred_region
        %s936 = smul.u32 32, %s21
      $region48: #{gprgnn_forward.6} parent=43 // pred_fallthru
        _
      // Predicated region
      $region49: #{gprgnn_forward.6} parent=43 // pred_check
        %p937 = pneg %p196
      $region50: #{gprgnn_forward.6} parent=43 // pred_check_branch
        %939 = sbr.rel (%p937) target = $region52
      $region51: #{gprgnn_forward.6} parent=43 // pred_region
        %s940 = smul.u32 32, %s21
      $region52: #{gprgnn_forward.6} parent=43 // pred_fallthru
        _
    $region44: #{gprgnn_forward.6} parent=5 // pred_fallthru
      _
    %p941 = scmp.le.s32.totalorder 2, %s16
    // Predicated region
    $region53: #{gprgnn_forward.6} parent=5 // pred_check
      %p942 = pneg %p941
    $region54: #{gprgnn_forward.6} parent=5 // pred_check_branch
      %944 = sbr.rel (%p942) target = $region56
    $region55: #{gprgnn_forward.6} parent=5 // pred_region
      %s945 = ssub.s32 %s16, 2
      // Predicated region
      $region57: #{gprgnn_forward.6} parent=55 // pred_check
        %p946 = pneg %p176
      $region58: #{gprgnn_forward.6} parent=55 // pred_check_branch
        %948 = sbr.rel (%p946) target = $region60
      $region59: #{gprgnn_forward.6} parent=55 // pred_region
        %s949 = smul.u32 32, %s22
        %p950 = scmp.lt.s32.totalorder %s949, 63
        %s951 = scalar_select %p950, %s949, 63
        %s952 = smul.addr %s951, 4
        %s953 = scalar_lea.vmem %s6, %s952
      $region60: #{gprgnn_forward.6} parent=55 // pred_fallthru
        _
      // Predicated region
      $region61: #{gprgnn_forward.6} parent=55 // pred_check
        %p954 = pneg %p202
      $region62: #{gprgnn_forward.6} parent=55 // pred_check_branch
        %956 = sbr.rel (%p954) target = $region64
      $region63: #{gprgnn_forward.6} parent=55 // pred_region
        %s957 = smul.u32 32, %s22
        %p958 = scmp.lt.s32.totalorder %s957, 63
        %s959 = scalar_select %p958, %s957, 63
        %s960 = smul.addr %s959, 8
        %s961 = scalar_lea.vmem %s7, %s960
      $region64: #{gprgnn_forward.6} parent=55 // pred_fallthru
        _
    $region56: #{gprgnn_forward.6} parent=5 // pred_fallthru
      _
  $region6: #{gprgnn_forward.6} parent=0 // loop_footer
    %s20 = sadd.s32 1, %s16
  $region7: #{gprgnn_forward.6} parent=0 // loop_footer_branch
    %15 = sbr.rel target = $region3
  $region8: #{gprgnn_forward.6} parent=0 // loop_exit
    _

// kernel: gprgnn_forward.10
$region0: #{gprgnn_forward.10}
  #allocation0 [shape = 'u32[]', space=smem, size = 0x4, offset = 0x4, fixed_abs, tag = 'smem constant byte address 0x4 - core index']
  #allocation1 [shape = 'u32[72,128]{1,0:T(1,128)}', space=vmem, size = 0x9000, scoped, tag = 'internal scratch']
  #allocation2 [shape = 'f32[256,128]{1,0:T(8,128)}', space=vmem, size = 0x20000, scoped, tag = 'scratch operand']
  #allocation3 [shape = 'f32[1,1]{1,0:T(1,128)S(1)}', space=vmem, size = 0x200, scoped, tag = 'scoped memory for gprgnn_forward.10']
  %s0 = inlined_call_operand.vmem [shape: bf16[512,512], index: 0, kind: input, shape index: {}]
  %s1 = inlined_call_operand.vmem [shape: bf16[512,128], index: 1, kind: input, shape index: {}]
  %s2 = inlined_call_operand.vmem [shape: f32[512,128], index: 2, kind: input, shape index: {}]
  %s3 = inlined_call_operand.<no memory space> [shape: f32[1,1], index: 3, kind: input, shape index: {}]
  %s4 = inlined_call_operand.hbm [shape: bf16[512,128], index: 4, kind: output, shape index: {0}]
  %s5 = inlined_call_operand.vmem [shape: f32[512,128], index: 5, kind: output, shape index: {1}]
  %6 = xla_tuple %s4, %s5
  %s7 = sld [smem:[#allocation0]]
  $region103: #{gprgnn_forward.10} parent=0
    _
  %s9 = ssub.s32 1, %s7
  %s10 = scalar_select 0, %s9, %s7
  %v11 = vstv %s3
  %12 = vst [vmem:[#allocation3] sm:$0x1] %v11
  $region1: #{gprgnn_forward.10} parent=0
    #allocation4 [shape = 'u8[262144]{0}', space=vmem, size = 0x40000, scoped, tag = 'input window, operand 0']
    #allocation5 [shape = 'u8[131072]{0}', space=vmem, size = 0x20000, scoped, tag = 'output window, operand 0']
    #allocation6 [shape = 's32[2]{0}', space=sflag, size = 0x8, scoped, tag = 'scoped memory for gprgnn_forward.10']
    %13 = vsyncpa [#allocation6], 0
    %s14 = scalar_lea.sflag [#allocation6], 1
    %15 = vsyncpa %s14, 0
    loop: start=0, step=1, limit=6
    $region2: #{gprgnn_forward.10} parent=1 // loop_pre_header
      _
    $region3: #{gprgnn_forward.10} parent=1 // loop_header
      %s17 = sphi 0, %s21
      %p18 = scmp.ge.s32.totalorder %s17, 6
      %s24 = sphi 0, %s36
      %s25 = sphi 0, %s32
      %s26 = sphi 0, %s24
      %s27 = sphi 0, %s25
      %s28 = sphi 0, %s26
      %s29 = sphi 0, %s27
      %s41 = sphi 0, %s43
      %s44 = sphi 0, %s41
      %s45 = sphi 0, %s44
      %s61 = sphi 0, %s45
      %s67 = sphi 0, %s69
      %s70 = sphi 0, %s67
      %s71 = sphi 0, %s70
      %s87 = sphi 0, %s71
      %s93 = sphi 0, %s95
      %s96 = sphi 0, %s93
      %s97 = sphi 0, %s96
      %s113 = sphi 0, %s97
      %s117 = sphi 0, %s117
      %s119 = sphi 0, %s117
      %s120 = sphi 0, %s119
      %s134 = sphi 0, %s120
      %s140 = sphi 0, %s142
      %s143 = sphi 0, %s140
      %s144 = sphi 0, %s143
      %s160 = sphi 0, %s144
      %s166 = sphi 0, %s168
      %s169 = sphi 0, %s166
      %s170 = sphi 0, %s169
      %s186 = sphi 0, %s170
    $region4: #{gprgnn_forward.10} parent=1 // loop_header_branch
      %20 = sbr.rel (%p18) target = $region8
    $region5: #{gprgnn_forward.10} parent=1 // loop_body
      %s22 = ssub.s32 %s17, 1
      %s23 = ssub.s32 %s17, 2
      %s30 = sadd.s32 1, %s25
      %p31 = scmp.ge.s32.totalorder %s30, 2
      %s32 = scalar_select %p31, 0, %s30
      %s33 = sadd.s32 1, %s24
      %s34 = scalar_select %p31, %s33, %s24
      %p35 = scmp.ge.s32.totalorder %s34, 2
      %s36 = scalar_select %p35, 0, %s34
      %s37 = ssub.s32 %s24, %s36
      %s38 = ssub.s32 %s25, %s32
      %s39 = sor.u32 %s37, %s38
      %p40 = scmp.eq.s32.totalorder %s39, 0
      %s42 = sadd.s32 %s41, 1
      %s43 = scalar_select %p40, %s41, %s42
      %p46 = pneg %p40
      %p47 = scmp.eq.s32.totalorder %s17, 3
      %p48 = por %p46, %p47
      %p49 = scmp.ne.s32.totalorder %s41, %s44
      %p50 = scmp.eq.s32.totalorder %s17, 0
      %p51 = por %p49, %p50
      %p52 = scmp.ne.s32.totalorder %s41, %s44
      %p53 = scmp.eq.s32.totalorder %s22, 3
      %p54 = por %p52, %p53
      %p55 = scmp.ne.s32.totalorder %s44, %s45
      %p56 = scmp.eq.s32.totalorder %s22, 0
      %p57 = por %p55, %p56
      %p58 = scmp.ne.s32.totalorder %s44, %s45
      %p59 = scmp.eq.s32.totalorder %s23, 3
      %p60 = por %p58, %p59
      %p62 = scmp.ne.s32.totalorder %s45, %s61
      %p63 = scmp.eq.s32.totalorder %s23, 0
      %p64 = por %p62, %p63
      %s65 = ssub.s32 %s25, %s32
      %p66 = scmp.eq.s32.totalorder %s65, 0
      %s68 = sadd.s32 %s67, 1
      %s69 = scalar_select %p66, %s67, %s68
      %p72 = pneg %p66
      %p73 = scmp.eq.s32.totalorder %s17, 3
      %p74 = por %p72, %p73
      %p75 = scmp.ne.s32.totalorder %s67, %s70
      %p76 = scmp.eq.s32.totalorder %s17, 0
      %p77 = por %p75, %p76
      %p78 = scmp.ne.s32.totalorder %s67, %s70
      %p79 = scmp.eq.s32.totalorder %s22, 3
      %p80 = por %p78, %p79
      %p81 = scmp.ne.s32.totalorder %s70, %s71
      %p82 = scmp.eq.s32.totalorder %s22, 0
      %p83 = por %p81, %p82
      %p84 = scmp.ne.s32.totalorder %s70, %s71
      %p85 = scmp.eq.s32.totalorder %s23, 3
      %p86 = por %p84, %p85
      %p88 = scmp.ne.s32.totalorder %s71, %s87
      %p89 = scmp.eq.s32.totalorder %s23, 0
      %p90 = por %p88, %p89
      %s91 = ssub.s32 %s24, %s36
      %p92 = scmp.eq.s32.totalorder %s91, 0
      %s94 = sadd.s32 %s93, 1
      %s95 = scalar_select %p92, %s93, %s94
      %p98 = pneg %p92
      %p99 = scmp.eq.s32.totalorder %s17, 3
      %p100 = por %p98, %p99
      %p101 = scmp.ne.s32.totalorder %s93, %s96
      %p102 = scmp.eq.s32.totalorder %s17, 0
      %p103 = por %p101, %p102
      %p104 = scmp.ne.s32.totalorder %s93, %s96
      %p105 = scmp.eq.s32.totalorder %s22, 3
      %p106 = por %p104, %p105
      %p107 = scmp.ne.s32.totalorder %s96, %s97
      %p108 = scmp.eq.s32.totalorder %s22, 0
      %p109 = por %p107, %p108
      %p110 = scmp.ne.s32.totalorder %s96, %s97
      %p111 = scmp.eq.s32.totalorder %s23, 3
      %p112 = por %p110, %p111
      %p114 = scmp.ne.s32.totalorder %s97, %s113
      %p115 = scmp.eq.s32.totalorder %s23, 0
      %p116 = por %p114, %p115
      %s118 = sadd.s32 %s117, 1
      %p121 = scmp.eq.s32.totalorder %s17, 3
      %p122 = scmp.ne.s32.totalorder %s117, %s119
      %p123 = scmp.eq.s32.totalorder %s17, 0
      %p124 = por %p122, %p123
      %p125 = scmp.ne.s32.totalorder %s117, %s119
      %p126 = scmp.eq.s32.totalorder %s22, 3
      %p127 = por %p125, %p126
      %p128 = scmp.ne.s32.totalorder %s119, %s120
      %p129 = scmp.eq.s32.totalorder %s22, 0
      %p130 = por %p128, %p129
      %p131 = scmp.ne.s32.totalorder %s119, %s120
      %p132 = scmp.eq.s32.totalorder %s23, 3
      %p133 = por %p131, %p132
      %p135 = scmp.ne.s32.totalorder %s120, %s134
      %p136 = scmp.eq.s32.totalorder %s23, 0
      %p137 = por %p135, %p136
      %s138 = ssub.s32 %s24, %s36
      %p139 = scmp.eq.s32.totalorder %s138, 0
      %s141 = sadd.s32 %s140, 1
      %s142 = scalar_select %p139, %s140, %s141
      %p145 = pneg %p139
      %p146 = scmp.eq.s32.totalorder %s17, 3
      %p147 = por %p145, %p146
      %p148 = scmp.ne.s32.totalorder %s140, %s143
      %p149 = scmp.eq.s32.totalorder %s17, 0
      %p150 = por %p148, %p149
      %p151 = scmp.ne.s32.totalorder %s140, %s143
      %p152 = scmp.eq.s32.totalorder %s22, 3
      %p153 = por %p151, %p152
      %p154 = scmp.ne.s32.totalorder %s143, %s144
      %p155 = scmp.eq.s32.totalorder %s22, 0
      %p156 = por %p154, %p155
      %p157 = scmp.ne.s32.totalorder %s143, %s144
      %p158 = scmp.eq.s32.totalorder %s23, 3
      %p159 = por %p157, %p158
      %p161 = scmp.ne.s32.totalorder %s144, %s160
      %p162 = scmp.eq.s32.totalorder %s23, 0
      %p163 = por %p161, %p162
      %s164 = ssub.s32 %s24, %s36
      %p165 = scmp.eq.s32.totalorder %s164, 0
      %s167 = sadd.s32 %s166, 1
      %s168 = scalar_select %p165, %s166, %s167
      %p171 = pneg %p165
      %p172 = scmp.eq.s32.totalorder %s17, 3
      %p173 = por %p171, %p172
      %p174 = scmp.ne.s32.totalorder %s166, %s169
      %p175 = scmp.eq.s32.totalorder %s17, 0
      %p176 = por %p174, %p175
      %p177 = scmp.ne.s32.totalorder %s166, %s169
      %p178 = scmp.eq.s32.totalorder %s22, 3
      %p179 = por %p177, %p178
      %p180 = scmp.ne.s32.totalorder %s169, %s170
      %p181 = scmp.eq.s32.totalorder %s22, 0
      %p182 = por %p180, %p181
      %p183 = scmp.ne.s32.totalorder %s169, %s170
      %p184 = scmp.eq.s32.totalorder %s23, 3
      %p185 = por %p183, %p184
      %p187 = scmp.ne.s32.totalorder %s170, %s186
      %p188 = scmp.eq.s32.totalorder %s23, 0
      %p189 = por %p187, %p188
      %p190 = scmp.le.s32.totalorder 1, %s17
      %p191 = scmp.lt.s32.totalorder %s17, 5
      %p192 = pnand %p190, %p191
      %p193 = pneg %p192
      // Predicated region
      $region9: #{gprgnn_forward.10} parent=5 // pred_check
        _
      $region10: #{gprgnn_forward.10} parent=5 // pred_check_branch
        %195 = sbr.rel (%p192) target = $region12
      $region11: #{gprgnn_forward.10} parent=5 // pred_region
        %s196 = ssub.s32 %s17, 1
        // Predicated region
        $region13: #{gprgnn_forward.10} parent=11 // pred_check
          %p197 = pneg %p130
        $region14: #{gprgnn_forward.10} parent=11 // pred_check_branch
          %199 = sbr.rel (%p197) target = $region16
        $region15: #{gprgnn_forward.10} parent=11 // pred_region
          _
        $region16: #{gprgnn_forward.10} parent=11 // pred_fallthru
          _
      $region12: #{gprgnn_forward.10} parent=5 // pred_fallthru
        _
      %p200 = scmp.lt.s32.totalorder %s17, 4
      // Predicated region
      $region17: #{gprgnn_forward.10} parent=5 // pred_check
        %p201 = pneg %p200
      $region18: #{gprgnn_forward.10} parent=5 // pred_check_branch
        %203 = sbr.rel (%p201) target = $region20
      $region19: #{gprgnn_forward.10} parent=5 // pred_region
        // Predicated region
        $region21: #{gprgnn_forward.10} parent=19 // pred_check
          %p204 = pneg %p51
        $region22: #{gprgnn_forward.10} parent=19 // pred_check_branch
          %206 = sbr.rel (%p204) target = $region24
        $region23: #{gprgnn_forward.10} parent=19 // pred_region
          %s207 = sand.u32 %s41, 1
          %s208 = sand.u32 %s41, 1
          %s209 = smul.addr %s208, 256
          %s210 = scalar_lea.vmem [#allocation4], %s209
          %s211 = smul.u32 32, %s24
          %s212 = smul.u32 2, %s25
          %s213 = smul.addr %s211, 4
          %s214 = sadd.s32 %s212, %s213
          %s215 = smul.addr %s214, 4
          %s216 = scalar_lea.vmem %s0, %s215
          // Predicated region
          $region25: #{gprgnn_forward.10} parent=23 // pred_check
            _
          $region26: #{gprgnn_forward.10} parent=23 // pred_check_branch
            %218 = sbr.rel (0) target = $region28
          $region27: #{gprgnn_forward.10} parent=23 // pred_region
            // Predicated region
            $region29: #{gprgnn_forward.10} parent=27 // pred_check
              _
            $region30: #{gprgnn_forward.10} parent=27 // pred_check_branch
              %220 = sbr.rel (0) target = $region32
            $region31: #{gprgnn_forward.10} parent=27 // pred_region
              // Predicated region
              $region44: #{gprgnn_forward.10} parent=31 // pred_check
                _
              $region45: #{gprgnn_forward.10} parent=31 // pred_check_branch
                %298 = sbr.rel (0) target = $region47
              $region46: #{gprgnn_forward.10} parent=31 // pred_region
                loop: start=0, step=1, limit=1
                $region48: #{gprgnn_forward.10} parent=46 // loop_pre_header
                  _
                $region49: #{gprgnn_forward.10} parent=46 // loop_header
                  %s300 = sphi 0, %s304
                  %p301 = scmp.ge.s32.totalorder %s300, 1
                  %s305 = sphi %s216, %s216
                  %s306 = sphi %s210, %s210
                $region50: #{gprgnn_forward.10} parent=46 // loop_header_branch
                  %303 = sbr.rel (%p301) target = $region54
                $region51: #{gprgnn_forward.10} parent=46 // loop_body
                  %v307 = vld [vmem:[%s305] sm:$0xff]
                  %308 = vst [vmem:[%s306] sm:$0xff] %v307
                  %v309 = vld [vmem:[%s305 + $0x10] sm:$0xff]
                  %310 = vst [vmem:[%s306 + $0x8] sm:$0xff] %v309
                  %v311 = vld [vmem:[%s305 + $0x20] sm:$0xff]
                  %312 = vst [vmem:[%s306 + $0x10] sm:$0xff] %v311
                  %v313 = vld [vmem:[%s305 + $0x30] sm:$0xff]
                  %314 = vst [vmem:[%s306 + $0x18] sm:$0xff] %v313
                  %v315 = vld [vmem:[%s305 + $0x40] sm:$0xff]
                  %316 = vst [vmem:[%s306 + $0x20] sm:$0xff] %v315
                  %v317 = vld [vmem:[%s305 + $0x50] sm:$0xff]
                  %318 = vst [vmem:[%s306 + $0x28] sm:$0xff] %v317
                  %v319 = vld [vmem:[%s305 + $0x60] sm:$0xff]
                  %320 = vst [vmem:[%s306 + $0x30] sm:$0xff] %v319
                  %v321 = vld [vmem:[%s305 + $0x70] sm:$0xff]
                  %322 = vst [vmem:[%s306 + $0x38] sm:$0xff] %v321
                  %v323 = vld [vmem:[%s305 + $0x80] sm:$0xff]
                  %324 = vst [vmem:[%s306 + $0x40] sm:$0xff] %v323
                  %v325 = vld [vmem:[%s305 + $0x90] sm:$0xff]
                  %326 = vst [vmem:[%s306 + $0x48] sm:$0xff] %v325
                  %v327 = vld [vmem:[%s305 + $0xa0] sm:$0xff]
                  %328 = vst [vmem:[%s306 + $0x50] sm:$0xff] %v327
                  %v329 = vld [vmem:[%s305 + $0xb0] sm:$0xff]
                  %330 = vst [vmem:[%s306 + $0x58] sm:$0xff] %v329
                  %v331 = vld [vmem:[%s305 + $0xc0] sm:$0xff]
                  %332 = vst [vmem:[%s306 + $0x60] sm:$0xff] %v331
                  %v333 = vld [vmem:[%s305 + $0xd0] sm:$0xff]
                  %334 = vst [vmem:[%s306 + $0x68] sm:$0xff] %v333
                  %v335 = vld [vmem:[%s305 + $0xe0] sm:$0xff]
                  %336 = vst [vmem:[%s306 + $0x70] sm:$0xff] %v335
                  %v337 = vld [vmem:[%s305 + $0xf0] sm:$0xff]
                  %338 = vst [vmem:[%s306 + $0x78] sm:$0xff] %v337
                  %v339 = vld [vmem:[%s305 + $0x100] sm:$0xff]
                  %340 = vst [vmem:[%s306 + $0x80] sm:$0xff] %v339
                  %v341 = vld [vmem:[%s305 + $0x110] sm:$0xff]
                  %342 = vst [vmem:[%s306 + $0x88] sm:$0xff] %v341
                  %v343 = vld [vmem:[%s305 + $0x120] sm:$0xff]
                  %344 = vst [vmem:[%s306 + $0x90] sm:$0xff] %v343
                  %v345 = vld [vmem:[%s305 + $0x130] sm:$0xff]
                  %346 = vst [vmem:[%s306 + $0x98] sm:$0xff] %v345
                  %v347 = vld [vmem:[%s305 + $0x140] sm:$0xff]
                  %348 = vst [vmem:[%s306 + $0xa0] sm:$0xff] %v347
                  %v349 = vld [vmem:[%s305 + $0x150] sm:$0xff]
                  %350 = vst [vmem:[%s306 + $0xa8] sm:$0xff] %v349
                  %v351 = vld [vmem:[%s305 + $0x160] sm:$0xff]
                  %352 = vst [vmem:[%s306 + $0xb0] sm:$0xff] %v351
                  %v353 = vld [vmem:[%s305 + $0x170] sm:$0xff]
                  %354 = vst [vmem:[%s306 + $0xb8] sm:$0xff] %v353
                  %v355 = vld [vmem:[%s305 + $0x180] sm:$0xff]
                  %356 = vst [vmem:[%s306 + $0xc0] sm:$0xff] %v355
                  %v357 = vld [vmem:[%s305 + $0x190] sm:$0xff]
                  %358 = vst [vmem:[%s306 + $0xc8] sm:$0xff] %v357
                  %v359 = vld [vmem:[%s305 + $0x1a0] sm:$0xff]
                  %360 = vst [vmem:[%s306 + $0xd0] sm:$0xff] %v359
                  %v361 = vld [vmem:[%s305 + $0x1b0] sm:$0xff]
                  %362 = vst [vmem:[%s306 + $0xd8] sm:$0xff] %v361
                  %v363 = vld [vmem:[%s305 + $0x1c0] sm:$0xff]
                  %364 = vst [vmem:[%s306 + $0xe0] sm:$0xff] %v363
                  %v365 = vld [vmem:[%s305 + $0x1d0] sm:$0xff]
                  %366 = vst [vmem:[%s306 + $0xe8] sm:$0xff] %v365
                  %v367 = vld [vmem:[%s305 + $0x1e0] sm:$0xff]
                  %368 = vst [vmem:[%s306 + $0xf0] sm:$0xff] %v367
                  %v369 = vld [vmem:[%s305 + $0x1f0] sm:$0xff]
                  %370 = vst [vmem:[%s306 + $0xf8] sm:$0xff] %v369
                $region52: #{gprgnn_forward.10} parent=46 // loop_footer
                  %s304 = sadd.s32 1, %s300
                $region53: #{gprgnn_forward.10} parent=46 // loop_footer_branch
                  %299 = sbr.rel target = $region49
                $region54: #{gprgnn_forward.10} parent=46 // loop_exit
                  _
              $region47: #{gprgnn_forward.10} parent=31 // pred_fallthru
                _
              // Predicated region
              $region55: #{gprgnn_forward.10} parent=31 // pred_check
                _
              $region56: #{gprgnn_forward.10} parent=31 // pred_check_branch
                %372 = sbr.rel target = $region58
              $region57: #{gprgnn_forward.10} parent=31 // pred_region
                _
              $region58: #{gprgnn_forward.10} parent=31 // pred_fallthru
                _
            $region32: #{gprgnn_forward.10} parent=27 // pred_fallthru
              _
            // Predicated region
            $region33: #{gprgnn_forward.10} parent=27 // pred_check
              _
            $region34: #{gprgnn_forward.10} parent=27 // pred_check_branch
              %222 = sbr.rel target = $region36
            $region35: #{gprgnn_forward.10} parent=27 // pred_region
              %s224 = ssub.s32 256, 1
              loop: start=0, step=1, limit=1
              $region37: #{gprgnn_forward.10} parent=35 // loop_pre_header
                _
              $region38: #{gprgnn_forward.10} parent=35 // loop_header
                %s226 = sphi 0, %s230
                %p227 = scmp.ge.s32.totalorder %s226, 1
                %s231 = sphi %s216, %s216
                %s232 = sphi %s210, %s210
              $region39: #{gprgnn_forward.10} parent=35 // loop_header_branch
                %229 = sbr.rel (%p227) target = $region43
              $region40: #{gprgnn_forward.10} parent=35 // loop_body
                %v233 = vld [vmem:[%s231] sm:%s224]
                %234 = vst [vmem:[%s232] sm:%s224] %v233
                %v235 = vld [vmem:[%s231 + $0x10] sm:%s224]
                %236 = vst [vmem:[%s232 + $0x8] sm:%s224] %v235
                %v237 = vld [vmem:[%s231 + $0x20] sm:%s224]
                %238 = vst [vmem:[%s232 + $0x10] sm:%s224] %v237
                %v239 = vld [vmem:[%s231 + $0x30] sm:%s224]
                %240 = vst [vmem:[%s232 + $0x18] sm:%s224] %v239
                %v241 = vld [vmem:[%s231 + $0x40] sm:%s224]
                %242 = vst [vmem:[%s232 + $0x20] sm:%s224] %v241
                %v243 = vld [vmem:[%s231 + $0x50] sm:%s224]
                %244 = vst [vmem:[%s232 + $0x28] sm:%s224] %v243
                %v245 = vld [vmem:[%s231 + $0x60] sm:%s224]
                %246 = vst [vmem:[%s232 + $0x30] sm:%s224] %v245
                %v247 = vld [vmem:[%s231 + $0x70] sm:%s224]
                %248 = vst [vmem:[%s232 + $0x38] sm:%s224] %v247
                %v249 = vld [vmem:[%s231 + $0x80] sm:%s224]
                %250 = vst [vmem:[%s232 + $0x40] sm:%s224] %v249
                %v251 = vld [vmem:[%s231 + $0x90] sm:%s224]
                %252 = vst [vmem:[%s232 + $0x48] sm:%s224] %v251
                %v253 = vld [vmem:[%s231 + $0xa0] sm:%s224]
                %254 = vst [vmem:[%s232 + $0x50] sm:%s224] %v253
                %v255 = vld [vmem:[%s231 + $0xb0] sm:%s224]
                %256 = vst [vmem:[%s232 + $0x58] sm:%s224] %v255
                %v257 = vld [vmem:[%s231 + $0xc0] sm:%s224]
                %258 = vst [vmem:[%s232 + $0x60] sm:%s224] %v257
                %v259 = vld [vmem:[%s231 + $0xd0] sm:%s224]
                %260 = vst [vmem:[%s232 + $0x68] sm:%s224] %v259
                %v261 = vld [vmem:[%s231 + $0xe0] sm:%s224]
                %262 = vst [vmem:[%s232 + $0x70] sm:%s224] %v261
                %v263 = vld [vmem:[%s231 + $0xf0] sm:%s224]
                %264 = vst [vmem:[%s232 + $0x78] sm:%s224] %v263
                %v265 = vld [vmem:[%s231 + $0x100] sm:%s224]
                %266 = vst [vmem:[%s232 + $0x80] sm:%s224] %v265
                %v267 = vld [vmem:[%s231 + $0x110] sm:%s224]
                %268 = vst [vmem:[%s232 + $0x88] sm:%s224] %v267
                %v269 = vld [vmem:[%s231 + $0x120] sm:%s224]
                %270 = vst [vmem:[%s232 + $0x90] sm:%s224] %v269
                %v271 = vld [vmem:[%s231 + $0x130] sm:%s224]
                %272 = vst [vmem:[%s232 + $0x98] sm:%s224] %v271
                %v273 = vld [vmem:[%s231 + $0x140] sm:%s224]
                %274 = vst [vmem:[%s232 + $0xa0] sm:%s224] %v273
                %v275 = vld [vmem:[%s231 + $0x150] sm:%s224]
                %276 = vst [vmem:[%s232 + $0xa8] sm:%s224] %v275
                %v277 = vld [vmem:[%s231 + $0x160] sm:%s224]
                %278 = vst [vmem:[%s232 + $0xb0] sm:%s224] %v277
                %v279 = vld [vmem:[%s231 + $0x170] sm:%s224]
                %280 = vst [vmem:[%s232 + $0xb8] sm:%s224] %v279
                %v281 = vld [vmem:[%s231 + $0x180] sm:%s224]
                %282 = vst [vmem:[%s232 + $0xc0] sm:%s224] %v281
                %v283 = vld [vmem:[%s231 + $0x190] sm:%s224]
                %284 = vst [vmem:[%s232 + $0xc8] sm:%s224] %v283
                %v285 = vld [vmem:[%s231 + $0x1a0] sm:%s224]
                %286 = vst [vmem:[%s232 + $0xd0] sm:%s224] %v285
                %v287 = vld [vmem:[%s231 + $0x1b0] sm:%s224]
                %288 = vst [vmem:[%s232 + $0xd8] sm:%s224] %v287
                %v289 = vld [vmem:[%s231 + $0x1c0] sm:%s224]
                %290 = vst [vmem:[%s232 + $0xe0] sm:%s224] %v289
                %v291 = vld [vmem:[%s231 + $0x1d0] sm:%s224]
                %292 = vst [vmem:[%s232 + $0xe8] sm:%s224] %v291
                %v293 = vld [vmem:[%s231 + $0x1e0] sm:%s224]
                %294 = vst [vmem:[%s232 + $0xf0] sm:%s224] %v293
                %v295 = vld [vmem:[%s231 + $0x1f0] sm:%s224]
                %296 = vst [vmem:[%s232 + $0xf8] sm:%s224] %v295
              $region41: #{gprgnn_forward.10} parent=35 // loop_footer
                %s230 = sadd.s32 1, %s226
              $region42: #{gprgnn_forward.10} parent=35 // loop_footer_branch
                %225 = sbr.rel target = $region38
              $region43: #{gprgnn_forward.10} parent=35 // loop_exit
                _
            $region36: #{gprgnn_forward.10} parent=27 // pred_fallthru
              _
          $region28: #{gprgnn_forward.10} parent=23 // pred_fallthru
            _
          %373 = vnop
        $region24: #{gprgnn_forward.10} parent=19 // pred_fallthru
          _
        // Predicated region
        $region59: #{gprgnn_forward.10} parent=19 // pred_check
          %p374 = pneg %p77
        $region60: #{gprgnn_forward.10} parent=19 // pred_check_branch
          %376 = sbr.rel (%p374) target = $region62
        $region61: #{gprgnn_forward.10} parent=19 // pred_region
          %s377 = smul.u32 32, %s25
          %p378 = scmp.lt.s32.totalorder %s377, 63
          %s379 = scalar_select %p378, %s377, 63
          %s380 = smul.addr %s379, 4
          %s381 = scalar_lea.vmem %s1, %s380
          %s382 = smul.u32 32, %s25
        $region62: #{gprgnn_forward.10} parent=19 // pred_fallthru
          _
        // Predicated region
        $region63: #{gprgnn_forward.10} parent=19 // pred_check
          %p383 = pneg %p103
        $region64: #{gprgnn_forward.10} parent=19 // pred_check_branch
          %385 = sbr.rel (%p383) target = $region66
        $region65: #{gprgnn_forward.10} parent=19 // pred_region
          %s386 = smul.u32 32, %s24
          %p387 = scmp.lt.s32.totalorder %s386, 63
          %s388 = scalar_select %p387, %s386, 63
          %s389 = smul.addr %s388, 8
          %s390 = scalar_lea.vmem %s2, %s389
          %s391 = smul.u32 32, %s24
        $region66: #{gprgnn_forward.10} parent=19 // pred_fallthru
          _
      $region20: #{gprgnn_forward.10} parent=5 // pred_fallthru
        _
      %p392 = scmp.le.s32.totalorder 1, %s17
      %p393 = scmp.lt.s32.totalorder %s17, 5
      %p394 = pnand %p392, %p393
      %p395 = pneg %p394
      // Predicated region
      $region67: #{gprgnn_forward.10} parent=5 // pred_check
        _
      $region68: #{gprgnn_forward.10} parent=5 // pred_check_branch
        %397 = sbr.rel (%p394) target = $region70
      $region69: #{gprgnn_forward.10} parent=5 // pred_region
        %s398 = ssub.s32 %s17, 1
        %s399 = sand.u32 %s44, 1
        %s400 = sand.u32 %s44, 1
        %s401 = smul.addr %s400, 256
        %s402 = scalar_lea.vmem [#allocation4], %s401
        // Predicated region
        $region71: #{gprgnn_forward.10} parent=69 // pred_check
          %p403 = pneg %p57
        $region72: #{gprgnn_forward.10} parent=69 // pred_check_branch
          %405 = sbr.rel (%p403) target = $region74
        $region73: #{gprgnn_forward.10} parent=69 // pred_region
          _
        $region74: #{gprgnn_forward.10} parent=69 // pred_fallthru
          _
        %s406 = sand.u32 %s44, 1
        %s407 = sand.u32 %s44, 1
        %s408 = smul.addr %s407, 256
        %s409 = scalar_lea.vmem [#allocation4], %s408
        %p410 = pneg %p57
        %p411 = pneg %p54
        %s412 = smul.u32 32, %s27
        %p413 = scmp.lt.s32.totalorder %s412, 63
        %s414 = scalar_select %p413, %s412, 63
        %s415 = smul.addr %s414, 4
        %s416 = scalar_lea.vmem %s1, %s415
        %p417 = pneg %p83
        %p418 = pneg %p80
        %s419 = smul.u32 32, %s26
        %p420 = scmp.lt.s32.totalorder %s419, 63
        %s421 = scalar_select %p420, %s419, 63
        %s422 = smul.addr %s421, 8
        %s423 = scalar_lea.vmem %s2, %s422
        %p424 = pneg %p109
        %p425 = pneg %p106
        %p426 = pneg %p130
        %p427 = pneg %p127
        %p428 = pneg %p156
        %p429 = pneg %p153
        %s430 = sand.u32 %s143, 1
        %s431 = scalar_lea.sflag [#allocation6], %s430
        %s432 = sand.u32 %s143, 1
        %s433 = smul.addr %s432, 128
        %s434 = scalar_lea.vmem [#allocation5], %s433
        %p435 = pneg %p182
        %p436 = pneg %p179
        %s437 = smul.u32 32, %s26
        %p438 = scmp.lt.s32.totalorder %s437, 63
        %s439 = scalar_select %p438, %s437, 63
        %s440 = smul.addr %s439, 8
        %s441 = scalar_lea.vmem %s5, %s440
        %s442 = smul.u32 32, %s26
        %s443 = smul.u32 2, %s27
        %s444 = smul.u32 32, %s27
        %p445 = scmp.lt.s32.totalorder %s444, 63
        %s446 = scalar_select %p445, %s444, 63
        %s447 = smul.addr %s446, 4
        %s448 = scalar_lea.vmem %s1, %s447
        %s449 = smul.u32 32, %s27
        %s450 = smul.u32 32, %s26
        %p451 = scmp.lt.s32.totalorder %s450, 63
        %s452 = scalar_select %p451, %s450, 63
        %s453 = smul.addr %s452, 8
        %s454 = scalar_lea.vmem %s2, %s453
        %s455 = smul.u32 32, %s26
        %s456 = smul.u32 32, %s26
        %s457 = smul.u32 32, %s26
        %p458 = scmp.lt.s32.totalorder %s457, 63
        %s459 = scalar_select %p458, %s457, 63
        %s460 = smul.addr %s459, 8
        %s461 = scalar_lea.vmem %s5, %s460
        %s462 = smul.u32 32, %s26
        %p463 = scmp.eq.s32.totalorder %s27, 0
        // Predicated region
        $region75: #{gprgnn_forward.10} parent=69 // pred_check
          %p464 = pneg %p463
        $region76: #{gprgnn_forward.10} parent=69 // pred_check_branch
          %466 = sbr.rel (%p464) target = $region78
        $region77: #{gprgnn_forward.10} parent=69 // pred_region
          %467 = vst [vmem:[#allocation2] sm:$0xff] 0.0
          %468 = vst [vmem:[#allocation2 + $0x8] sm:$0xff] 0.0
          %469 = vst [vmem:[#allocation2 + $0x10] sm:$0xff] 0.0
          %470 = vst [vmem:[#allocation2 + $0x18] sm:$0xff] 0.0
          %471 = vst [vmem:[#allocation2 + $0x20] sm:$0xff] 0.0
          %472 = vst [vmem:[#allocation2 + $0x28] sm:$0xff] 0.0
          %473 = vst [vmem:[#allocation2 + $0x30] sm:$0xff] 0.0
          %474 = vst [vmem:[#allocation2 + $0x38] sm:$0xff] 0.0
          %475 = vst [vmem:[#allocation2 + $0x40] sm:$0xff] 0.0
          %476 = vst [vmem:[#allocation2 + $0x48] sm:$0xff] 0.0
          %477 = vst [vmem:[#allocation2 + $0x50] sm:$0xff] 0.0
          %478 = vst [vmem:[#allocation2 + $0x58] sm:$0xff] 0.0
          %479 = vst [vmem:[#allocation2 + $0x60] sm:$0xff] 0.0
          %480 = vst [vmem:[#allocation2 + $0x68] sm:$0xff] 0.0
          %481 = vst [vmem:[#allocation2 + $0x70] sm:$0xff] 0.0
          %482 = vst [vmem:[#allocation2 + $0x78] sm:$0xff] 0.0
          %483 = vst [vmem:[#allocation2 + $0x80] sm:$0xff] 0.0
          %484 = vst [vmem:[#allocation2 + $0x88] sm:$0xff] 0.0
          %485 = vst [vmem:[#allocation2 + $0x90] sm:$0xff] 0.0
          %486 = vst [vmem:[#allocation2 + $0x98] sm:$0xff] 0.0
          %487 = vst [vmem:[#allocation2 + $0xa0] sm:$0xff] 0.0
          %488 = vst [vmem:[#allocation2 + $0xa8] sm:$0xff] 0.0
          %489 = vst [vmem:[#allocation2 + $0xb0] sm:$0xff] 0.0
          %490 = vst [vmem:[#allocation2 + $0xb8] sm:$0xff] 0.0
          %491 = vst [vmem:[#allocation2 + $0xc0] sm:$0xff] 0.0
          %492 = vst [vmem:[#allocation2 + $0xc8] sm:$0xff] 0.0
          %493 = vst [vmem:[#allocation2 + $0xd0] sm:$0xff] 0.0
          %494 = vst [vmem:[#allocation2 + $0xd8] sm:$0xff] 0.0
          %495 = vst [vmem:[#allocation2 + $0xe0] sm:$0xff] 0.0
          %496 = vst [vmem:[#allocation2 + $0xe8] sm:$0xff] 0.0
          %497 = vst [vmem:[#allocation2 + $0xf0] sm:$0xff] 0.0
          %498 = vst [vmem:[#allocation2 + $0xf8] sm:$0xff] 0.0
        $region78: #{gprgnn_forward.10} parent=69 // pred_fallthru
          _
        %v499 = vld [vmem:[#allocation2] sm:$0xff]
        %v500 = vld [vmem:[#allocation2 + $0x8] sm:$0xff]
        %v501 = vld [vmem:[#allocation2 + $0x10] sm:$0xff]
        %v502 = vld [vmem:[#allocation2 + $0x18] sm:$0xff]
        %v503 = vld [vmem:[#allocation2 + $0x20] sm:$0xff]
        %v504 = vld [vmem:[#allocation2 + $0x28] sm:$0xff]
        %v505 = vld [vmem:[#allocation2 + $0x30] sm:$0xff]
        %v506 = vld [vmem:[#allocation2 + $0x38] sm:$0xff]
        %v507 = vld [vmem:[#allocation2 + $0x40] sm:$0xff]
        %v508 = vld [vmem:[#allocation2 + $0x48] sm:$0xff]
        %v509 = vld [vmem:[#allocation2 + $0x50] sm:$0xff]
        %v510 = vld [vmem:[#allocation2 + $0x58] sm:$0xff]
        %v511 = vld [vmem:[#allocation2 + $0x60] sm:$0xff]
        %v512 = vld [vmem:[#allocation2 + $0x68] sm:$0xff]
        %v513 = vld [vmem:[#allocation2 + $0x70] sm:$0xff]
        %v514 = vld [vmem:[#allocation2 + $0x78] sm:$0xff]
        %v515 = vld [vmem:[#allocation2 + $0x80] sm:$0xff]
        %v516 = vld [vmem:[#allocation2 + $0x88] sm:$0xff]
        %v517 = vld [vmem:[#allocation2 + $0x90] sm:$0xff]
        %v518 = vld [vmem:[#allocation2 + $0x98] sm:$0xff]
        %v519 = vld [vmem:[#allocation2 + $0xa0] sm:$0xff]
        %v520 = vld [vmem:[#allocation2 + $0xa8] sm:$0xff]
        %v521 = vld [vmem:[#allocation2 + $0xb0] sm:$0xff]
        %v522 = vld [vmem:[#allocation2 + $0xb8] sm:$0xff]
        %v523 = vld [vmem:[#allocation2 + $0xc0] sm:$0xff]
        %v524 = vld [vmem:[#allocation2 + $0xc8] sm:$0xff]
        %v525 = vld [vmem:[#allocation2 + $0xd0] sm:$0xff]
        %v526 = vld [vmem:[#allocation2 + $0xd8] sm:$0xff]
        %v527 = vld [vmem:[#allocation2 + $0xe0] sm:$0xff]
        %v528 = vld [vmem:[#allocation2 + $0xe8] sm:$0xff]
        %v529 = vld [vmem:[#allocation2 + $0xf0] sm:$0xff]
        %v530 = vld [vmem:[#allocation2 + $0xf8] sm:$0xff]
        %v531 = vld [vmem:[%s402] sm:$0xff]
        %v532 = vld [vmem:[%s402 + $0x8] sm:$0xff]
        %v533 = vld [vmem:[%s402 + $0x10] sm:$0xff]
        %v534 = vld [vmem:[%s402 + $0x18] sm:$0xff]
        %v535 = vld [vmem:[%s402 + $0x20] sm:$0xff]
        %v536 = vld [vmem:[%s402 + $0x28] sm:$0xff]
        %v537 = vld [vmem:[%s402 + $0x30] sm:$0xff]
        %v538 = vld [vmem:[%s402 + $0x38] sm:$0xff]
        %v539 = vld [vmem:[%s402 + $0x40] sm:$0xff]
        %v540 = vld [vmem:[%s402 + $0x48] sm:$0xff]
        %v541 = vld [vmem:[%s402 + $0x50] sm:$0xff]
        %v542 = vld [vmem:[%s402 + $0x58] sm:$0xff]
        %v543 = vld [vmem:[%s402 + $0x60] sm:$0xff]
        %v544 = vld [vmem:[%s402 + $0x68] sm:$0xff]
        %v545 = vld [vmem:[%s402 + $0x70] sm:$0xff]
        %v546 = vld [vmem:[%s402 + $0x78] sm:$0xff]
        %v547 = vld [vmem:[%s402 + $0x80] sm:$0xff]
        %v548 = vld [vmem:[%s402 + $0x88] sm:$0xff]
        %v549 = vld [vmem:[%s402 + $0x90] sm:$0xff]
        %v550 = vld [vmem:[%s402 + $0x98] sm:$0xff]
        %v551 = vld [vmem:[%s402 + $0xa0] sm:$0xff]
        %v552 = vld [vmem:[%s402 + $0xa8] sm:$0xff]
        %v553 = vld [vmem:[%s402 + $0xb0] sm:$0xff]
        %v554 = vld [vmem:[%s402 + $0xb8] sm:$0xff]
        %v555 = vld [vmem:[%s402 + $0xc0] sm:$0xff]
        %v556 = vld [vmem:[%s402 + $0xc8] sm:$0xff]
        %v557 = vld [vmem:[%s402 + $0xd0] sm:$0xff]
        %v558 = vld [vmem:[%s402 + $0xd8] sm:$0xff]
        %v559 = vld [vmem:[%s402 + $0xe0] sm:$0xff]
        %v560 = vld [vmem:[%s402 + $0xe8] sm:$0xff]
        %v561 = vld [vmem:[%s402 + $0xf0] sm:$0xff]
        %v562 = vld [vmem:[%s402 + $0xf8] sm:$0xff]
        %v563 = vld [vmem:[%s448] sm:$0xf]
        %v564 = vld [vmem:[%s448 + $0x4] sm:$0xf]
        %v565 = vld [vmem:[%s448 + $0x8] sm:$0xf]
        %v566 = vld [vmem:[%s448 + $0xc] sm:$0xf]
        %v567 = vld [vmem:[%s448 + $0x10] sm:$0xf]
        %v568 = vld [vmem:[%s448 + $0x14] sm:$0xf]
        %v569 = vld [vmem:[%s448 + $0x18] sm:$0xf]
        %v570 = vld [vmem:[%s448 + $0x1c] sm:$0xf]
        %v571 = vld [vmem:[%s448 + $0x20] sm:$0xf]
        %v572 = vld [vmem:[%s448 + $0x24] sm:$0xf]
        %v573 = vld [vmem:[%s448 + $0x28] sm:$0xf]
        %v574 = vld [vmem:[%s448 + $0x2c] sm:$0xf]
        %v575 = vld [vmem:[%s448 + $0x30] sm:$0xf]
        %v576 = vld [vmem:[%s448 + $0x34] sm:$0xf]
        %v577 = vld [vmem:[%s448 + $0x38] sm:$0xf]
        %v578 = vld [vmem:[%s448 + $0x3c] sm:$0xf]
        %v579 = vld [vmem:[%s448 + $0x40] sm:$0xf]
        %v580 = vld [vmem:[%s448 + $0x44] sm:$0xf]
        %v581 = vld [vmem:[%s448 + $0x48] sm:$0xf]
        %v582 = vld [vmem:[%s448 + $0x4c] sm:$0xf]
        %v583 = vld [vmem:[%s448 + $0x50] sm:$0xf]
        %v584 = vld [vmem:[%s448 + $0x54] sm:$0xf]
        %v585 = vld [vmem:[%s448 + $0x58] sm:$0xf]
        %v586 = vld [vmem:[%s448 + $0x5c] sm:$0xf]
        %v587 = vld [vmem:[%s448 + $0x60] sm:$0xf]
        %v588 = vld [vmem:[%s448 + $0x64] sm:$0xf]
        %v589 = vld [vmem:[%s448 + $0x68] sm:$0xf]
        %v590 = vld [vmem:[%s448 + $0x6c] sm:$0xf]
        %v591 = vld [vmem:[%s448 + $0x70] sm:$0xf]
        %v592 = vld [vmem:[%s448 + $0x74] sm:$0xf]
        %v593 = vld [vmem:[%s448 + $0x78] sm:$0xf]
        %v594 = vld [vmem:[%s448 + $0x7c] sm:$0xf]
        %v627 = vunpack.c.l.b16 %v531
        %v628 = vunpack.c.h.b16 %v531
        %v629 = vunpack.c.l.b16 %v532
        %v630 = vunpack.c.h.b16 %v532
        %v631 = vunpack.c.l.b16 %v533
        %v632 = vunpack.c.h.b16 %v533
        %v633 = vunpack.c.l.b16 %v534
        %v634 = vunpack.c.h.b16 %v534
        %v635 = vunpack.c.l.b16 %v535
        %v636 = vunpack.c.h.b16 %v535
        %v637 = vunpack.c.l.b16 %v536
        %v638 = vunpack.c.h.b16 %v536
        %v639 = vunpack.c.l.b16 %v537
        %v640 = vunpack.c.h.b16 %v537
        %v641 = vunpack.c.l.b16 %v538
        %v642 = vunpack.c.h.b16 %v538
        %v643 = vunpack.c.l.b16 %v539
        %v644 = vunpack.c.h.b16 %v539
        %v645 = vunpack.c.l.b16 %v540
        %v646 = vunpack.c.h.b16 %v540
        %v647 = vunpack.c.l.b16 %v541
        %v648 = vunpack.c.h.b16 %v541
        %v649 = vunpack.c.l.b16 %v542
        %v650 = vunpack.c.h.b16 %v542
        %v651 = vunpack.c.l.b16 %v543
        %v652 = vunpack.c.h.b16 %v543
        %v653 = vunpack.c.l.b16 %v544
        %v654 = vunpack.c.h.b16 %v544
        %v655 = vunpack.c.l.b16 %v545
        %v656 = vunpack.c.h.b16 %v545
        %v657 = vunpack.c.l.b16 %v546
        %v658 = vunpack.c.h.b16 %v546
        %v659 = vunpack.c.l.b16 %v547
        %v660 = vunpack.c.h.b16 %v547
        %v661 = vunpack.c.l.b16 %v548
        %v662 = vunpack.c.h.b16 %v548
        %v663 = vunpack.c.l.b16 %v549
        %v664 = vunpack.c.h.b16 %v549
        %v665 = vunpack.c.l.b16 %v550
        %v666 = vunpack.c.h.b16 %v550
        %v667 = vunpack.c.l.b16 %v551
        %v668 = vunpack.c.h.b16 %v551
        %v669 = vunpack.c.l.b16 %v552
        %v670 = vunpack.c.h.b16 %v552
        %v671 = vunpack.c.l.b16 %v553
        %v672 = vunpack.c.h.b16 %v553
        %v673 = vunpack.c.l.b16 %v554
        %v674 = vunpack.c.h.b16 %v554
        %v675 = vunpack.c.l.b16 %v555
        %v676 = vunpack.c.h.b16 %v555
        %v677 = vunpack.c.l.b16 %v556
        %v678 = vunpack.c.h.b16 %v556
        %v679 = vunpack.c.l.b16 %v557
        %v680 = vunpack.c.h.b16 %v557
        %v681 = vunpack.c.l.b16 %v558
        %v682 = vunpack.c.h.b16 %v558
        %v683 = vunpack.c.l.b16 %v559
        %v684 = vunpack.c.h.b16 %v559
        %v685 = vunpack.c.l.b16 %v560
        %v686 = vunpack.c.h.b16 %v560
        %v687 = vunpack.c.l.b16 %v561
        %v688 = vunpack.c.h.b16 %v561
        %v689 = vunpack.c.l.b16 %v562
        %v690 = vunpack.c.h.b16 %v562
        %v691 = vpack.c.b16 %v629, %v627
        %v692 = vpack.c.b16 %v630, %v628
        %v693 = vpack.c.b16 %v633, %v631
        %v694 = vpack.c.b16 %v634, %v632
        %v695 = vpack.c.b16 %v637, %v635
        %v696 = vpack.c.b16 %v638, %v636
        %v697 = vpack.c.b16 %v641, %v639
        %v698 = vpack.c.b16 %v642, %v640
        %v699 = vpack.c.b16 %v645, %v643
        %v700 = vpack.c.b16 %v646, %v644
        %v701 = vpack.c.b16 %v649, %v647
        %v702 = vpack.c.b16 %v650, %v648
        %v703 = vpack.c.b16 %v653, %v651
        %v704 = vpack.c.b16 %v654, %v652
        %v705 = vpack.c.b16 %v657, %v655
        %v706 = vpack.c.b16 %v658, %v656
        %v707 = vpack.c.b16 %v661, %v659
        %v708 = vpack.c.b16 %v662, %v660
        %v709 = vpack.c.b16 %v665, %v663
        %v710 = vpack.c.b16 %v666, %v664
        %v711 = vpack.c.b16 %v669, %v667
        %v712 = vpack.c.b16 %v670, %v668
        %v713 = vpack.c.b16 %v673, %v671
        %v714 = vpack.c.b16 %v674, %v672
        %v715 = vpack.c.b16 %v677, %v675
        %v716 = vpack.c.b16 %v678, %v676
        %v717 = vpack.c.b16 %v681, %v679
        %v718 = vpack.c.b16 %v682, %v680
        %v719 = vpack.c.b16 %v685, %v683
        %v720 = vpack.c.b16 %v686, %v684
        %v721 = vpack.c.b16 %v689, %v687
        %v722 = vpack.c.b16 %v690, %v688
        %v787 = vunpack.c.l.b16 %v563
        %v788 = vunpack.c.l.b16 %v564
        %v789 = vunpack.c.l.b16 %v565
        %v790 = vunpack.c.l.b16 %v566
        %v791 = vunpack.c.l.b16 %v567
        %v792 = vunpack.c.l.b16 %v568
        %v793 = vunpack.c.l.b16 %v569
        %v794 = vunpack.c.l.b16 %v570
        %v795 = vunpack.c.l.b16 %v571
        %v796 = vunpack.c.l.b16 %v572
        %v797 = vunpack.c.l.b16 %v573
        %v798 = vunpack.c.l.b16 %v574
        %v799 = vunpack.c.l.b16 %v575
        %v800 = vunpack.c.l.b16 %v576
        %v801 = vunpack.c.l.b16 %v577
        %v802 = vunpack.c.l.b16 %v578
        %v803 = vunpack.c.l.b16 %v579
        %v804 = vunpack.c.l.b16 %v580
        %v805 = vunpack.c.l.b16 %v581
        %v806 = vunpack.c.l.b16 %v582
        %v807 = vunpack.c.l.b16 %v583
        %v808 = vunpack.c.l.b16 %v584
        %v809 = vunpack.c.l.b16 %v585
        %v810 = vunpack.c.l.b16 %v586
        %v811 = vunpack.c.l.b16 %v587
        %v812 = vunpack.c.l.b16 %v588
        %v813 = vunpack.c.l.b16 %v589
        %v814 = vunpack.c.l.b16 %v590
        %v815 = vunpack.c.l.b16 %v591
        %v816 = vunpack.c.l.b16 %v592
        %v817 = vunpack.c.l.b16 %v593
        %v818 = vunpack.c.l.b16 %v594
        %v819 = vpack.c.b16 %v788, %v787
        %v820 = vpack.c.b16 %v790, %v789
        %v821 = vpack.c.b16 %v792, %v791
        %v822 = vpack.c.b16 %v794, %v793
        %v823 = vpack.c.b16 %v796, %v795
        %v824 = vpack.c.b16 %v798, %v797
        %v825 = vpack.c.b16 %v800, %v799
        %v826 = vpack.c.b16 %v802, %v801
        %v827 = vpack.c.b16 %v804, %v803
        %v828 = vpack.c.b16 %v806, %v805
        %v829 = vpack.c.b16 %v808, %v807
        %v830 = vpack.c.b16 %v810, %v809
        %v831 = vpack.c.b16 %v812, %v811
        %v832 = vpack.c.b16 %v814, %v813
        %v833 = vpack.c.b16 %v816, %v815
        %v834 = vpack.c.b16 %v818, %v817
        %851 = vmatpush.bf16.msra.mxu0 %v826
        %852 = vmatpush.bf16.msra.mxu0 %v825
        %853 = vmatpush.bf16.msra.mxu0 %v824
        %854 = vmatpush.bf16.msra.mxu0 %v823
        %855 = vmatpush.bf16.msra.mxu0 %v822
        %856 = vmatpush.bf16.msra.mxu0 %v821
        %857 = vmatpush.bf16.msra.mxu0 %v820
        %858 = vmatpush.bf16.msra.mxu0 %v819
        %859 = vmatmul.bf16.gmra.mxu0 %v691
        %v860 = vpop.f32.mrf.mxu0
        %v861 = vadd.f32 0.0, %v860
        %v862 = vpop.f32.mrf.mxu0
        %v863 = vadd.f32 0.0, %v862
        %864 = vmatmul.bf16.gmra.mxu0 %v693
        %v865 = vpop.f32.mrf.mxu0
        %v866 = vadd.f32 0.0, %v865
        %v867 = vpop.f32.mrf.mxu0
        %v868 = vadd.f32 0.0, %v867
        %869 = vmatmul.bf16.gmra.mxu0 %v695
        %v870 = vpop.f32.mrf.mxu0
        %v871 = vadd.f32 0.0, %v870
        %v872 = vpop.f32.mrf.mxu0
        %v873 = vadd.f32 0.0, %v872
        %874 = vmatmul.bf16.gmra.mxu0 %v697
        %v875 = vpop.f32.mrf.mxu0
        %v876 = vadd.f32 0.0, %v875
        %v877 = vpop.f32.mrf.mxu0
        %v878 = vadd.f32 0.0, %v877
        %879 = vmatmul.bf16.gmra.mxu0 %v699
        %v880 = vpop.f32.mrf.mxu0
        %v881 = vadd.f32 0.0, %v880
        %v882 = vpop.f32.mrf.mxu0
        %v883 = vadd.f32 0.0, %v882
        %884 = vmatmul.bf16.gmra.mxu0 %v701
        %v885 = vpop.f32.mrf.mxu0
        %v886 = vadd.f32 0.0, %v885
        %v887 = vpop.f32.mrf.mxu0
        %v888 = vadd.f32 0.0, %v887
        %889 = vmatmul.bf16.gmra.mxu0 %v703
        %v890 = vpop.f32.mrf.mxu0
        %v891 = vadd.f32 0.0, %v890
        %v892 = vpop.f32.mrf.mxu0
        %v893 = vadd.f32 0.0, %v892
        %894 = vmatmul.bf16.gmra.mxu0 %v705
        %v895 = vpop.f32.mrf.mxu0
        %v896 = vadd.f32 0.0, %v895
        %v897 = vpop.f32.mrf.mxu0
        %v898 = vadd.f32 0.0, %v897
        %899 = vmatmul.bf16.gmra.mxu0 %v707
        %v900 = vpop.f32.mrf.mxu0
        %v901 = vadd.f32 0.0, %v900
        %v902 = vpop.f32.mrf.mxu0
        %v903 = vadd.f32 0.0, %v902
        %904 = vmatmul.bf16.gmra.mxu0 %v709
        %v905 = vpop.f32.mrf.mxu0
        %v906 = vadd.f32 0.0, %v905
        %v907 = vpop.f32.mrf.mxu0
        %v908 = vadd.f32 0.0, %v907
        %909 = vmatmul.bf16.gmra.mxu0 %v711
        %v910 = vpop.f32.mrf.mxu0
        %v911 = vadd.f32 0.0, %v910
        %v912 = vpop.f32.mrf.mxu0
        %v913 = vadd.f32 0.0, %v912
        %914 = vmatmul.bf16.gmra.mxu0 %v713
        %v915 = vpop.f32.mrf.mxu0
        %v916 = vadd.f32 0.0, %v915
        %v917 = vpop.f32.mrf.mxu0
        %v918 = vadd.f32 0.0, %v917
        %919 = vmatmul.bf16.gmra.mxu0 %v715
        %v920 = vpop.f32.mrf.mxu0
        %v921 = vadd.f32 0.0, %v920
        %v922 = vpop.f32.mrf.mxu0
        %v923 = vadd.f32 0.0, %v922
        %924 = vmatmul.bf16.gmra.mxu0 %v717
        %v925 = vpop.f32.mrf.mxu0
        %v926 = vadd.f32 0.0, %v925
        %v927 = vpop.f32.mrf.mxu0
        %v928 = vadd.f32 0.0, %v927
        %929 = vmatmul.bf16.gmra.mxu0 %v719
        %v930 = vpop.f32.mrf.mxu0
        %v931 = vadd.f32 0.0, %v930
        %v932 = vpop.f32.mrf.mxu0
        %v933 = vadd.f32 0.0, %v932
        %934 = vmatmul.bf16.gmra.mxu0 %v721
        %v935 = vpop.f32.mrf.mxu0
        %v936 = vadd.f32 0.0, %v935
        %v937 = vpop.f32.mrf.mxu0
        %v938 = vadd.f32 0.0, %v937
        %939 = vdwg.mxu0
        %940 = vmatpush.bf16.msra.mxu0 %v834
        %941 = vmatpush.bf16.msra.mxu0 %v833
        %942 = vmatpush.bf16.msra.mxu0 %v832
        %943 = vmatpush.bf16.msra.mxu0 %v831
        %944 = vmatpush.bf16.msra.mxu0 %v830
        %945 = vmatpush.bf16.msra.mxu0 %v829
        %946 = vmatpush.bf16.msra.mxu0 %v828
        %947 = vmatpush.bf16.msra.mxu0 %v827
        %948 = vmatmul.bf16.gmra.mxu0 %v692
        %v949 = vpop.f32.mrf.mxu0
        %v950 = vadd.f32 %v861, %v949
        %v951 = vpop.f32.mrf.mxu0
        %v952 = vadd.f32 %v863, %v951
        %953 = vmatmul.bf16.gmra.mxu0 %v694
        %v954 = vpop.f32.mrf.mxu0
        %v955 = vadd.f32 %v866, %v954
        %v956 = vpop.f32.mrf.mxu0
        %v957 = vadd.f32 %v868, %v956
        %958 = vmatmul.bf16.gmra.mxu0 %v696
        %v959 = vpop.f32.mrf.mxu0
        %v960 = vadd.f32 %v871, %v959
        %v961 = vpop.f32.mrf.mxu0
        %v962 = vadd.f32 %v873, %v961
        %963 = vmatmul.bf16.gmra.mxu0 %v698
        %v964 = vpop.f32.mrf.mxu0
        %v965 = vadd.f32 %v876, %v964
        %v966 = vpop.f32.mrf.mxu0
        %v967 = vadd.f32 %v878, %v966
        %968 = vmatmul.bf16.gmra.mxu0 %v700
        %v969 = vpop.f32.mrf.mxu0
        %v970 = vadd.f32 %v881, %v969
        %v971 = vpop.f32.mrf.mxu0
        %v972 = vadd.f32 %v883, %v971
        %973 = vmatmul.bf16.gmra.mxu0 %v702
        %v974 = vpop.f32.mrf.mxu0
        %v975 = vadd.f32 %v886, %v974
        %v976 = vpop.f32.mrf.mxu0
        %v977 = vadd.f32 %v888, %v976
        %978 = vmatmul.bf16.gmra.mxu0 %v704
        %v979 = vpop.f32.mrf.mxu0
        %v980 = vadd.f32 %v891, %v979
        %v981 = vpop.f32.mrf.mxu0
        %v982 = vadd.f32 %v893, %v981
        %983 = vmatmul.bf16.gmra.mxu0 %v706
        %v984 = vpop.f32.mrf.mxu0
        %v985 = vadd.f32 %v896, %v984
        %v986 = vpop.f32.mrf.mxu0
        %v987 = vadd.f32 %v898, %v986
        %988 = vmatmul.bf16.gmra.mxu0 %v708
        %v989 = vpop.f32.mrf.mxu0
        %v990 = vadd.f32 %v901, %v989
        %v991 = vpop.f32.mrf.mxu0
        %v992 = vadd.f32 %v903, %v991
        %993 = vmatmul.bf16.gmra.mxu0 %v710
        %v994 = vpop.f32.mrf.mxu0
        %v995 = vadd.f32 %v906, %v994
        %v996 = vpop.f32.mrf.mxu0
        %v997 = vadd.f32 %v908, %v996
        %998 = vmatmul.bf16.gmra.mxu0 %v712
        %v999 = vpop.f32.mrf.mxu0
        %v1000 = vadd.f32 %v911, %v999
        %v1001 = vpop.f32.mrf.mxu0
        %v1002 = vadd.f32 %v913, %v1001
        %1003 = vmatmul.bf16.gmra.mxu0 %v714
        %v1004 = vpop.f32.mrf.mxu0
        %v1005 = vadd.f32 %v916, %v1004
        %v1006 = vpop.f32.mrf.mxu0
        %v1007 = vadd.f32 %v918, %v1006
        %1008 = vmatmul.bf16.gmra.mxu0 %v716
        %v1009 = vpop.f32.mrf.mxu0
        %v1010 = vadd.f32 %v921, %v1009
        %v1011 = vpop.f32.mrf.mxu0
        %v1012 = vadd.f32 %v923, %v1011
        %1013 = vmatmul.bf16.gmra.mxu0 %v718
        %v1014 = vpop.f32.mrf.mxu0
        %v1015 = vadd.f32 %v926, %v1014
        %v1016 = vpop.f32.mrf.mxu0
        %v1017 = vadd.f32 %v928, %v1016
        %1018 = vmatmul.bf16.gmra.mxu0 %v720
        %v1019 = vpop.f32.mrf.mxu0
        %v1020 = vadd.f32 %v931, %v1019
        %v1021 = vpop.f32.mrf.mxu0
        %v1022 = vadd.f32 %v933, %v1021
        %1023 = vmatmul.bf16.gmra.mxu0 %v722
        %v1024 = vpop.f32.mrf.mxu0
        %v1025 = vadd.f32 %v936, %v1024
        %v1026 = vpop.f32.mrf.mxu0
        %v1027 = vadd.f32 %v938, %v1026
        %1028 = vdwg.mxu0
        %v1029 = vadd.f32 %v499, %v950
        %v1030 = vadd.f32 %v500, %v952
        %v1031 = vadd.f32 %v501, %v955
        %v1032 = vadd.f32 %v502, %v957
        %v1033 = vadd.f32 %v503, %v960
        %v1034 = vadd.f32 %v504, %v962
        %v1035 = vadd.f32 %v505, %v965
        %v1036 = vadd.f32 %v506, %v967
        %v1037 = vadd.f32 %v507, %v970
        %v1038 = vadd.f32 %v508, %v972
        %v1039 = vadd.f32 %v509, %v975
        %v1040 = vadd.f32 %v510, %v977
        %v1041 = vadd.f32 %v511, %v980
        %v1042 = vadd.f32 %v512, %v982
        %v1043 = vadd.f32 %v513, %v985
        %v1044 = vadd.f32 %v514, %v987
        %v1045 = vadd.f32 %v515, %v990
        %v1046 = vadd.f32 %v516, %v992
        %v1047 = vadd.f32 %v517, %v995
        %v1048 = vadd.f32 %v518, %v997
        %v1049 = vadd.f32 %v519, %v1000
        %v1050 = vadd.f32 %v520, %v1002
        %v1051 = vadd.f32 %v521, %v1005
        %v1052 = vadd.f32 %v522, %v1007
        %v1053 = vadd.f32 %v523, %v1010
        %v1054 = vadd.f32 %v524, %v1012
        %v1055 = vadd.f32 %v525, %v1015
        %v1056 = vadd.f32 %v526, %v1017
        %v1057 = vadd.f32 %v527, %v1020
        %v1058 = vadd.f32 %v528, %v1022
        %v1059 = vadd.f32 %v529, %v1025
        %v1060 = vadd.f32 %v530, %v1027
        %1061 = vst [vmem:[#allocation2] sm:$0xff] %v1029
        %1062 = vst [vmem:[#allocation2 + $0x8] sm:$0xff] %v1030
        %1063 = vst [vmem:[#allocation2 + $0x10] sm:$0xff] %v1031
        %1064 = vst [vmem:[#allocation2 + $0x18] sm:$0xff] %v1032
        %1065 = vst [vmem:[#allocation2 + $0x20] sm:$0xff] %v1033
        %1066 = vst [vmem:[#allocation2 + $0x28] sm:$0xff] %v1034
        %1067 = vst [vmem:[#allocation2 + $0x30] sm:$0xff] %v1035
        %1068 = vst [vmem:[#allocation2 + $0x38] sm:$0xff] %v1036
        %1069 = vst [vmem:[#allocation2 + $0x40] sm:$0xff] %v1037
        %1070 = vst [vmem:[#allocation2 + $0x48] sm:$0xff] %v1038
        %1071 = vst [vmem:[#allocation2 + $0x50] sm:$0xff] %v1039
        %1072 = vst [vmem:[#allocation2 + $0x58] sm:$0xff] %v1040
        %1073 = vst [vmem:[#allocation2 + $0x60] sm:$0xff] %v1041
        %1074 = vst [vmem:[#allocation2 + $0x68] sm:$0xff] %v1042
        %1075 = vst [vmem:[#allocation2 + $0x70] sm:$0xff] %v1043
        %1076 = vst [vmem:[#allocation2 + $0x78] sm:$0xff] %v1044
        %1077 = vst [vmem:[#allocation2 + $0x80] sm:$0xff] %v1045
        %1078 = vst [vmem:[#allocation2 + $0x88] sm:$0xff] %v1046
        %1079 = vst [vmem:[#allocation2 + $0x90] sm:$0xff] %v1047
        %1080 = vst [vmem:[#allocation2 + $0x98] sm:$0xff] %v1048
        %1081 = vst [vmem:[#allocation2 + $0xa0] sm:$0xff] %v1049
        %1082 = vst [vmem:[#allocation2 + $0xa8] sm:$0xff] %v1050
        %1083 = vst [vmem:[#allocation2 + $0xb0] sm:$0xff] %v1051
        %1084 = vst [vmem:[#allocation2 + $0xb8] sm:$0xff] %v1052
        %1085 = vst [vmem:[#allocation2 + $0xc0] sm:$0xff] %v1053
        %1086 = vst [vmem:[#allocation2 + $0xc8] sm:$0xff] %v1054
        %1087 = vst [vmem:[#allocation2 + $0xd0] sm:$0xff] %v1055
        %1088 = vst [vmem:[#allocation2 + $0xd8] sm:$0xff] %v1056
        %1089 = vst [vmem:[#allocation2 + $0xe0] sm:$0xff] %v1057
        %1090 = vst [vmem:[#allocation2 + $0xe8] sm:$0xff] %v1058
        %1091 = vst [vmem:[#allocation2 + $0xf0] sm:$0xff] %v1059
        %1092 = vst [vmem:[#allocation2 + $0xf8] sm:$0xff] %v1060
        %p1093 = scmp.eq.s32.totalorder %s27, 1
        // Predicated region
        $region79: #{gprgnn_forward.10} parent=69 // pred_check
          %p1094 = pneg %p1093
        $region80: #{gprgnn_forward.10} parent=69 // pred_check_branch
          %1096 = sbr.rel (%p1094) target = $region82
        $region81: #{gprgnn_forward.10} parent=69 // pred_region
          %v1097 = vld [vmem:[#allocation2] sm:$0xff]
          %v1098 = vld [vmem:[#allocation2 + $0x8] sm:$0xff]
          %v1099 = vld [vmem:[#allocation2 + $0x10] sm:$0xff]
          %v1100 = vld [vmem:[#allocation2 + $0x18] sm:$0xff]
          %v1101 = vld [vmem:[#allocation2 + $0x20] sm:$0xff]
          %v1102 = vld [vmem:[#allocation2 + $0x28] sm:$0xff]
          %v1103 = vld [vmem:[#allocation2 + $0x30] sm:$0xff]
          %v1104 = vld [vmem:[#allocation2 + $0x38] sm:$0xff]
          %v1105 = vld [vmem:[#allocation2 + $0x40] sm:$0xff]
          %v1106 = vld [vmem:[#allocation2 + $0x48] sm:$0xff]
          %v1107 = vld [vmem:[#allocation2 + $0x50] sm:$0xff]
          %v1108 = vld [vmem:[#allocation2 + $0x58] sm:$0xff]
          %v1109 = vld [vmem:[#allocation2 + $0x60] sm:$0xff]
          %v1110 = vld [vmem:[#allocation2 + $0x68] sm:$0xff]
          %v1111 = vld [vmem:[#allocation2 + $0x70] sm:$0xff]
          %v1112 = vld [vmem:[#allocation2 + $0x78] sm:$0xff]
          %v1113 = vld [vmem:[#allocation2 + $0x80] sm:$0xff]
          %v1114 = vld [vmem:[#allocation2 + $0x88] sm:$0xff]
          %v1115 = vld [vmem:[#allocation2 + $0x90] sm:$0xff]
          %v1116 = vld [vmem:[#allocation2 + $0x98] sm:$0xff]
          %v1117 = vld [vmem:[#allocation2 + $0xa0] sm:$0xff]
          %v1118 = vld [vmem:[#allocation2 + $0xa8] sm:$0xff]
          %v1119 = vld [vmem:[#allocation2 + $0xb0] sm:$0xff]
          %v1120 = vld [vmem:[#allocation2 + $0xb8] sm:$0xff]
          %v1121 = vld [vmem:[#allocation2 + $0xc0] sm:$0xff]
          %v1122 = vld [vmem:[#allocation2 + $0xc8] sm:$0xff]
          %v1123 = vld [vmem:[#allocation2 + $0xd0] sm:$0xff]
          %v1124 = vld [vmem:[#allocation2 + $0xd8] sm:$0xff]
          %v1125 = vld [vmem:[#allocation2 + $0xe0] sm:$0xff]
          %v1126 = vld [vmem:[#allocation2 + $0xe8] sm:$0xff]
          %v1127 = vld [vmem:[#allocation2 + $0xf0] sm:$0xff]
          %v1128 = vld [vmem:[#allocation2 + $0xf8] sm:$0xff]
          %v1129 = vpack.c.bf16 %v1097, %v1097
          %v1130 = vpack.c.bf16 %v1098, %v1098
          %v1131 = vpack.c.bf16 %v1099, %v1099
          %v1132 = vpack.c.bf16 %v1100, %v1100
          %v1133 = vpack.c.bf16 %v1101, %v1101
          %v1134 = vpack.c.bf16 %v1102, %v1102
          %v1135 = vpack.c.bf16 %v1103, %v1103
          %v1136 = vpack.c.bf16 %v1104, %v1104
          %v1137 = vpack.c.bf16 %v1105, %v1105
          %v1138 = vpack.c.bf16 %v1106, %v1106
          %v1139 = vpack.c.bf16 %v1107, %v1107
          %v1140 = vpack.c.bf16 %v1108, %v1108
          %v1141 = vpack.c.bf16 %v1109, %v1109
          %v1142 = vpack.c.bf16 %v1110, %v1110
          %v1143 = vpack.c.bf16 %v1111, %v1111
          %v1144 = vpack.c.bf16 %v1112, %v1112
          %v1145 = vpack.c.bf16 %v1113, %v1113
          %v1146 = vpack.c.bf16 %v1114, %v1114
          %v1147 = vpack.c.bf16 %v1115, %v1115
          %v1148 = vpack.c.bf16 %v1116, %v1116
          %v1149 = vpack.c.bf16 %v1117, %v1117
          %v1150 = vpack.c.bf16 %v1118, %v1118
          %v1151 = vpack.c.bf16 %v1119, %v1119
          %v1152 = vpack.c.bf16 %v1120, %v1120
          %v1153 = vpack.c.bf16 %v1121, %v1121
          %v1154 = vpack.c.bf16 %v1122, %v1122
          %v1155 = vpack.c.bf16 %v1123, %v1123
          %v1156 = vpack.c.bf16 %v1124, %v1124
          %v1157 = vpack.c.bf16 %v1125, %v1125
          %v1158 = vpack.c.bf16 %v1126, %v1126
          %v1159 = vpack.c.bf16 %v1127, %v1127
          %v1160 = vpack.c.bf16 %v1128, %v1128
          %1161 = vst [vmem:[%s434] sm:$0xf] %v1129
          %1162 = vst [vmem:[%s434 + $0x4] sm:$0xf] %v1130
          %1163 = vst [vmem:[%s434 + $0x8] sm:$0xf] %v1131
          %1164 = vst [vmem:[%s434 + $0xc] sm:$0xf] %v1132
          %1165 = vst [vmem:[%s434 + $0x10] sm:$0xf] %v1133
          %1166 = vst [vmem:[%s434 + $0x14] sm:$0xf] %v1134
          %1167 = vst [vmem:[%s434 + $0x18] sm:$0xf] %v1135
          %1168 = vst [vmem:[%s434 + $0x1c] sm:$0xf] %v1136
          %1169 = vst [vmem:[%s434 + $0x20] sm:$0xf] %v1137
          %1170 = vst [vmem:[%s434 + $0x24] sm:$0xf] %v1138
          %1171 = vst [vmem:[%s434 + $0x28] sm:$0xf] %v1139
          %1172 = vst [vmem:[%s434 + $0x2c] sm:$0xf] %v1140
          %1173 = vst [vmem:[%s434 + $0x30] sm:$0xf] %v1141
          %1174 = vst [vmem:[%s434 + $0x34] sm:$0xf] %v1142
          %1175 = vst [vmem:[%s434 + $0x38] sm:$0xf] %v1143
          %1176 = vst [vmem:[%s434 + $0x3c] sm:$0xf] %v1144
          %1177 = vst [vmem:[%s434 + $0x40] sm:$0xf] %v1145
          %1178 = vst [vmem:[%s434 + $0x44] sm:$0xf] %v1146
          %1179 = vst [vmem:[%s434 + $0x48] sm:$0xf] %v1147
          %1180 = vst [vmem:[%s434 + $0x4c] sm:$0xf] %v1148
          %1181 = vst [vmem:[%s434 + $0x50] sm:$0xf] %v1149
          %1182 = vst [vmem:[%s434 + $0x54] sm:$0xf] %v1150
          %1183 = vst [vmem:[%s434 + $0x58] sm:$0xf] %v1151
          %1184 = vst [vmem:[%s434 + $0x5c] sm:$0xf] %v1152
          %1185 = vst [vmem:[%s434 + $0x60] sm:$0xf] %v1153
          %1186 = vst [vmem:[%s434 + $0x64] sm:$0xf] %v1154
          %1187 = vst [vmem:[%s434 + $0x68] sm:$0xf] %v1155
          %1188 = vst [vmem:[%s434 + $0x6c] sm:$0xf] %v1156
          %1189 = vst [vmem:[%s434 + $0x70] sm:$0xf] %v1157
          %1190 = vst [vmem:[%s434 + $0x74] sm:$0xf] %v1158
          %1191 = vst [vmem:[%s434 + $0x78] sm:$0xf] %v1159
          %1192 = vst [vmem:[%s434 + $0x7c] sm:$0xf] %v1160
          %v1193 = vld [vmem:[%s454] sm:$0xff]
          %v1194 = vld [vmem:[%s454 + $0x8] sm:$0xff]
          %v1195 = vld [vmem:[%s454 + $0x10] sm:$0xff]
          %v1196 = vld [vmem:[%s454 + $0x18] sm:$0xff]
          %v1197 = vld [vmem:[%s454 + $0x20] sm:$0xff]
          %v1198 = vld [vmem:[%s454 + $0x28] sm:$0xff]
          %v1199 = vld [vmem:[%s454 + $0x30] sm:$0xff]
          %v1200 = vld [vmem:[%s454 + $0x38] sm:$0xff]
          %v1201 = vld [vmem:[%s454 + $0x40] sm:$0xff]
          %v1202 = vld [vmem:[%s454 + $0x48] sm:$0xff]
          %v1203 = vld [vmem:[%s454 + $0x50] sm:$0xff]
          %v1204 = vld [vmem:[%s454 + $0x58] sm:$0xff]
          %v1205 = vld [vmem:[%s454 + $0x60] sm:$0xff]
          %v1206 = vld [vmem:[%s454 + $0x68] sm:$0xff]
          %v1207 = vld [vmem:[%s454 + $0x70] sm:$0xff]
          %v1208 = vld [vmem:[%s454 + $0x78] sm:$0xff]
          %v1209 = vld [vmem:[%s454 + $0x80] sm:$0xff]
          %v1210 = vld [vmem:[%s454 + $0x88] sm:$0xff]
          %v1211 = vld [vmem:[%s454 + $0x90] sm:$0xff]
          %v1212 = vld [vmem:[%s454 + $0x98] sm:$0xff]
          %v1213 = vld [vmem:[%s454 + $0xa0] sm:$0xff]
          %v1214 = vld [vmem:[%s454 + $0xa8] sm:$0xff]
          %v1215 = vld [vmem:[%s454 + $0xb0] sm:$0xff]
          %v1216 = vld [vmem:[%s454 + $0xb8] sm:$0xff]
          %v1217 = vld [vmem:[%s454 + $0xc0] sm:$0xff]
          %v1218 = vld [vmem:[%s454 + $0xc8] sm:$0xff]
          %v1219 = vld [vmem:[%s454 + $0xd0] sm:$0xff]
          %v1220 = vld [vmem:[%s454 + $0xd8] sm:$0xff]
          %v1221 = vld [vmem:[%s454 + $0xe0] sm:$0xff]
          %v1222 = vld [vmem:[%s454 + $0xe8] sm:$0xff]
          %v1223 = vld [vmem:[%s454 + $0xf0] sm:$0xff]
          %v1224 = vld [vmem:[%s454 + $0xf8] sm:$0xff]
          %v1225 = vld [vmem:[#allocation3] sm:$0x1]
          %v1227 = vperm.slane %v1225, 0
          %1228 = vset.pattern.permute.xlu0 0
          %1229 = vperm.xlu0 %1228, %v1227
          %v1230 = vpop.permute.xlu0 %1229
          %v1232 = vmul.f32 %v1230, %v1097
          %v1233 = vmul.f32 %v1230, %v1098
          %v1234 = vmul.f32 %v1230, %v1099
          %v1235 = vmul.f32 %v1230, %v1100
          %v1236 = vmul.f32 %v1230, %v1101
          %v1237 = vmul.f32 %v1230, %v1102
          %v1238 = vmul.f32 %v1230, %v1103
          %v1239 = vmul.f32 %v1230, %v1104
          %v1240 = vmul.f32 %v1230, %v1105
          %v1241 = vmul.f32 %v1230, %v1106
          %v1242 = vmul.f32 %v1230, %v1107
          %v1243 = vmul.f32 %v1230, %v1108
          %v1244 = vmul.f32 %v1230, %v1109
          %v1245 = vmul.f32 %v1230, %v1110
          %v1246 = vmul.f32 %v1230, %v1111
          %v1247 = vmul.f32 %v1230, %v1112
          %v1248 = vmul.f32 %v1230, %v1113
          %v1249 = vmul.f32 %v1230, %v1114
          %v1250 = vmul.f32 %v1230, %v1115
          %v1251 = vmul.f32 %v1230, %v1116
          %v1252 = vmul.f32 %v1230, %v1117
          %v1253 = vmul.f32 %v1230, %v1118
          %v1254 = vmul.f32 %v1230, %v1119
          %v1255 = vmul.f32 %v1230, %v1120
          %v1256 = vmul.f32 %v1230, %v1121
          %v1257 = vmul.f32 %v1230, %v1122
          %v1258 = vmul.f32 %v1230, %v1123
          %v1259 = vmul.f32 %v1230, %v1124
          %v1260 = vmul.f32 %v1230, %v1125
          %v1261 = vmul.f32 %v1230, %v1126
          %v1262 = vmul.f32 %v1230, %v1127
          %v1263 = vmul.f32 %v1230, %v1128
          %v1264 = vadd.f32 %v1193, %v1232
          %v1265 = vadd.f32 %v1194, %v1233
          %v1266 = vadd.f32 %v1195, %v1234
          %v1267 = vadd.f32 %v1196, %v1235
          %v1268 = vadd.f32 %v1197, %v1236
          %v1269 = vadd.f32 %v1198, %v1237
          %v1270 = vadd.f32 %v1199, %v1238
          %v1271 = vadd.f32 %v1200, %v1239
          %v1272 = vadd.f32 %v1201, %v1240
          %v1273 = vadd.f32 %v1202, %v1241
          %v1274 = vadd.f32 %v1203, %v1242
          %v1275 = vadd.f32 %v1204, %v1243
          %v1276 = vadd.f32 %v1205, %v1244
          %v1277 = vadd.f32 %v1206, %v1245
          %v1278 = vadd.f32 %v1207, %v1246
          %v1279 = vadd.f32 %v1208, %v1247
          %v1280 = vadd.f32 %v1209, %v1248
          %v1281 = vadd.f32 %v1210, %v1249
          %v1282 = vadd.f32 %v1211, %v1250
          %v1283 = vadd.f32 %v1212, %v1251
          %v1284 = vadd.f32 %v1213, %v1252
          %v1285 = vadd.f32 %v1214, %v1253
          %v1286 = vadd.f32 %v1215, %v1254
          %v1287 = vadd.f32 %v1216, %v1255
          %v1288 = vadd.f32 %v1217, %v1256
          %v1289 = vadd.f32 %v1218, %v1257
          %v1290 = vadd.f32 %v1219, %v1258
          %v1291 = vadd.f32 %v1220, %v1259
          %v1292 = vadd.f32 %v1221, %v1260
          %v1293 = vadd.f32 %v1222, %v1261
          %v1294 = vadd.f32 %v1223, %v1262
          %v1295 = vadd.f32 %v1224, %v1263
          %1296 = vst [vmem:[%s461] sm:$0xff] %v1264
          %1297 = vst [vmem:[%s461 + $0x8] sm:$0xff] %v1265
          %1298 = vst [vmem:[%s461 + $0x10] sm:$0xff] %v1266
          %1299 = vst [vmem:[%s461 + $0x18] sm:$0xff] %v1267
          %1300 = vst [vmem:[%s461 + $0x20] sm:$0xff] %v1268
          %1301 = vst [vmem:[%s461 + $0x28] sm:$0xff] %v1269
          %1302 = vst [vmem:[%s461 + $0x30] sm:$0xff] %v1270
          %1303 = vst [vmem:[%s461 + $0x38] sm:$0xff] %v1271
          %1304 = vst [vmem:[%s461 + $0x40] sm:$0xff] %v1272
          %1305 = vst [vmem:[%s461 + $0x48] sm:$0xff] %v1273
          %1306 = vst [vmem:[%s461 + $0x50] sm:$0xff] %v1274
          %1307 = vst [vmem:[%s461 + $0x58] sm:$0xff] %v1275
          %1308 = vst [vmem:[%s461 + $0x60] sm:$0xff] %v1276
          %1309 = vst [vmem:[%s461 + $0x68] sm:$0xff] %v1277
          %1310 = vst [vmem:[%s461 + $0x70] sm:$0xff] %v1278
          %1311 = vst [vmem:[%s461 + $0x78] sm:$0xff] %v1279
          %1312 = vst [vmem:[%s461 + $0x80] sm:$0xff] %v1280
          %1313 = vst [vmem:[%s461 + $0x88] sm:$0xff] %v1281
          %1314 = vst [vmem:[%s461 + $0x90] sm:$0xff] %v1282
          %1315 = vst [vmem:[%s461 + $0x98] sm:$0xff] %v1283
          %1316 = vst [vmem:[%s461 + $0xa0] sm:$0xff] %v1284
          %1317 = vst [vmem:[%s461 + $0xa8] sm:$0xff] %v1285
          %1318 = vst [vmem:[%s461 + $0xb0] sm:$0xff] %v1286
          %1319 = vst [vmem:[%s461 + $0xb8] sm:$0xff] %v1287
          %1320 = vst [vmem:[%s461 + $0xc0] sm:$0xff] %v1288
          %1321 = vst [vmem:[%s461 + $0xc8] sm:$0xff] %v1289
          %1322 = vst [vmem:[%s461 + $0xd0] sm:$0xff] %v1290
          %1323 = vst [vmem:[%s461 + $0xd8] sm:$0xff] %v1291
          %1324 = vst [vmem:[%s461 + $0xe0] sm:$0xff] %v1292
          %1325 = vst [vmem:[%s461 + $0xe8] sm:$0xff] %v1293
          %1326 = vst [vmem:[%s461 + $0xf0] sm:$0xff] %v1294
          %1327 = vst [vmem:[%s461 + $0xf8] sm:$0xff] %v1295
        $region82: #{gprgnn_forward.10} parent=69 // pred_fallthru
          _
        %s1328 = sand.u32 %s143, 1
        %s1329 = scalar_lea.sflag [#allocation6], %s1328
        %s1330 = sand.u32 %s143, 1
        %s1331 = smul.addr %s1330, 128
        %s1332 = scalar_lea.vmem [#allocation5], %s1331
        %s1333 = smul.u32 32, %s26
        %p1334 = scmp.lt.s32.totalorder %s1333, 63
        %s1335 = scalar_select %p1334, %s1333, 63
        %s1336 = smul.addr %s1335, 8
        %s1337 = scalar_lea.vmem %s5, %s1336
        // Predicated region
        $region83: #{gprgnn_forward.10} parent=69 // pred_check
          %p1338 = pneg %p153
        $region84: #{gprgnn_forward.10} parent=69 // pred_check_branch
          %1340 = sbr.rel (%p1338) target = $region86
        $region85: #{gprgnn_forward.10} parent=69 // pred_region
          %s1341 = smul.u32 32, %s26
          %1343 = vsyncadd %s1329, 0
          %s1344 = smul.addr %s1341, 4
          %s1345 = scalar_lea.hbm %s4, %s1344
          %s1346 = sshll.u32 %s1332, 4
          %s1347 = int_to_ptr.vmem [resolvable:$true] %s1346
          %s1348 = sshll.u32 %s1345, 4
          %s1349 = int_to_ptr.hbm [resolvable:$true] %s1348
          %1354 = dma.vmem_to_hbm [thread:$0]  %s1347, 2048, %s1349, %s1329, 64, 64, 4
        $region86: #{gprgnn_forward.10} parent=69 // pred_fallthru
          _
        // Predicated region
        $region87: #{gprgnn_forward.10} parent=69 // pred_check
          %p1355 = pneg %p179
        $region88: #{gprgnn_forward.10} parent=69 // pred_check_branch
          %1357 = sbr.rel (%p1355) target = $region90
        $region89: #{gprgnn_forward.10} parent=69 // pred_region
          %s1358 = smul.u32 32, %s26
        $region90: #{gprgnn_forward.10} parent=69 // pred_fallthru
          _
      $region70: #{gprgnn_forward.10} parent=5 // pred_fallthru
        _
      %p1359 = scmp.le.s32.totalorder 2, %s17
      // Predicated region
      $region91: #{gprgnn_forward.10} parent=5 // pred_check
        %p1360 = pneg %p1359
      $region92: #{gprgnn_forward.10} parent=5 // pred_check_branch
        %1362 = sbr.rel (%p1360) target = $region94
      $region93: #{gprgnn_forward.10} parent=5 // pred_region
        %s1363 = ssub.s32 %s17, 2
        // Predicated region
        $region95: #{gprgnn_forward.10} parent=93 // pred_check
          %p1364 = pneg %p159
        $region96: #{gprgnn_forward.10} parent=93 // pred_check_branch
          %1366 = sbr.rel (%p1364) target = $region98
        $region97: #{gprgnn_forward.10} parent=93 // pred_region
          %s1367 = sand.u32 %s144, 1
          %s1368 = scalar_lea.sflag [#allocation6], %s1367
          %s1369 = sand.u32 %s144, 1
          %s1370 = smul.addr %s1369, 128
          %s1371 = scalar_lea.vmem [#allocation5], %s1370
          %1373 = dma.done %s1368, 2048
        $region98: #{gprgnn_forward.10} parent=93 // pred_fallthru
          _
        // Predicated region
        $region99: #{gprgnn_forward.10} parent=93 // pred_check
          %p1374 = pneg %p185
        $region100: #{gprgnn_forward.10} parent=93 // pred_check_branch
          %1376 = sbr.rel (%p1374) target = $region102
        $region101: #{gprgnn_forward.10} parent=93 // pred_region
          %s1377 = smul.u32 32, %s28
          %p1378 = scmp.lt.s32.totalorder %s1377, 63
          %s1379 = scalar_select %p1378, %s1377, 63
          %s1380 = smul.addr %s1379, 8
          %s1381 = scalar_lea.vmem %s5, %s1380
        $region102: #{gprgnn_forward.10} parent=93 // pred_fallthru
          _
      $region94: #{gprgnn_forward.10} parent=5 // pred_fallthru
        _
    $region6: #{gprgnn_forward.10} parent=1 // loop_footer
      %s21 = sadd.s32 1, %s17
    $region7: #{gprgnn_forward.10} parent=1 // loop_footer_branch
      %16 = sbr.rel target = $region3
    $region8: #{gprgnn_forward.10} parent=1 // loop_exit
      _
    %1382 = vsyncpa [#allocation6], 1
    %s1383 = scalar_lea.sflag [#allocation6], 1
    %1384 = vsyncpa %s1383, 1

// kernel: gprgnn_forward.11
$region0: #{gprgnn_forward.11}
  #allocation0 [shape = 'u32[]', space=smem, size = 0x4, offset = 0x4, fixed_abs, tag = 'smem constant byte address 0x4 - core index']
  #allocation1 [shape = 'u32[72,128]{1,0:T(1,128)}', space=vmem, size = 0x9000, scoped, tag = 'internal scratch']
  %s0 = inlined_call_operand.vmem [shape: f32[512,128], index: 0, kind: input, shape index: {}]
  %s1 = inlined_call_operand.vmem [shape: f32[512,128], index: 1, kind: output, shape index: {}]
  %s2 = sld [smem:[#allocation0]]
  $region37: #{gprgnn_forward.11} parent=0
    _
  %s4 = ssub.s32 1, %s2
  %s5 = scalar_select 0, %s4, %s2
  loop: start=0, step=1, limit=4
  $region2: #{gprgnn_forward.11} parent=0 // loop_pre_header
    _
  $region3: #{gprgnn_forward.11} parent=0 // loop_header
    %s7 = sphi 0, %s11
    %p8 = scmp.ge.s32.totalorder %s7, 4
    %s17 = sphi 0, %s19
    %s20 = sphi 0, %s17
    %s21 = sphi 0, %s20
    %s37 = sphi 0, %s21
    %s43 = sphi 0, %s45
    %s46 = sphi 0, %s43
    %s47 = sphi 0, %s46
    %s63 = sphi 0, %s47
  $region4: #{gprgnn_forward.11} parent=0 // loop_header_branch
    %10 = sbr.rel (%p8) target = $region8
  $region5: #{gprgnn_forward.11} parent=0 // loop_body
    %s12 = ssub.s32 %s7, 1
    %s13 = ssub.s32 %s7, 2
    %s14 = sadd.s32 %s7, 1
    %s15 = ssub.s32 %s7, %s14
    %p16 = scmp.eq.s32.totalorder %s15, 0
    %s18 = sadd.s32 %s17, 1
    %s19 = scalar_select %p16, %s17, %s18
    %p22 = pneg %p16
    %p23 = scmp.eq.s32.totalorder %s7, 1
    %p24 = por %p22, %p23
    %p25 = scmp.ne.s32.totalorder %s17, %s20
    %p26 = scmp.eq.s32.totalorder %s7, 0
    %p27 = por %p25, %p26
    %p28 = scmp.ne.s32.totalorder %s17, %s20
    %p29 = scmp.eq.s32.totalorder %s12, 1
    %p30 = por %p28, %p29
    %p31 = scmp.ne.s32.totalorder %s20, %s21
    %p32 = scmp.eq.s32.totalorder %s12, 0
    %p33 = por %p31, %p32
    %p34 = scmp.ne.s32.totalorder %s20, %s21
    %p35 = scmp.eq.s32.totalorder %s13, 1
    %p36 = por %p34, %p35
    %p38 = scmp.ne.s32.totalorder %s21, %s37
    %p39 = scmp.eq.s32.totalorder %s13, 0
    %p40 = por %p38, %p39
    %s41 = ssub.s32 %s7, %s14
    %p42 = scmp.eq.s32.totalorder %s41, 0
    %s44 = sadd.s32 %s43, 1
    %s45 = scalar_select %p42, %s43, %s44
    %p48 = pneg %p42
    %p49 = scmp.eq.s32.totalorder %s7, 1
    %p50 = por %p48, %p49
    %p51 = scmp.ne.s32.totalorder %s43, %s46
    %p52 = scmp.eq.s32.totalorder %s7, 0
    %p53 = por %p51, %p52
    %p54 = scmp.ne.s32.totalorder %s43, %s46
    %p55 = scmp.eq.s32.totalorder %s12, 1
    %p56 = por %p54, %p55
    %p57 = scmp.ne.s32.totalorder %s46, %s47
    %p58 = scmp.eq.s32.totalorder %s12, 0
    %p59 = por %p57, %p58
    %p60 = scmp.ne.s32.totalorder %s46, %s47
    %p61 = scmp.eq.s32.totalorder %s13, 1
    %p62 = por %p60, %p61
    %p64 = scmp.ne.s32.totalorder %s47, %s63
    %p65 = scmp.eq.s32.totalorder %s13, 0
    %p66 = por %p64, %p65
    %p67 = scmp.le.s32.totalorder 1, %s7
    %p68 = scmp.lt.s32.totalorder %s7, 3
    %p69 = pnand %p67, %p68
    %p70 = pneg %p69
    // Predicated region
    $region9: #{gprgnn_forward.11} parent=5 // pred_check
      _
    $region10: #{gprgnn_forward.11} parent=5 // pred_check_branch
      %72 = sbr.rel (%p69) target = $region12
    $region11: #{gprgnn_forward.11} parent=5 // pred_region
      %s73 = ssub.s32 %s7, 1
    $region12: #{gprgnn_forward.11} parent=5 // pred_fallthru
      _
    %p74 = scmp.lt.s32.totalorder %s7, 2
    // Predicated region
    $region13: #{gprgnn_forward.11} parent=5 // pred_check
      %p75 = pneg %p74
    $region14: #{gprgnn_forward.11} parent=5 // pred_check_branch
      %77 = sbr.rel (%p75) target = $region16
    $region15: #{gprgnn_forward.11} parent=5 // pred_region
      // Predicated region
      $region17: #{gprgnn_forward.11} parent=15 // pred_check
        %p78 = pneg %p27
      $region18: #{gprgnn_forward.11} parent=15 // pred_check_branch
        %80 = sbr.rel (%p78) target = $region20
      $region19: #{gprgnn_forward.11} parent=15 // pred_region
        %s81 = smul.u32 32, %s7
        %p82 = scmp.lt.s32.totalorder %s81, 63
        %s83 = scalar_select %p82, %s81, 63
        %s84 = smul.addr %s83, 8
        %s85 = scalar_lea.vmem %s0, %s84
        %s86 = smul.u32 32, %s7
      $region20: #{gprgnn_forward.11} parent=15 // pred_fallthru
        _
    $region16: #{gprgnn_forward.11} parent=5 // pred_fallthru
      _
    %p87 = scmp.le.s32.totalorder 1, %s7
    %p88 = scmp.lt.s32.totalorder %s7, 3
    %p89 = pnand %p87, %p88
    %p90 = pneg %p89
    // Predicated region
    $region21: #{gprgnn_forward.11} parent=5 // pred_check
      _
    $region22: #{gprgnn_forward.11} parent=5 // pred_check_branch
      %92 = sbr.rel (%p89) target = $region24
    $region23: #{gprgnn_forward.11} parent=5 // pred_region
      %s93 = ssub.s32 %s7, 1
      %s94 = smul.u32 32, %s12
      %p95 = scmp.lt.s32.totalorder %s94, 63
      %s96 = scalar_select %p95, %s94, 63
      %s97 = smul.addr %s96, 8
      %s98 = scalar_lea.vmem %s0, %s97
      %p99 = pneg %p33
      %p100 = pneg %p30
      %p101 = pneg %p59
      %p102 = pneg %p56
      %s103 = smul.u32 32, %s12
      %p104 = scmp.lt.s32.totalorder %s103, 63
      %s105 = scalar_select %p104, %s103, 63
      %s106 = smul.addr %s105, 8
      %s107 = scalar_lea.vmem %s1, %s106
      %s108 = smul.u32 32, %s12
      %p109 = scmp.lt.s32.totalorder %s108, 63
      %s110 = scalar_select %p109, %s108, 63
      %s111 = smul.addr %s110, 8
      %s112 = scalar_lea.vmem %s0, %s111
      %s113 = smul.u32 32, %s12
      %s114 = smul.u32 32, %s12
      %p115 = scmp.lt.s32.totalorder %s114, 63
      %s116 = scalar_select %p115, %s114, 63
      %s117 = smul.addr %s116, 8
      %s118 = scalar_lea.vmem %s1, %s117
      %s119 = smul.u32 32, %s12
      %v120 = vld [vmem:[%s112] sm:$0xff]
      %v121 = vld [vmem:[%s112 + $0x8] sm:$0xff]
      %v122 = vld [vmem:[%s112 + $0x10] sm:$0xff]
      %v123 = vld [vmem:[%s112 + $0x18] sm:$0xff]
      %v124 = vld [vmem:[%s112 + $0x20] sm:$0xff]
      %v125 = vld [vmem:[%s112 + $0x28] sm:$0xff]
      %v126 = vld [vmem:[%s112 + $0x30] sm:$0xff]
      %v127 = vld [vmem:[%s112 + $0x38] sm:$0xff]
      %v128 = vld [vmem:[%s112 + $0x40] sm:$0xff]
      %v129 = vld [vmem:[%s112 + $0x48] sm:$0xff]
      %v130 = vld [vmem:[%s112 + $0x50] sm:$0xff]
      %v131 = vld [vmem:[%s112 + $0x58] sm:$0xff]
      %v132 = vld [vmem:[%s112 + $0x60] sm:$0xff]
      %v133 = vld [vmem:[%s112 + $0x68] sm:$0xff]
      %v134 = vld [vmem:[%s112 + $0x70] sm:$0xff]
      %v135 = vld [vmem:[%s112 + $0x78] sm:$0xff]
      %v136 = vld [vmem:[%s112 + $0x80] sm:$0xff]
      %v137 = vld [vmem:[%s112 + $0x88] sm:$0xff]
      %v138 = vld [vmem:[%s112 + $0x90] sm:$0xff]
      %v139 = vld [vmem:[%s112 + $0x98] sm:$0xff]
      %v140 = vld [vmem:[%s112 + $0xa0] sm:$0xff]
      %v141 = vld [vmem:[%s112 + $0xa8] sm:$0xff]
      %v142 = vld [vmem:[%s112 + $0xb0] sm:$0xff]
      %v143 = vld [vmem:[%s112 + $0xb8] sm:$0xff]
      %v144 = vld [vmem:[%s112 + $0xc0] sm:$0xff]
      %v145 = vld [vmem:[%s112 + $0xc8] sm:$0xff]
      %v146 = vld [vmem:[%s112 + $0xd0] sm:$0xff]
      %v147 = vld [vmem:[%s112 + $0xd8] sm:$0xff]
      %v148 = vld [vmem:[%s112 + $0xe0] sm:$0xff]
      %v149 = vld [vmem:[%s112 + $0xe8] sm:$0xff]
      %v150 = vld [vmem:[%s112 + $0xf0] sm:$0xff]
      %v151 = vld [vmem:[%s112 + $0xf8] sm:$0xff]
      %v152 = vlaneseq
      %v153 = vand.u32 %v152, 127
      %vm154 = vcmp.lt.s32.totalorder %v153, 10
      %v155 = vsel %vm154, %v120, -1e+30
      %v156 = vsel %vm154, %v121, -1e+30
      %v157 = vsel %vm154, %v122, -1e+30
      %v158 = vsel %vm154, %v123, -1e+30
      %v159 = vsel %vm154, %v124, -1e+30
      %v160 = vsel %vm154, %v125, -1e+30
      %v161 = vsel %vm154, %v126, -1e+30
      %v162 = vsel %vm154, %v127, -1e+30
      %v163 = vsel %vm154, %v128, -1e+30
      %v164 = vsel %vm154, %v129, -1e+30
      %v165 = vsel %vm154, %v130, -1e+30
      %v166 = vsel %vm154, %v131, -1e+30
      %v167 = vsel %vm154, %v132, -1e+30
      %v168 = vsel %vm154, %v133, -1e+30
      %v169 = vsel %vm154, %v134, -1e+30
      %v170 = vsel %vm154, %v135, -1e+30
      %v171 = vsel %vm154, %v136, -1e+30
      %v172 = vsel %vm154, %v137, -1e+30
      %v173 = vsel %vm154, %v138, -1e+30
      %v174 = vsel %vm154, %v139, -1e+30
      %v175 = vsel %vm154, %v140, -1e+30
      %v176 = vsel %vm154, %v141, -1e+30
      %v177 = vsel %vm154, %v142, -1e+30
      %v178 = vsel %vm154, %v143, -1e+30
      %v179 = vsel %vm154, %v144, -1e+30
      %v180 = vsel %vm154, %v145, -1e+30
      %v181 = vsel %vm154, %v146, -1e+30
      %v182 = vsel %vm154, %v147, -1e+30
      %v183 = vsel %vm154, %v148, -1e+30
      %v184 = vsel %vm154, %v149, -1e+30
      %v185 = vsel %vm154, %v150, -1e+30
      %v186 = vsel %vm154, %v151, -1e+30
      %187 = vmax.xlane.f32.xlu0 %v155
      %v188 = vpop.xlane.xlu0 %187
      %189 = vmax.xlane.f32.xlu0 %v156
      %v190 = vpop.xlane.xlu0 %189
      %191 = vmax.xlane.f32.xlu0 %v157
      %v192 = vpop.xlane.xlu0 %191
      %193 = vmax.xlane.f32.xlu0 %v158
      %v194 = vpop.xlane.xlu0 %193
      %195 = vmax.xlane.f32.xlu0 %v159
      %v196 = vpop.xlane.xlu0 %195
      %197 = vmax.xlane.f32.xlu0 %v160
      %v198 = vpop.xlane.xlu0 %197
      %199 = vmax.xlane.f32.xlu0 %v161
      %v200 = vpop.xlane.xlu0 %199
      %201 = vmax.xlane.f32.xlu0 %v162
      %v202 = vpop.xlane.xlu0 %201
      %203 = vmax.xlane.f32.xlu0 %v163
      %v204 = vpop.xlane.xlu0 %203
      %205 = vmax.xlane.f32.xlu0 %v164
      %v206 = vpop.xlane.xlu0 %205
      %207 = vmax.xlane.f32.xlu0 %v165
      %v208 = vpop.xlane.xlu0 %207
      %209 = vmax.xlane.f32.xlu0 %v166
      %v210 = vpop.xlane.xlu0 %209
      %211 = vmax.xlane.f32.xlu0 %v167
      %v212 = vpop.xlane.xlu0 %211
      %213 = vmax.xlane.f32.xlu0 %v168
      %v214 = vpop.xlane.xlu0 %213
      %215 = vmax.xlane.f32.xlu0 %v169
      %v216 = vpop.xlane.xlu0 %215
      %217 = vmax.xlane.f32.xlu0 %v170
      %v218 = vpop.xlane.xlu0 %217
      %219 = vmax.xlane.f32.xlu0 %v171
      %v220 = vpop.xlane.xlu0 %219
      %221 = vmax.xlane.f32.xlu0 %v172
      %v222 = vpop.xlane.xlu0 %221
      %223 = vmax.xlane.f32.xlu0 %v173
      %v224 = vpop.xlane.xlu0 %223
      %225 = vmax.xlane.f32.xlu0 %v174
      %v226 = vpop.xlane.xlu0 %225
      %227 = vmax.xlane.f32.xlu0 %v175
      %v228 = vpop.xlane.xlu0 %227
      %229 = vmax.xlane.f32.xlu0 %v176
      %v230 = vpop.xlane.xlu0 %229
      %231 = vmax.xlane.f32.xlu0 %v177
      %v232 = vpop.xlane.xlu0 %231
      %233 = vmax.xlane.f32.xlu0 %v178
      %v234 = vpop.xlane.xlu0 %233
      %235 = vmax.xlane.f32.xlu0 %v179
      %v236 = vpop.xlane.xlu0 %235
      %237 = vmax.xlane.f32.xlu0 %v180
      %v238 = vpop.xlane.xlu0 %237
      %239 = vmax.xlane.f32.xlu0 %v181
      %v240 = vpop.xlane.xlu0 %239
      %241 = vmax.xlane.f32.xlu0 %v182
      %v242 = vpop.xlane.xlu0 %241
      %243 = vmax.xlane.f32.xlu0 %v183
      %v244 = vpop.xlane.xlu0 %243
      %245 = vmax.xlane.f32.xlu0 %v184
      %v246 = vpop.xlane.xlu0 %245
      %247 = vmax.xlane.f32.xlu0 %v185
      %v248 = vpop.xlane.xlu0 %247
      %249 = vmax.xlane.f32.xlu0 %v186
      %v250 = vpop.xlane.xlu0 %249
      %v251 = vsub.f32 %v155, %v188
      %v252 = vsub.f32 %v156, %v190
      %v253 = vsub.f32 %v157, %v192
      %v254 = vsub.f32 %v158, %v194
      %v255 = vsub.f32 %v159, %v196
      %v256 = vsub.f32 %v160, %v198
      %v257 = vsub.f32 %v161, %v200
      %v258 = vsub.f32 %v162, %v202
      %v259 = vsub.f32 %v163, %v204
      %v260 = vsub.f32 %v164, %v206
      %v261 = vsub.f32 %v165, %v208
      %v262 = vsub.f32 %v166, %v210
      %v263 = vsub.f32 %v167, %v212
      %v264 = vsub.f32 %v168, %v214
      %v265 = vsub.f32 %v169, %v216
      %v266 = vsub.f32 %v170, %v218
      %v267 = vsub.f32 %v171, %v220
      %v268 = vsub.f32 %v172, %v222
      %v269 = vsub.f32 %v173, %v224
      %v270 = vsub.f32 %v174, %v226
      %v271 = vsub.f32 %v175, %v228
      %v272 = vsub.f32 %v176, %v230
      %v273 = vsub.f32 %v177, %v232
      %v274 = vsub.f32 %v178, %v234
      %v275 = vsub.f32 %v179, %v236
      %v276 = vsub.f32 %v180, %v238
      %v277 = vsub.f32 %v181, %v240
      %v278 = vsub.f32 %v182, %v242
      %v279 = vsub.f32 %v183, %v244
      %v280 = vsub.f32 %v184, %v246
      %v281 = vsub.f32 %v185, %v248
      %v282 = vsub.f32 %v186, %v250
      %v283 = vmul.f32 %v251, 1.442695
      %v284 = vpow.pop %v283
      %v285 = vmul.f32 %v252, 1.442695
      %v286 = vpow.pop %v285
      %v287 = vmul.f32 %v253, 1.442695
      %v288 = vpow.pop %v287
      %v289 = vmul.f32 %v254, 1.442695
      %v290 = vpow.pop %v289
      %v291 = vmul.f32 %v255, 1.442695
      %v292 = vpow.pop %v291
      %v293 = vmul.f32 %v256, 1.442695
      %v294 = vpow.pop %v293
      %v295 = vmul.f32 %v257, 1.442695
      %v296 = vpow.pop %v295
      %v297 = vmul.f32 %v258, 1.442695
      %v298 = vpow.pop %v297
      %v299 = vmul.f32 %v259, 1.442695
      %v300 = vpow.pop %v299
      %v301 = vmul.f32 %v260, 1.442695
      %v302 = vpow.pop %v301
      %v303 = vmul.f32 %v261, 1.442695
      %v304 = vpow.pop %v303
      %v305 = vmul.f32 %v262, 1.442695
      %v306 = vpow.pop %v305
      %v307 = vmul.f32 %v263, 1.442695
      %v308 = vpow.pop %v307
      %v309 = vmul.f32 %v264, 1.442695
      %v310 = vpow.pop %v309
      %v311 = vmul.f32 %v265, 1.442695
      %v312 = vpow.pop %v311
      %v313 = vmul.f32 %v266, 1.442695
      %v314 = vpow.pop %v313
      %v315 = vmul.f32 %v267, 1.442695
      %v316 = vpow.pop %v315
      %v317 = vmul.f32 %v268, 1.442695
      %v318 = vpow.pop %v317
      %v319 = vmul.f32 %v269, 1.442695
      %v320 = vpow.pop %v319
      %v321 = vmul.f32 %v270, 1.442695
      %v322 = vpow.pop %v321
      %v323 = vmul.f32 %v271, 1.442695
      %v324 = vpow.pop %v323
      %v325 = vmul.f32 %v272, 1.442695
      %v326 = vpow.pop %v325
      %v327 = vmul.f32 %v273, 1.442695
      %v328 = vpow.pop %v327
      %v329 = vmul.f32 %v274, 1.442695
      %v330 = vpow.pop %v329
      %v331 = vmul.f32 %v275, 1.442695
      %v332 = vpow.pop %v331
      %v333 = vmul.f32 %v276, 1.442695
      %v334 = vpow.pop %v333
      %v335 = vmul.f32 %v277, 1.442695
      %v336 = vpow.pop %v335
      %v337 = vmul.f32 %v278, 1.442695
      %v338 = vpow.pop %v337
      %v339 = vmul.f32 %v279, 1.442695
      %v340 = vpow.pop %v339
      %v341 = vmul.f32 %v280, 1.442695
      %v342 = vpow.pop %v341
      %v343 = vmul.f32 %v281, 1.442695
      %v344 = vpow.pop %v343
      %v345 = vmul.f32 %v282, 1.442695
      %v346 = vpow.pop %v345
      %v347 = vsel %vm154, %v284, 0.0
      %v348 = vsel %vm154, %v286, 0.0
      %v349 = vsel %vm154, %v288, 0.0
      %v350 = vsel %vm154, %v290, 0.0
      %v351 = vsel %vm154, %v292, 0.0
      %v352 = vsel %vm154, %v294, 0.0
      %v353 = vsel %vm154, %v296, 0.0
      %v354 = vsel %vm154, %v298, 0.0
      %v355 = vsel %vm154, %v300, 0.0
      %v356 = vsel %vm154, %v302, 0.0
      %v357 = vsel %vm154, %v304, 0.0
      %v358 = vsel %vm154, %v306, 0.0
      %v359 = vsel %vm154, %v308, 0.0
      %v360 = vsel %vm154, %v310, 0.0
      %v361 = vsel %vm154, %v312, 0.0
      %v362 = vsel %vm154, %v314, 0.0
      %v363 = vsel %vm154, %v316, 0.0
      %v364 = vsel %vm154, %v318, 0.0
      %v365 = vsel %vm154, %v320, 0.0
      %v366 = vsel %vm154, %v322, 0.0
      %v367 = vsel %vm154, %v324, 0.0
      %v368 = vsel %vm154, %v326, 0.0
      %v369 = vsel %vm154, %v328, 0.0
      %v370 = vsel %vm154, %v330, 0.0
      %v371 = vsel %vm154, %v332, 0.0
      %v372 = vsel %vm154, %v334, 0.0
      %v373 = vsel %vm154, %v336, 0.0
      %v374 = vsel %vm154, %v338, 0.0
      %v375 = vsel %vm154, %v340, 0.0
      %v376 = vsel %vm154, %v342, 0.0
      %v377 = vsel %vm154, %v344, 0.0
      %v378 = vsel %vm154, %v346, 0.0
      %379 = vadd.xlane.f32.xlu0 %v347
      %v380 = vpop.xlane.xlu0 %379
      %381 = vadd.xlane.f32.xlu0 %v348
      %v382 = vpop.xlane.xlu0 %381
      %383 = vadd.xlane.f32.xlu0 %v349
      %v384 = vpop.xlane.xlu0 %383
      %385 = vadd.xlane.f32.xlu0 %v350
      %v386 = vpop.xlane.xlu0 %385
      %387 = vadd.xlane.f32.xlu0 %v351
      %v388 = vpop.xlane.xlu0 %387
      %389 = vadd.xlane.f32.xlu0 %v352
      %v390 = vpop.xlane.xlu0 %389
      %391 = vadd.xlane.f32.xlu0 %v353
      %v392 = vpop.xlane.xlu0 %391
      %393 = vadd.xlane.f32.xlu0 %v354
      %v394 = vpop.xlane.xlu0 %393
      %395 = vadd.xlane.f32.xlu0 %v355
      %v396 = vpop.xlane.xlu0 %395
      %397 = vadd.xlane.f32.xlu0 %v356
      %v398 = vpop.xlane.xlu0 %397
      %399 = vadd.xlane.f32.xlu0 %v357
      %v400 = vpop.xlane.xlu0 %399
      %401 = vadd.xlane.f32.xlu0 %v358
      %v402 = vpop.xlane.xlu0 %401
      %403 = vadd.xlane.f32.xlu0 %v359
      %v404 = vpop.xlane.xlu0 %403
      %405 = vadd.xlane.f32.xlu0 %v360
      %v406 = vpop.xlane.xlu0 %405
      %407 = vadd.xlane.f32.xlu0 %v361
      %v408 = vpop.xlane.xlu0 %407
      %409 = vadd.xlane.f32.xlu0 %v362
      %v410 = vpop.xlane.xlu0 %409
      %411 = vadd.xlane.f32.xlu0 %v363
      %v412 = vpop.xlane.xlu0 %411
      %413 = vadd.xlane.f32.xlu0 %v364
      %v414 = vpop.xlane.xlu0 %413
      %415 = vadd.xlane.f32.xlu0 %v365
      %v416 = vpop.xlane.xlu0 %415
      %417 = vadd.xlane.f32.xlu0 %v366
      %v418 = vpop.xlane.xlu0 %417
      %419 = vadd.xlane.f32.xlu0 %v367
      %v420 = vpop.xlane.xlu0 %419
      %421 = vadd.xlane.f32.xlu0 %v368
      %v422 = vpop.xlane.xlu0 %421
      %423 = vadd.xlane.f32.xlu0 %v369
      %v424 = vpop.xlane.xlu0 %423
      %425 = vadd.xlane.f32.xlu0 %v370
      %v426 = vpop.xlane.xlu0 %425
      %427 = vadd.xlane.f32.xlu0 %v371
      %v428 = vpop.xlane.xlu0 %427
      %429 = vadd.xlane.f32.xlu0 %v372
      %v430 = vpop.xlane.xlu0 %429
      %431 = vadd.xlane.f32.xlu0 %v373
      %v432 = vpop.xlane.xlu0 %431
      %433 = vadd.xlane.f32.xlu0 %v374
      %v434 = vpop.xlane.xlu0 %433
      %435 = vadd.xlane.f32.xlu0 %v375
      %v436 = vpop.xlane.xlu0 %435
      %437 = vadd.xlane.f32.xlu0 %v376
      %v438 = vpop.xlane.xlu0 %437
      %439 = vadd.xlane.f32.xlu0 %v377
      %v440 = vpop.xlane.xlu0 %439
      %441 = vadd.xlane.f32.xlu0 %v378
      %v442 = vpop.xlane.xlu0 %441
      %v443 = vlog2.pop %v380
      %v444 = vmul.f32 %v443, 0.6931472
      %v445 = vlog2.pop %v382
      %v446 = vmul.f32 %v445, 0.6931472
      %v447 = vlog2.pop %v384
      %v448 = vmul.f32 %v447, 0.6931472
      %v449 = vlog2.pop %v386
      %v450 = vmul.f32 %v449, 0.6931472
      %v451 = vlog2.pop %v388
      %v452 = vmul.f32 %v451, 0.6931472
      %v453 = vlog2.pop %v390
      %v454 = vmul.f32 %v453, 0.6931472
      %v455 = vlog2.pop %v392
      %v456 = vmul.f32 %v455, 0.6931472
      %v457 = vlog2.pop %v394
      %v458 = vmul.f32 %v457, 0.6931472
      %v459 = vlog2.pop %v396
      %v460 = vmul.f32 %v459, 0.6931472
      %v461 = vlog2.pop %v398
      %v462 = vmul.f32 %v461, 0.6931472
      %v463 = vlog2.pop %v400
      %v464 = vmul.f32 %v463, 0.6931472
      %v465 = vlog2.pop %v402
      %v466 = vmul.f32 %v465, 0.6931472
      %v467 = vlog2.pop %v404
      %v468 = vmul.f32 %v467, 0.6931472
      %v469 = vlog2.pop %v406
      %v470 = vmul.f32 %v469, 0.6931472
      %v471 = vlog2.pop %v408
      %v472 = vmul.f32 %v471, 0.6931472
      %v473 = vlog2.pop %v410
      %v474 = vmul.f32 %v473, 0.6931472
      %v475 = vlog2.pop %v412
      %v476 = vmul.f32 %v475, 0.6931472
      %v477 = vlog2.pop %v414
      %v478 = vmul.f32 %v477, 0.6931472
      %v479 = vlog2.pop %v416
      %v480 = vmul.f32 %v479, 0.6931472
      %v481 = vlog2.pop %v418
      %v482 = vmul.f32 %v481, 0.6931472
      %v483 = vlog2.pop %v420
      %v484 = vmul.f32 %v483, 0.6931472
      %v485 = vlog2.pop %v422
      %v486 = vmul.f32 %v485, 0.6931472
      %v487 = vlog2.pop %v424
      %v488 = vmul.f32 %v487, 0.6931472
      %v489 = vlog2.pop %v426
      %v490 = vmul.f32 %v489, 0.6931472
      %v491 = vlog2.pop %v428
      %v492 = vmul.f32 %v491, 0.6931472
      %v493 = vlog2.pop %v430
      %v494 = vmul.f32 %v493, 0.6931472
      %v495 = vlog2.pop %v432
      %v496 = vmul.f32 %v495, 0.6931472
      %v497 = vlog2.pop %v434
      %v498 = vmul.f32 %v497, 0.6931472
      %v499 = vlog2.pop %v436
      %v500 = vmul.f32 %v499, 0.6931472
      %v501 = vlog2.pop %v438
      %v502 = vmul.f32 %v501, 0.6931472
      %v503 = vlog2.pop %v440
      %v504 = vmul.f32 %v503, 0.6931472
      %v505 = vlog2.pop %v442
      %v506 = vmul.f32 %v505, 0.6931472
      %v507 = vsub.f32 %v251, %v444
      %v508 = vsub.f32 %v252, %v446
      %v509 = vsub.f32 %v253, %v448
      %v510 = vsub.f32 %v254, %v450
      %v511 = vsub.f32 %v255, %v452
      %v512 = vsub.f32 %v256, %v454
      %v513 = vsub.f32 %v257, %v456
      %v514 = vsub.f32 %v258, %v458
      %v515 = vsub.f32 %v259, %v460
      %v516 = vsub.f32 %v260, %v462
      %v517 = vsub.f32 %v261, %v464
      %v518 = vsub.f32 %v262, %v466
      %v519 = vsub.f32 %v263, %v468
      %v520 = vsub.f32 %v264, %v470
      %v521 = vsub.f32 %v265, %v472
      %v522 = vsub.f32 %v266, %v474
      %v523 = vsub.f32 %v267, %v476
      %v524 = vsub.f32 %v268, %v478
      %v525 = vsub.f32 %v269, %v480
      %v526 = vsub.f32 %v270, %v482
      %v527 = vsub.f32 %v271, %v484
      %v528 = vsub.f32 %v272, %v486
      %v529 = vsub.f32 %v273, %v488
      %v530 = vsub.f32 %v274, %v490
      %v531 = vsub.f32 %v275, %v492
      %v532 = vsub.f32 %v276, %v494
      %v533 = vsub.f32 %v277, %v496
      %v534 = vsub.f32 %v278, %v498
      %v535 = vsub.f32 %v279, %v500
      %v536 = vsub.f32 %v280, %v502
      %v537 = vsub.f32 %v281, %v504
      %v538 = vsub.f32 %v282, %v506
      %539 = vst [vmem:[%s118] sm:$0xff] %v507
      %540 = vst [vmem:[%s118 + $0x8] sm:$0xff] %v508
      %541 = vst [vmem:[%s118 + $0x10] sm:$0xff] %v509
      %542 = vst [vmem:[%s118 + $0x18] sm:$0xff] %v510
      %543 = vst [vmem:[%s118 + $0x20] sm:$0xff] %v511
      %544 = vst [vmem:[%s118 + $0x28] sm:$0xff] %v512
      %545 = vst [vmem:[%s118 + $0x30] sm:$0xff] %v513
      %546 = vst [vmem:[%s118 + $0x38] sm:$0xff] %v514
      %547 = vst [vmem:[%s118 + $0x40] sm:$0xff] %v515
      %548 = vst [vmem:[%s118 + $0x48] sm:$0xff] %v516
      %549 = vst [vmem:[%s118 + $0x50] sm:$0xff] %v517
      %550 = vst [vmem:[%s118 + $0x58] sm:$0xff] %v518
      %551 = vst [vmem:[%s118 + $0x60] sm:$0xff] %v519
      %552 = vst [vmem:[%s118 + $0x68] sm:$0xff] %v520
      %553 = vst [vmem:[%s118 + $0x70] sm:$0xff] %v521
      %554 = vst [vmem:[%s118 + $0x78] sm:$0xff] %v522
      %555 = vst [vmem:[%s118 + $0x80] sm:$0xff] %v523
      %556 = vst [vmem:[%s118 + $0x88] sm:$0xff] %v524
      %557 = vst [vmem:[%s118 + $0x90] sm:$0xff] %v525
      %558 = vst [vmem:[%s118 + $0x98] sm:$0xff] %v526
      %559 = vst [vmem:[%s118 + $0xa0] sm:$0xff] %v527
      %560 = vst [vmem:[%s118 + $0xa8] sm:$0xff] %v528
      %561 = vst [vmem:[%s118 + $0xb0] sm:$0xff] %v529
      %562 = vst [vmem:[%s118 + $0xb8] sm:$0xff] %v530
      %563 = vst [vmem:[%s118 + $0xc0] sm:$0xff] %v531
      %564 = vst [vmem:[%s118 + $0xc8] sm:$0xff] %v532
      %565 = vst [vmem:[%s118 + $0xd0] sm:$0xff] %v533
      %566 = vst [vmem:[%s118 + $0xd8] sm:$0xff] %v534
      %567 = vst [vmem:[%s118 + $0xe0] sm:$0xff] %v535
      %568 = vst [vmem:[%s118 + $0xe8] sm:$0xff] %v536
      %569 = vst [vmem:[%s118 + $0xf0] sm:$0xff] %v537
      %570 = vst [vmem:[%s118 + $0xf8] sm:$0xff] %v538
      %s571 = smul.u32 32, %s12
      %p572 = scmp.lt.s32.totalorder %s571, 63
      %s573 = scalar_select %p572, %s571, 63
      %s574 = smul.addr %s573, 8
      %s575 = scalar_lea.vmem %s1, %s574
      // Predicated region
      $region25: #{gprgnn_forward.11} parent=23 // pred_check
        %p576 = pneg %p56
      $region26: #{gprgnn_forward.11} parent=23 // pred_check_branch
        %578 = sbr.rel (%p576) target = $region28
      $region27: #{gprgnn_forward.11} parent=23 // pred_region
        %s579 = smul.u32 32, %s12
      $region28: #{gprgnn_forward.11} parent=23 // pred_fallthru
        _
    $region24: #{gprgnn_forward.11} parent=5 // pred_fallthru
      _
    %p580 = scmp.le.s32.totalorder 2, %s7
    // Predicated region
    $region29: #{gprgnn_forward.11} parent=5 // pred_check
      %p581 = pneg %p580
    $region30: #{gprgnn_forward.11} parent=5 // pred_check_branch
      %583 = sbr.rel (%p581) target = $region32
    $region31: #{gprgnn_forward.11} parent=5 // pred_region
      %s584 = ssub.s32 %s7, 2
      // Predicated region
      $region33: #{gprgnn_forward.11} parent=31 // pred_check
        %p585 = pneg %p62
      $region34: #{gprgnn_forward.11} parent=31 // pred_check_branch
        %587 = sbr.rel (%p585) target = $region36
      $region35: #{gprgnn_forward.11} parent=31 // pred_region
        %s588 = smul.u32 32, %s13
        %p589 = scmp.lt.s32.totalorder %s588, 63
        %s590 = scalar_select %p589, %s588, 63
        %s591 = smul.addr %s590, 8
        %s592 = scalar_lea.vmem %s1, %s591
      $region36: #{gprgnn_forward.11} parent=31 // pred_fallthru
        _
    $region32: #{gprgnn_forward.11} parent=5 // pred_fallthru
      _
  $region6: #{gprgnn_forward.11} parent=0 // loop_footer
    %s11 = sadd.s32 1, %s7
  $region7: #{gprgnn_forward.11} parent=0 // loop_footer_branch
    %6 = sbr.rel target = $region3
  $region8: #{gprgnn_forward.11} parent=0 // loop_exit
    _

</llo_original>
